<compile_context>
chip_gen: v7x
topology: tpu7x:2x2x1
jax: 0.10.0
libtpu: 0.0.40
codegen_flags: <defaults>
</compile_context>

<pallas_src>
import functools

import jax
import jax.numpy as jnp
import numpy as np
from jax.experimental import pallas as pl
from jax.experimental.pallas import tpu as pltpu

HEAD_PAD = 128  # lane-dense padded width of the fused adv+aux head output


# ----------------------------------------------------------------------------
# Kernel
# ----------------------------------------------------------------------------
def _disc_kernel(x_ref, w1_ref, b1_ref, w2_ref, b2_ref, wh_ref, bh_ref,
                 out_ref, acc_ref, *, num_classes):
    """One (batch-tile, K-tile) grid step of the fused Discriminator forward.

    grid = (batch tiles [parallel], gene/K tiles [arbitrary, last]).
    acc_ref accumulates the first matmul over K; the rest of the network runs
    once per batch tile on the final K step.
    """
    k = pl.program_id(1)

    @pl.when(k == 0)
    def _():
        acc_ref[...] = jnp.zeros_like(acc_ref)

    # Layer 1 matmul (BN0 folded into w1/b1 on the host).
    acc_ref[...] += jnp.dot(x_ref[...], w1_ref[...],
                            preferred_element_type=jnp.float32)

    @pl.when(k == pl.num_programs(1) - 1)
    def _():
        h = acc_ref[...] + b1_ref[...]
        h = jnp.where(h > 0, h, jnp.float32(0.1) * h)          # LeakyReLU(0.1)
        # Dropout(0.25): identity in inference mode.
        # TODO(synk): train-mode stochastic dropout masking not implemented.

        # Layer 2 (BN1 folded into w2/b2).
        h = jnp.dot(h, w2_ref[...], preferred_element_type=jnp.float32) + b2_ref[...]
        h = jnp.where(h > 0, h, jnp.float32(0.1) * h)          # LeakyReLU(0.1)
        # Dropout(0.25): identity in inference mode.

        # Fused adv + aux heads (BNa/BNx folded): one lane-dense matmul.
        # z[:, 0]         -> adv logit (sigmoid)
        # z[:, 1:1+C]     -> aux logits (softmax)
        # z[:, 1+C:128]   -> zero padding (masked out)
        z = jnp.dot(h, wh_ref[...], preferred_element_type=jnp.float32) + bh_ref[...]

        lane = jax.lax.broadcasted_iota(jnp.int32, z.shape, 1)
        aux_mask = (lane >= 1) & (lane < 1 + num_classes)

        zmax = jnp.max(jnp.where(aux_mask, z, -jnp.inf), axis=1, keepdims=True)
        e = jnp.exp(jnp.where(aux_mask, z - zmax, -jnp.inf))
        denom = jnp.sum(e, axis=1, keepdims=True)
        label = e * pl.reciprocal(denom)

        validity = jax.nn.sigmoid(z)
        out_ref[...] = jnp.where(lane == 0, validity, label)


# ----------------------------------------------------------------------------
# Host wrapper
# ----------------------------------------------------------------------------
def _round_up(x, m):
    return (x + m - 1) // m * m


def _fold_bn_linear(w, b, gamma, beta, mean, var, eps=1e-5):
    """Fold inference-mode BatchNorm1d (running stats) into Linear (in,out)."""
    scale = gamma * jax.lax.rsqrt(var + eps)      # (1, in)
    shift = beta - mean * scale                   # (1, in)
    w_f = scale.reshape(-1, 1) * w                # (in, out)
    b_f = b + shift @ w                           # (1, out)
    return w_f, b_f


def discriminator_forward(x, params, *, tile_b=128, tile_k=512):
    B, G = x.shape
    H = params["w2"].shape[0]                     # 1024
    C = params["wx"].shape[1]                     # subtypeNum + 1
    assert 1 + C <= HEAD_PAD, "fused head assumes 1 + num_classes <= 128"

    # ---- wrapper-side BN folding (free precompute at inference) ----
    w1, b1 = _fold_bn_linear(params["w1"], params["b1"],
                             params["bn0_g"], params["bn0_b"],
                             params["bn0_m"], params["bn0_v"])
    w2, b2 = _fold_bn_linear(params["w2"], params["b2"],
                             params["bn1_g"], params["bn1_b"],
                             params["bn1_m"], params["bn1_v"])
    wa, ba = _fold_bn_linear(params["wa"], params["ba"],
                             params["bna_g"], params["bna_b"],
                             params["bna_m"], params["bna_v"])
    wx, bx = _fold_bn_linear(params["wx"], params["bx"],
                             params["bnx_g"], params["bnx_b"],
                             params["bnx_m"], params["bnx_v"])

    # Fused head: [adv | aux] padded to a lane-dense 128-wide slab.
    wh = jnp.zeros((H, HEAD_PAD), jnp.float32).at[:, :1 + C].set(
        jnp.concatenate([wa, wx], axis=1))
    bh = jnp.zeros((1, HEAD_PAD), jnp.float32).at[:, :1 + C].set(
        jnp.concatenate([ba, bx], axis=1))

    # ---- pad batch / gene dims to tile multiples ----
    tile_b = min(tile_b, _round_up(B, 8))
    Bp = _round_up(B, tile_b)
    tile_k = min(tile_k, _round_up(G, 128))
    Gp = _round_up(G, tile_k)

    x_p = jnp.zeros((Bp, Gp), jnp.float32).at[:B, :G].set(x)
    w1_p = jnp.zeros((Gp, H), jnp.float32).at[:G, :].set(w1)  # zero rows: no-op

    grid = (Bp // tile_b, Gp // tile_k)

    out = pl.pallas_call(
        functools.partial(_disc_kernel, num_classes=C),
        out_shape=jax.ShapeDtypeStruct((Bp, HEAD_PAD), jnp.float32),
        grid_spec=pltpu.PrefetchScalarGridSpec(
            num_scalar_prefetch=0,
            grid=grid,
            in_specs=[
                pl.BlockSpec((tile_b, tile_k), lambda i, k: (i, k)),   # x
                pl.BlockSpec((tile_k, H), lambda i, k: (k, 0)),        # w1
                pl.BlockSpec((1, H), lambda i, k: (0, 0)),             # b1
                pl.BlockSpec((H, H), lambda i, k: (0, 0)),             # w2
                pl.BlockSpec((1, H), lambda i, k: (0, 0)),             # b2
                pl.BlockSpec((H, HEAD_PAD), lambda i, k: (0, 0)),      # wh
                pl.BlockSpec((1, HEAD_PAD), lambda i, k: (0, 0)),      # bh
            ],
            out_specs=pl.BlockSpec((tile_b, HEAD_PAD), lambda i, k: (i, 0)),
            scratch_shapes=[pltpu.VMEM((tile_b, H), jnp.float32)],
        ),
        compiler_params=pltpu.CompilerParams(
            # batch axis shards across TensorCores on v7x; K axis is a reduction
            dimension_semantics=("parallel", "arbitrary")),
    )(x_p, w1_p, b1, w2, b2, wh, bh)

    validity = out[:B, 0:1]
    label = out[:B, 1:1 + C]
    return validity, label


# ----------------------------------------------------------------------------
# Parameter init (PyTorch-style Linear init; BN params randomized so that the
# BN-folding path is actually exercised) and pure-JAX reference.
# ----------------------------------------------------------------------------
def init_params(key, gene_num, subtype_num, hidden=1024):
    num_classes = subtype_num + 1
    keys = jax.random.split(key, 12)

    def linear(kw, kb, fan_in, fan_out):
        bound = 1.0 / np.sqrt(fan_in)
        w = jax.random.uniform(kw, (fan_in, fan_out), jnp.float32, -bound, bound)
        b = jax.random.uniform(kb, (1, fan_out), jnp.float32, -bound, bound)
        return w, b

    def bn_params(k, n):
        k1, k2, k3, k4 = jax.random.split(k, 4)
        g = jax.random.uniform(k1, (1, n), jnp.float32, 0.5, 1.5)
        b = 0.1 * jax.random.normal(k2, (1, n), jnp.float32)
        m = 0.1 * jax.random.normal(k3, (1, n), jnp.float32)
        v = jax.random.uniform(k4, (1, n), jnp.float32, 0.5, 1.5)
        return g, b, m, v

    p = {}
    p["bn0_g"], p["bn0_b"], p["bn0_m"], p["bn0_v"] = bn_params(keys[8], gene_num)
    p["w1"], p["b1"] = linear(keys[0], keys[1], gene_num, hidden)
    p["bn1_g"], p["bn1_b"], p["bn1_m"], p["bn1_v"] = bn_params(keys[9], hidden)
    p["w2"], p["b2"] = linear(keys[2], keys[3], hidden, hidden)
    p["bna_g"], p["bna_b"], p["bna_m"], p["bna_v"] = bn_params(keys[10], hidden)
    p["wa"], p["ba"] = linear(keys[4], keys[5], hidden, 1)
    p["bnx_g"], p["bnx_b"], p["bnx_m"], p["bnx_v"] = bn_params(keys[11], hidden)
    p["wx"], p["bx"] = linear(keys[6], keys[7], hidden, num_classes)
    return p


def reference_forward(x, p):
    eps = 1e-5

    def bn(x, g, b, m, v):
        return (x - m) / jnp.sqrt(v + eps) * g + b

    def leaky(x):
        return jnp.where(x > 0, x, 0.1 * x)

    h = bn(x, p["bn0_g"], p["bn0_b"], p["bn0_m"], p["bn0_v"])
    h = leaky(h @ p["w1"] + p["b1"])
    h = bn(h, p["bn1_g"], p["bn1_b"], p["bn1_m"], p["bn1_v"])
    h = leaky(h @ p["w2"] + p["b2"])
    a = bn(h, p["bna_g"], p["bna_b"], p["bna_m"], p["bna_v"])
    validity = jax.nn.sigmoid(a @ p["wa"] + p["ba"])
    u = bn(h, p["bnx_g"], p["bnx_b"], p["bnx_m"], p["bnx_v"])
    label = jax.nn.softmax(u @ p["wx"] + p["bx"], axis=1)
    return validity, label


if __name__ == "__main__":
    B, GENE_NUM, SUBTYPE_NUM = 8, 256, 4

    key = jax.random.PRNGKey(0)
    k_x, k_p = jax.random.split(key)
    x = jax.random.normal(k_x, (B, GENE_NUM), jnp.float32)
    params = init_params(k_p, GENE_NUM, SUBTYPE_NUM)

    validity, label = discriminator_forward(x, params)
    jax.block_until_ready((validity, label))

    v_ref, l_ref = reference_forward(x, params)
    np.testing.assert_allclose(np.asarray(validity), np.asarray(v_ref),
                               rtol=1e-4, atol=1e-4)
    np.testing.assert_allclose(np.asarray(label), np.asarray(l_ref),
                               rtol=1e-4, atol=1e-4)
    assert validity.shape == (B, 1) and label.shape == (B, SUBTYPE_NUM + 1)

    print("KERNEL_OK")
</pallas_src>

<mosaic_0001>
module attributes {stable_mosaic.version = 11 : i64} {
  func.func @_disc_kernel(%arg0: i32, %arg1: i32, %arg2: memref<8x256xf32, #tpu.memory_space<vmem>>, %arg3: memref<256x1024xf32, #tpu.memory_space<vmem>>, %arg4: memref<1x1024xf32, #tpu.memory_space<vmem>>, %arg5: memref<1024x1024xf32, #tpu.memory_space<vmem>>, %arg6: memref<1x1024xf32, #tpu.memory_space<vmem>>, %arg7: memref<1024x128xf32, #tpu.memory_space<vmem>>, %arg8: memref<1x128xf32, #tpu.memory_space<vmem>>, %arg9: memref<8x128xf32, #tpu.memory_space<vmem>>, %arg10: memref<8x1024xf32, #tpu.memory_space<vmem>>) attributes {dimension_semantics = [#tpu.dimension_semantics<parallel>, #tpu.dimension_semantics<arbitrary>], iteration_bounds = array<i64: 1, 1>, scalar_prefetch = 0 : i64, scratch_operands = 1 : i64, tpu.core_type = #tpu.core_type<tc>, window_params = [{transform_indices = @transform_0, window_bounds = array<i64: 8, 256>}, {transform_indices = @transform_1, window_bounds = array<i64: 256, 1024>}, {pipeline_mode = #tpu.pipeline_mode<synchronous>, transform_indices = @transform_2, window_bounds = array<i64: 1, 1024>}, {pipeline_mode = #tpu.pipeline_mode<synchronous>, transform_indices = @transform_3, window_bounds = array<i64: 1024, 1024>}, {pipeline_mode = #tpu.pipeline_mode<synchronous>, transform_indices = @transform_4, window_bounds = array<i64: 1, 1024>}, {pipeline_mode = #tpu.pipeline_mode<synchronous>, transform_indices = @transform_5, window_bounds = array<i64: 1024, 128>}, {pipeline_mode = #tpu.pipeline_mode<synchronous>, transform_indices = @transform_6, window_bounds = array<i64: 1, 128>}, {transform_indices = @transform_7, window_bounds = array<i64: 8, 128>}]} {
    %c0_i32 = arith.constant 0 : i32
    %0 = arith.cmpi eq, %arg1, %c0_i32 : i32
    %1 = arith.extui %0 : i1 to i32
    %c0_i32_0 = arith.constant 0 : i32
    %2 = arith.cmpi ne, %1, %c0_i32_0 : i32
    scf.if %2 {
      %cst_10 = arith.constant 0.000000e+00 : f32
      %12 = vector.broadcast %cst_10 : f32 to vector<8x1024xf32>
      %c0_11 = arith.constant 0 : index
      %c0_12 = arith.constant 0 : index
      %13 = vector.load %arg10[%c0_11, %c0_12] : memref<8x1024xf32, #tpu.memory_space<vmem>>, vector<8x1024xf32>
      tpu.vector_store %arg10[%c0_11, %c0_12], %12 {strides = array<i32>} : memref<8x1024xf32, #tpu.memory_space<vmem>>, vector<8x1024xf32>,
    } else {
    }
    %c0 = arith.constant 0 : index
    %c0_1 = arith.constant 0 : index
    %3 = vector.load %arg10[%c0, %c0_1] : memref<8x1024xf32, #tpu.memory_space<vmem>>, vector<8x1024xf32>
    %c0_2 = arith.constant 0 : index
    %c0_3 = arith.constant 0 : index
    %4 = vector.load %arg2[%c0_2, %c0_3] : memref<8x256xf32, #tpu.memory_space<vmem>>, vector<8x256xf32>
    %c0_4 = arith.constant 0 : index
    %c0_5 = arith.constant 0 : index
    %5 = vector.load %arg3[%c0_4, %c0_5] : memref<256x1024xf32, #tpu.memory_space<vmem>>, vector<256x1024xf32>
    %cst = arith.constant dense<0.000000e+00> : vector<8x1024xf32>
    %6 = tpu.matmul %4, %5, %cst {dimension_numbers = #tpu.dot_dimension_numbers<[1], [0], [0], [1], [0, 0, 1, 1], [], []>} : vector<8x256xf32>, vector<256x1024xf32>, vector<8x1024xf32> -> vector<8x1024xf32>
    %7 = arith.addf %3, %6 : vector<8x1024xf32>
    %c0_6 = arith.constant 0 : index
    %c0_7 = arith.constant 0 : index
    %8 = vector.load %arg10[%c0_6, %c0_7] : memref<8x1024xf32, #tpu.memory_space<vmem>>, vector<8x1024xf32>
    tpu.vector_store %arg10[%c0_6, %c0_7], %7 {strides = array<i32>} : memref<8x1024xf32, #tpu.memory_space<vmem>>, vector<8x1024xf32>,
    %c0_i32_8 = arith.constant 0 : i32
    %9 = arith.cmpi eq, %arg1, %c0_i32_8 : i32
    %10 = arith.extui %9 : i1 to i32
    %c0_i32_9 = arith.constant 0 : i32
    %11 = arith.cmpi ne, %10, %c0_i32_9 : i32
    scf.if %11 {
      %c0_10 = arith.constant 0 : index
      %c0_11 = arith.constant 0 : index
      %12 = vector.load %arg10[%c0_10, %c0_11] : memref<8x1024xf32, #tpu.memory_space<vmem>>, vector<8x1024xf32>
      %c0_12 = arith.constant 0 : index
      %c0_13 = arith.constant 0 : index
      %13 = vector.load %arg4[%c0_12, %c0_13] : memref<1x1024xf32, #tpu.memory_space<vmem>>, vector<1x1024xf32>
      %14 = vector.broadcast %13 : vector<1x1024xf32> to vector<8x1024xf32>
      %15 = arith.addf %12, %14 : vector<8x1024xf32>
      %cst_14 = arith.constant 0.000000e+00 : f32
      %16 = vector.broadcast %cst_14 : f32 to vector<8x1024xf32>
      %17 = arith.cmpf ogt, %15, %16 : vector<8x1024xf32>
      %cst_15 = arith.constant 1.000000e-01 : f32
      %18 = vector.broadcast %cst_15 : f32 to vector<8x1024xf32>
      %19 = arith.mulf %18, %15 : vector<8x1024xf32>
      %20 = arith.select %17, %15, %19 : vector<8x1024xi1>, vector<8x1024xf32>
      %c0_16 = arith.constant 0 : index
      %c0_17 = arith.constant 0 : index
      %21 = vector.load %arg5[%c0_16, %c0_17] : memref<1024x1024xf32, #tpu.memory_space<vmem>>, vector<1024x1024xf32>
      %cst_18 = arith.constant dense<0.000000e+00> : vector<8x1024xf32>
      %22 = tpu.matmul %20, %21, %cst_18 {dimension_numbers = #tpu.dot_dimension_numbers<[1], [0], [0], [1], [0, 0, 1, 1], [], []>} : vector<8x1024xf32>, vector<1024x1024xf32>, vector<8x1024xf32> -> vector<8x1024xf32>
      %c0_19 = arith.constant 0 : index
      %c0_20 = arith.constant 0 : index
      %23 = vector.load %arg6[%c0_19, %c0_20] : memref<1x1024xf32, #tpu.memory_space<vmem>>, vector<1x1024xf32>
      %24 = vector.broadcast %23 : vector<1x1024xf32> to vector<8x1024xf32>
      %25 = arith.addf %22, %24 : vector<8x1024xf32>
      %cst_21 = arith.constant 0.000000e+00 : f32
      %26 = vector.broadcast %cst_21 : f32 to vector<8x1024xf32>
      %27 = arith.cmpf ogt, %25, %26 : vector<8x1024xf32>
      %cst_22 = arith.constant 1.000000e-01 : f32
      %28 = vector.broadcast %cst_22 : f32 to vector<8x1024xf32>
      %29 = arith.mulf %28, %25 : vector<8x1024xf32>
      %30 = arith.select %27, %25, %29 : vector<8x1024xi1>, vector<8x1024xf32>
      %c0_23 = arith.constant 0 : index
      %c0_24 = arith.constant 0 : index
      %31 = vector.load %arg7[%c0_23, %c0_24] : memref<1024x128xf32, #tpu.memory_space<vmem>>, vector<1024x128xf32>
      %cst_25 = arith.constant dense<0.000000e+00> : vector<8x128xf32>
      %32 = tpu.matmul %30, %31, %cst_25 {dimension_numbers = #tpu.dot_dimension_numbers<[1], [0], [0], [1], [0, 0, 1, 1], [], []>} : vector<8x1024xf32>, vector<1024x128xf32>, vector<8x128xf32> -> vector<8x128xf32>
      %c0_26 = arith.constant 0 : index
      %c0_27 = arith.constant 0 : index
      %33 = vector.load %arg8[%c0_26, %c0_27] : memref<1x128xf32, #tpu.memory_space<vmem>>, vector<1x128xf32>
      %34 = vector.broadcast %33 : vector<1x128xf32> to vector<8x128xf32>
      %35 = arith.addf %32, %34 : vector<8x128xf32>
      %36 = tpu.iota {dimensions = array<i32: 1>} : vector<8x128xi32>
      %c1_i32 = arith.constant 1 : i32
      %37 = vector.broadcast %c1_i32 : i32 to vector<8x128xi32>
      %38 = arith.cmpi sge, %36, %37 : vector<8x128xi32>
      %c6_i32 = arith.constant 6 : i32
      %39 = vector.broadcast %c6_i32 : i32 to vector<8x128xi32>
      %40 = arith.cmpi slt, %36, %39 : vector<8x128xi32>
      %41 = arith.andi %38, %40 : vector<8x128xi1>
      %cst_28 = arith.constant 0xFF800000 : f32
      %42 = vector.broadcast %cst_28 : f32 to vector<8x128xf32>
      %43 = arith.select %41, %35, %42 : vector<8x128xi1>, vector<8x128xf32>
      %cst_29 = arith.constant dense<0xFF800000> : vector<8xf32>
      %44 = vector.multi_reduction <maximumf>, %43, %cst_29 [1] : vector<8x128xf32> to vector<8xf32>
      %45 = vector.shape_cast %44 : vector<8xf32> to vector<8x1xf32>
      %46 = vector.broadcast %45 : vector<8x1xf32> to vector<8x128xf32>
      %47 = arith.subf %35, %46 : vector<8x128xf32>
      %cst_30 = arith.constant 0xFF800000 : f32
      %48 = vector.broadcast %cst_30 : f32 to vector<8x128xf32>
      %49 = arith.select %41, %47, %48 : vector<8x128xi1>, vector<8x128xf32>
      %50 = math.exp %49 : vector<8x128xf32>
      %cst_31 = arith.constant dense<0.000000e+00> : vector<8xf32>
      %51 = vector.multi_reduction <add>, %50, %cst_31 [1] : vector<8x128xf32> to vector<8xf32>
      %52 = vector.shape_cast %51 : vector<8xf32> to vector<8x1xf32>
      %53 = tpu.reciprocal %52 : vector<8x1xf32> -> vector<8x1xf32>
      %54 = vector.broadcast %53 : vector<8x1xf32> to vector<8x128xf32>
      %55 = arith.mulf %50, %54 : vector<8x128xf32>
      %56 = arith.negf %35 : vector<8x128xf32>
      %57 = math.exp %56 : vector<8x128xf32>
      %cst_32 = arith.constant 1.000000e+00 : f32
      %58 = vector.broadcast %cst_32 : f32 to vector<8x128xf32>
      %59 = arith.addf %58, %57 : vector<8x128xf32>
      %60 = arith.divf %58, %59 : vector<8x128xf32>
      %c0_i32_33 = arith.constant 0 : i32
      %61 = vector.broadcast %c0_i32_33 : i32 to vector<8x128xi32>
      %62 = arith.cmpi eq, %36, %61 : vector<8x128xi32>
      %63 = arith.select %62, %60, %55 : vector<8x128xi1>, vector<8x128xf32>
      %c0_34 = arith.constant 0 : index
      %c0_35 = arith.constant 0 : index
      %64 = vector.load %arg9[%c0_34, %c0_35] : memref<8x128xf32, #tpu.memory_space<vmem>>, vector<8x128xf32>
      tpu.vector_store %arg9[%c0_34, %c0_35], %63 {strides = array<i32>} : memref<8x128xf32, #tpu.memory_space<vmem>>, vector<8x128xf32>,
    } else {
    }
    return
  }
  func.func @transform_0(%arg0: i32, %arg1: i32) -> (i32, i32) {
    %c0_i32 = arith.constant 0 : i32
    return %arg0, %arg1 : i32, i32
  }
  func.func @transform_1(%arg0: i32, %arg1: i32) -> (i32, i32) {
    %c0_i32 = arith.constant 0 : i32
    %c0_i32_0 = arith.constant 0 : i32
    return %arg1, %c0_i32 : i32, i32
  }
  func.func @transform_2(%arg0: i32, %arg1: i32) -> (i32, i32) {
    %c0_i32 = arith.constant 0 : i32
    %c0_i32_0 = arith.constant 0 : i32
    %c0_i32_1 = arith.constant 0 : i32
    return %c0_i32, %c0_i32_0 : i32, i32
  }
  func.func @transform_3(%arg0: i32, %arg1: i32) -> (i32, i32) {
    %c0_i32 = arith.constant 0 : i32
    %c0_i32_0 = arith.constant 0 : i32
    %c0_i32_1 = arith.constant 0 : i32
    return %c0_i32, %c0_i32_0 : i32, i32
  }
  func.func @transform_4(%arg0: i32, %arg1: i32) -> (i32, i32) {
    %c0_i32 = arith.constant 0 : i32
    %c0_i32_0 = arith.constant 0 : i32
    %c0_i32_1 = arith.constant 0 : i32
    return %c0_i32, %c0_i32_0 : i32, i32
  }
  func.func @transform_5(%arg0: i32, %arg1: i32) -> (i32, i32) {
    %c0_i32 = arith.constant 0 : i32
    %c0_i32_0 = arith.constant 0 : i32
    %c0_i32_1 = arith.constant 0 : i32
    return %c0_i32, %c0_i32_0 : i32, i32
  }
  func.func @transform_6(%arg0: i32, %arg1: i32) -> (i32, i32) {
    %c0_i32 = arith.constant 0 : i32
    %c0_i32_0 = arith.constant 0 : i32
    %c0_i32_1 = arith.constant 0 : i32
    return %c0_i32, %c0_i32_0 : i32, i32
  }
  func.func @transform_7(%arg0: i32, %arg1: i32) -> (i32, i32) {
    %c0_i32 = arith.constant 0 : i32
    %c0_i32_0 = arith.constant 0 : i32
    return %arg0, %c0_i32 : i32, i32
  }
}

</mosaic_0001>

<llo_original>
// kernel: tpu_custom_call.1
$region0: #{tpu_custom_call.1}
  #allocation0 [shape = 'u32[]', space=smem, size = 0x4, offset = 0x4, fixed_abs, tag = 'smem constant byte address 0x4 - core index']
  #allocation1 [shape = 'u32[144,128]{1,0:T(1,128)}', space=vmem, size = 0x12000, scoped, tag = 'internal scratch']
  #allocation2 [shape = 'f32[8,1024]{1,0:T(8,128)}', space=vmem, size = 0x8000, scoped, tag = 'scratch operand']
  %s0 = inlined_call_operand.hbm [shape: f32[8,256], index: 0, kind: input, shape index: {}]
  %s1 = inlined_call_operand.hbm [shape: f32[256,1024], index: 1, kind: input, shape index: {}]
  %s2 = inlined_call_operand.hbm [shape: f32[1,1024], index: 2, kind: input, shape index: {}]
  %s3 = inlined_call_operand.hbm [shape: f32[1024,1024], index: 3, kind: input, shape index: {}]
  %s4 = inlined_call_operand.hbm [shape: f32[1,1024], index: 4, kind: input, shape index: {}]
  %s5 = inlined_call_operand.hbm [shape: f32[1024,128], index: 5, kind: input, shape index: {}]
  %s6 = inlined_call_operand.hbm [shape: f32[1,128], index: 6, kind: input, shape index: {}]
  %s7 = inlined_call_operand.hbm [shape: f32[8,128], index: 7, kind: output, shape index: {}]
  %s8 = sld [smem:[#allocation0]]
  $region74: #{tpu_custom_call.1} parent=0
    _
  %s10 = ssub.s32 1, %s8
  %s11 = scalar_select 0, %s10, %s8
  $region1: #{tpu_custom_call.1} parent=0
    #allocation3 [shape = 'u8[8192]{0}', space=vmem, size = 0x2000, scoped, tag = 'input window, operand 0, single buffered']
    #allocation4 [shape = 's32[1]{0}', space=sflag, size = 0x4, scoped, tag = 'scoped memory for tpu_custom_call.1']
    #allocation5 [shape = 's32[1]{0}', space=sflag, size = 0x4, scoped, tag = 'scoped memory for tpu_custom_call.1']
    #allocation6 [shape = 'u8[1048576]{0}', space=vmem, size = 0x100000, scoped, tag = 'input window, operand 1, single buffered']
    #allocation7 [shape = 's32[1]{0}', space=sflag, size = 0x4, scoped, tag = 'scoped memory for tpu_custom_call.1']
    #allocation8 [shape = 'u8[4096]{0}', space=vmem, size = 0x1000, scoped, tag = 'input window, operand 2, single buffered']
    #allocation9 [shape = 'u8[4194304]{0}', space=vmem, size = 0x400000, scoped, tag = 'input window, operand 3, single buffered']
    #allocation10 [shape = 's32[1]{0}', space=sflag, size = 0x4, scoped, tag = 'scoped memory for tpu_custom_call.1']
    #allocation11 [shape = 'u8[4096]{0}', space=vmem, size = 0x1000, scoped, tag = 'input window, operand 4, single buffered']
    #allocation12 [shape = 'u8[524288]{0}', space=vmem, size = 0x80000, scoped, tag = 'input window, operand 5, single buffered']
    #allocation13 [shape = 's32[1]{0}', space=sflag, size = 0x4, scoped, tag = 'scoped memory for tpu_custom_call.1']
    #allocation14 [shape = 'u8[512]{0}', space=vmem, size = 0x400, scoped, tag = 'input window, operand 6, single buffered']
    #allocation15 [shape = 'u8[4096]{0}', space=vmem, size = 0x1000, scoped, tag = 'output window, operand 0, single buffered']
    %12 = vsyncpa [#allocation4], 0
    %13 = vsyncpa [#allocation7], 0
    %14 = vsyncpa [#allocation10], 0
    %15 = vsyncpa [#allocation13], 0
    %16 = vsyncpa [#allocation5], 0
    // Predicated region
    $region2: #{tpu_custom_call.1} parent=1 // pred_check
      _
    $region3: #{tpu_custom_call.1} parent=1 // pred_check_branch
      %18 = sbr.rel (0) target = $region5
    $region4: #{tpu_custom_call.1} parent=1 // pred_region
      %s20 = ssub.s32 256, 256
      %21 = vsyncadd [#allocation4], %s20
      %s23 = sshll.u32 [#allocation3], 4
      %s24 = int_to_ptr.vmem [resolvable:$true] %s23
      %26 = dma.hbm_to_vmem [thread:$0]  %s0, 256, %s24, [#allocation4]
    $region5: #{tpu_custom_call.1} parent=1 // pred_fallthru
      _
    // Predicated region
    $region6: #{tpu_custom_call.1} parent=1 // pred_check
      _
    $region7: #{tpu_custom_call.1} parent=1 // pred_check_branch
      %28 = sbr.rel (0) target = $region9
    $region8: #{tpu_custom_call.1} parent=1 // pred_region
      %s30 = ssub.s32 32768, 32768
      %31 = vsyncadd [#allocation7], %s30
      %s32 = sshll.u32 [#allocation6], 4
      %s33 = int_to_ptr.vmem [resolvable:$true] %s32
      %38 = dma.hbm_to_vmem [thread:$0]  %s1, 32768, %s33, [#allocation7], 1024, 1024, 64
    $region9: #{tpu_custom_call.1} parent=1 // pred_fallthru
      _
    // Predicated region
    $region10: #{tpu_custom_call.1} parent=1 // pred_check
      _
    $region11: #{tpu_custom_call.1} parent=1 // pred_check_branch
      %40 = sbr.rel (0) target = $region13
    $region12: #{tpu_custom_call.1} parent=1 // pred_region
      %s42 = ssub.s32 128, 128
      %43 = vsyncadd [#allocation7], %s42
      %s45 = sshll.u32 [#allocation8], 4
      %s46 = int_to_ptr.vmem [resolvable:$true] %s45
      %48 = dma.hbm_to_vmem [thread:$0]  %s2, 128, %s46, [#allocation7]
    $region13: #{tpu_custom_call.1} parent=1 // pred_fallthru
      _
    // Predicated region
    $region14: #{tpu_custom_call.1} parent=1 // pred_check
      _
    $region15: #{tpu_custom_call.1} parent=1 // pred_check_branch
      %50 = sbr.rel (0) target = $region17
    $region16: #{tpu_custom_call.1} parent=1 // pred_region
      %s52 = ssub.s32 131072, 131072
      %53 = vsyncadd [#allocation10], %s52
      %s54 = sshll.u32 [#allocation9], 4
      %s55 = int_to_ptr.vmem [resolvable:$true] %s54
      %60 = dma.hbm_to_vmem [thread:$0]  %s3, 131072, %s55, [#allocation10], 1024, 1024, 64
    $region17: #{tpu_custom_call.1} parent=1 // pred_fallthru
      _
    // Predicated region
    $region18: #{tpu_custom_call.1} parent=1 // pred_check
      _
    $region19: #{tpu_custom_call.1} parent=1 // pred_check_branch
      %62 = sbr.rel (0) target = $region21
    $region20: #{tpu_custom_call.1} parent=1 // pred_region
      %s64 = ssub.s32 128, 128
      %65 = vsyncadd [#allocation10], %s64
      %s67 = sshll.u32 [#allocation11], 4
      %s68 = int_to_ptr.vmem [resolvable:$true] %s67
      %70 = dma.hbm_to_vmem [thread:$0]  %s4, 128, %s68, [#allocation10]
    $region21: #{tpu_custom_call.1} parent=1 // pred_fallthru
      _
    // Predicated region
    $region22: #{tpu_custom_call.1} parent=1 // pred_check
      _
    $region23: #{tpu_custom_call.1} parent=1 // pred_check_branch
      %72 = sbr.rel (0) target = $region25
    $region24: #{tpu_custom_call.1} parent=1 // pred_region
      %s74 = ssub.s32 16384, 16384
      %75 = vsyncadd [#allocation13], %s74
      %s76 = sshll.u32 [#allocation12], 4
      %s77 = int_to_ptr.vmem [resolvable:$true] %s76
      %82 = dma.hbm_to_vmem [thread:$0]  %s5, 16384, %s77, [#allocation13], 128, 128, 8
    $region25: #{tpu_custom_call.1} parent=1 // pred_fallthru
      _
    // Predicated region
    $region26: #{tpu_custom_call.1} parent=1 // pred_check
      _
    $region27: #{tpu_custom_call.1} parent=1 // pred_check_branch
      %84 = sbr.rel (0) target = $region29
    $region28: #{tpu_custom_call.1} parent=1 // pred_region
      %s86 = ssub.s32 16, 16
      %87 = vsyncadd [#allocation13], %s86
      %s89 = sshll.u32 [#allocation14], 4
      %s90 = int_to_ptr.vmem [resolvable:$true] %s89
      %92 = dma.hbm_to_vmem [thread:$0]  %s6, 16, %s90, [#allocation13]
    $region29: #{tpu_custom_call.1} parent=1 // pred_fallthru
      _
    // Predicated region
    $region30: #{tpu_custom_call.1} parent=1 // pred_check
      _
    $region31: #{tpu_custom_call.1} parent=1 // pred_check_branch
      %94 = sbr.rel (0) target = $region33
    $region32: #{tpu_custom_call.1} parent=1 // pred_region
      %95 = dma.done [#allocation4], 256
    $region33: #{tpu_custom_call.1} parent=1 // pred_fallthru
      _
    // Predicated region
    $region34: #{tpu_custom_call.1} parent=1 // pred_check
      _
    $region35: #{tpu_custom_call.1} parent=1 // pred_check_branch
      %97 = sbr.rel (0) target = $region37
    $region36: #{tpu_custom_call.1} parent=1 // pred_region
      %98 = dma.done [#allocation7], 32768
    $region37: #{tpu_custom_call.1} parent=1 // pred_fallthru
      _
    // Predicated region
    $region38: #{tpu_custom_call.1} parent=1 // pred_check
      _
    $region39: #{tpu_custom_call.1} parent=1 // pred_check_branch
      %100 = sbr.rel (0) target = $region41
    $region40: #{tpu_custom_call.1} parent=1 // pred_region
      %101 = dma.done [#allocation7], 128
    $region41: #{tpu_custom_call.1} parent=1 // pred_fallthru
      _
    // Predicated region
    $region42: #{tpu_custom_call.1} parent=1 // pred_check
      _
    $region43: #{tpu_custom_call.1} parent=1 // pred_check_branch
      %103 = sbr.rel (0) target = $region45
    $region44: #{tpu_custom_call.1} parent=1 // pred_region
      %104 = dma.done [#allocation10], 131072
    $region45: #{tpu_custom_call.1} parent=1 // pred_fallthru
      _
    // Predicated region
    $region46: #{tpu_custom_call.1} parent=1 // pred_check
      _
    $region47: #{tpu_custom_call.1} parent=1 // pred_check_branch
      %106 = sbr.rel (0) target = $region49
    $region48: #{tpu_custom_call.1} parent=1 // pred_region
      %107 = dma.done [#allocation10], 128
    $region49: #{tpu_custom_call.1} parent=1 // pred_fallthru
      _
    // Predicated region
    $region50: #{tpu_custom_call.1} parent=1 // pred_check
      _
    $region51: #{tpu_custom_call.1} parent=1 // pred_check_branch
      %109 = sbr.rel (0) target = $region53
    $region52: #{tpu_custom_call.1} parent=1 // pred_region
      %110 = dma.done [#allocation13], 16384
    $region53: #{tpu_custom_call.1} parent=1 // pred_fallthru
      _
    // Predicated region
    $region54: #{tpu_custom_call.1} parent=1 // pred_check
      _
    $region55: #{tpu_custom_call.1} parent=1 // pred_check_branch
      %112 = sbr.rel (0) target = $region57
    $region56: #{tpu_custom_call.1} parent=1 // pred_region
      %113 = dma.done [#allocation13], 16
    $region57: #{tpu_custom_call.1} parent=1 // pred_fallthru
      _
    %p114 = scmp.eq.s32.totalorder 0, 0
    // Predicated region
    $region58: #{tpu_custom_call.1} parent=1 // pred_check
      %p115 = pneg %p114
    $region59: #{tpu_custom_call.1} parent=1 // pred_check_branch
      %117 = sbr.rel (%p115) target = $region61
    $region60: #{tpu_custom_call.1} parent=1 // pred_region
      %118 = vst [vmem:[#allocation2] sm:$0xff] 0.0
      %119 = vst [vmem:[#allocation2 + $0x8] sm:$0xff] 0.0
      %120 = vst [vmem:[#allocation2 + $0x10] sm:$0xff] 0.0
      %121 = vst [vmem:[#allocation2 + $0x18] sm:$0xff] 0.0
      %122 = vst [vmem:[#allocation2 + $0x20] sm:$0xff] 0.0
      %123 = vst [vmem:[#allocation2 + $0x28] sm:$0xff] 0.0
      %124 = vst [vmem:[#allocation2 + $0x30] sm:$0xff] 0.0
      %125 = vst [vmem:[#allocation2 + $0x38] sm:$0xff] 0.0
    $region61: #{tpu_custom_call.1} parent=1 // pred_fallthru
      _
    %v126 = vld [vmem:[#allocation2] sm:$0xff]
    %v127 = vld [vmem:[#allocation2 + $0x8] sm:$0xff]
    %v128 = vld [vmem:[#allocation2 + $0x10] sm:$0xff]
    %v129 = vld [vmem:[#allocation2 + $0x18] sm:$0xff]
    %v130 = vld [vmem:[#allocation2 + $0x20] sm:$0xff]
    %v131 = vld [vmem:[#allocation2 + $0x28] sm:$0xff]
    %v132 = vld [vmem:[#allocation2 + $0x30] sm:$0xff]
    %v133 = vld [vmem:[#allocation2 + $0x38] sm:$0xff]
    %v134 = vld [vmem:[#allocation3] sm:$0xff]
    %v135 = vld [vmem:[#allocation3 + $0x8] sm:$0xff]
    %v136 = vld [vmem:[#allocation6] sm:$0xff]
    %v137 = vld [vmem:[#allocation6 + $0x8] sm:$0xff]
    %v138 = vld [vmem:[#allocation6 + $0x10] sm:$0xff]
    %v139 = vld [vmem:[#allocation6 + $0x18] sm:$0xff]
    %v140 = vld [vmem:[#allocation6 + $0x20] sm:$0xff]
    %v141 = vld [vmem:[#allocation6 + $0x28] sm:$0xff]
    %v142 = vld [vmem:[#allocation6 + $0x30] sm:$0xff]
    %v143 = vld [vmem:[#allocation6 + $0x38] sm:$0xff]
    %v144 = vld [vmem:[#allocation6 + $0x40] sm:$0xff]
    %v145 = vld [vmem:[#allocation6 + $0x48] sm:$0xff]
    %v146 = vld [vmem:[#allocation6 + $0x50] sm:$0xff]
    %v147 = vld [vmem:[#allocation6 + $0x58] sm:$0xff]
    %v148 = vld [vmem:[#allocation6 + $0x60] sm:$0xff]
    %v149 = vld [vmem:[#allocation6 + $0x68] sm:$0xff]
    %v150 = vld [vmem:[#allocation6 + $0x70] sm:$0xff]
    %v151 = vld [vmem:[#allocation6 + $0x78] sm:$0xff]
    %v152 = vld [vmem:[#allocation6 + $0x80] sm:$0xff]
    %v153 = vld [vmem:[#allocation6 + $0x88] sm:$0xff]
    %v154 = vld [vmem:[#allocation6 + $0x90] sm:$0xff]
    %v155 = vld [vmem:[#allocation6 + $0x98] sm:$0xff]
    %v156 = vld [vmem:[#allocation6 + $0xa0] sm:$0xff]
    %v157 = vld [vmem:[#allocation6 + $0xa8] sm:$0xff]
    %v158 = vld [vmem:[#allocation6 + $0xb0] sm:$0xff]
    %v159 = vld [vmem:[#allocation6 + $0xb8] sm:$0xff]
    %v160 = vld [vmem:[#allocation6 + $0xc0] sm:$0xff]
    %v161 = vld [vmem:[#allocation6 + $0xc8] sm:$0xff]
    %v162 = vld [vmem:[#allocation6 + $0xd0] sm:$0xff]
    %v163 = vld [vmem:[#allocation6 + $0xd8] sm:$0xff]
    %v164 = vld [vmem:[#allocation6 + $0xe0] sm:$0xff]
    %v165 = vld [vmem:[#allocation6 + $0xe8] sm:$0xff]
    %v166 = vld [vmem:[#allocation6 + $0xf0] sm:$0xff]
    %v167 = vld [vmem:[#allocation6 + $0xf8] sm:$0xff]
    %v168 = vld [vmem:[#allocation6 + $0x100] sm:$0xff]
    %v169 = vld [vmem:[#allocation6 + $0x108] sm:$0xff]
    %v170 = vld [vmem:[#allocation6 + $0x110] sm:$0xff]
    %v171 = vld [vmem:[#allocation6 + $0x118] sm:$0xff]
    %v172 = vld [vmem:[#allocation6 + $0x120] sm:$0xff]
    %v173 = vld [vmem:[#allocation6 + $0x128] sm:$0xff]
    %v174 = vld [vmem:[#allocation6 + $0x130] sm:$0xff]
    %v175 = vld [vmem:[#allocation6 + $0x138] sm:$0xff]
    %v176 = vld [vmem:[#allocation6 + $0x140] sm:$0xff]
    %v177 = vld [vmem:[#allocation6 + $0x148] sm:$0xff]
    %v178 = vld [vmem:[#allocation6 + $0x150] sm:$0xff]
    %v179 = vld [vmem:[#allocation6 + $0x158] sm:$0xff]
    %v180 = vld [vmem:[#allocation6 + $0x160] sm:$0xff]
    %v181 = vld [vmem:[#allocation6 + $0x168] sm:$0xff]
    %v182 = vld [vmem:[#allocation6 + $0x170] sm:$0xff]
    %v183 = vld [vmem:[#allocation6 + $0x178] sm:$0xff]
    %v184 = vld [vmem:[#allocation6 + $0x180] sm:$0xff]
    %v185 = vld [vmem:[#allocation6 + $0x188] sm:$0xff]
    %v186 = vld [vmem:[#allocation6 + $0x190] sm:$0xff]
    %v187 = vld [vmem:[#allocation6 + $0x198] sm:$0xff]
    %v188 = vld [vmem:[#allocation6 + $0x1a0] sm:$0xff]
    %v189 = vld [vmem:[#allocation6 + $0x1a8] sm:$0xff]
    %v190 = vld [vmem:[#allocation6 + $0x1b0] sm:$0xff]
    %v191 = vld [vmem:[#allocation6 + $0x1b8] sm:$0xff]
    %v192 = vld [vmem:[#allocation6 + $0x1c0] sm:$0xff]
    %v193 = vld [vmem:[#allocation6 + $0x1c8] sm:$0xff]
    %v194 = vld [vmem:[#allocation6 + $0x1d0] sm:$0xff]
    %v195 = vld [vmem:[#allocation6 + $0x1d8] sm:$0xff]
    %v196 = vld [vmem:[#allocation6 + $0x1e0] sm:$0xff]
    %v197 = vld [vmem:[#allocation6 + $0x1e8] sm:$0xff]
    %v198 = vld [vmem:[#allocation6 + $0x1f0] sm:$0xff]
    %v199 = vld [vmem:[#allocation6 + $0x1f8] sm:$0xff]
    %v200 = vld [vmem:[#allocation6 + $0x200] sm:$0xff]
    %v201 = vld [vmem:[#allocation6 + $0x208] sm:$0xff]
    %v202 = vld [vmem:[#allocation6 + $0x210] sm:$0xff]
    %v203 = vld [vmem:[#allocation6 + $0x218] sm:$0xff]
    %v204 = vld [vmem:[#allocation6 + $0x220] sm:$0xff]
    %v205 = vld [vmem:[#allocation6 + $0x228] sm:$0xff]
    %v206 = vld [vmem:[#allocation6 + $0x230] sm:$0xff]
    %v207 = vld [vmem:[#allocation6 + $0x238] sm:$0xff]
    %v208 = vld [vmem:[#allocation6 + $0x240] sm:$0xff]
    %v209 = vld [vmem:[#allocation6 + $0x248] sm:$0xff]
    %v210 = vld [vmem:[#allocation6 + $0x250] sm:$0xff]
    %v211 = vld [vmem:[#allocation6 + $0x258] sm:$0xff]
    %v212 = vld [vmem:[#allocation6 + $0x260] sm:$0xff]
    %v213 = vld [vmem:[#allocation6 + $0x268] sm:$0xff]
    %v214 = vld [vmem:[#allocation6 + $0x270] sm:$0xff]
    %v215 = vld [vmem:[#allocation6 + $0x278] sm:$0xff]
    %v216 = vld [vmem:[#allocation6 + $0x280] sm:$0xff]
    %v217 = vld [vmem:[#allocation6 + $0x288] sm:$0xff]
    %v218 = vld [vmem:[#allocation6 + $0x290] sm:$0xff]
    %v219 = vld [vmem:[#allocation6 + $0x298] sm:$0xff]
    %v220 = vld [vmem:[#allocation6 + $0x2a0] sm:$0xff]
    %v221 = vld [vmem:[#allocation6 + $0x2a8] sm:$0xff]
    %v222 = vld [vmem:[#allocation6 + $0x2b0] sm:$0xff]
    %v223 = vld [vmem:[#allocation6 + $0x2b8] sm:$0xff]
    %v224 = vld [vmem:[#allocation6 + $0x2c0] sm:$0xff]
    %v225 = vld [vmem:[#allocation6 + $0x2c8] sm:$0xff]
    %v226 = vld [vmem:[#allocation6 + $0x2d0] sm:$0xff]
    %v227 = vld [vmem:[#allocation6 + $0x2d8] sm:$0xff]
    %v228 = vld [vmem:[#allocation6 + $0x2e0] sm:$0xff]
    %v229 = vld [vmem:[#allocation6 + $0x2e8] sm:$0xff]
    %v230 = vld [vmem:[#allocation6 + $0x2f0] sm:$0xff]
    %v231 = vld [vmem:[#allocation6 + $0x2f8] sm:$0xff]
    %v232 = vld [vmem:[#allocation6 + $0x300] sm:$0xff]
    %v233 = vld [vmem:[#allocation6 + $0x308] sm:$0xff]
    %v234 = vld [vmem:[#allocation6 + $0x310] sm:$0xff]
    %v235 = vld [vmem:[#allocation6 + $0x318] sm:$0xff]
    %v236 = vld [vmem:[#allocation6 + $0x320] sm:$0xff]
    %v237 = vld [vmem:[#allocation6 + $0x328] sm:$0xff]
    %v238 = vld [vmem:[#allocation6 + $0x330] sm:$0xff]
    %v239 = vld [vmem:[#allocation6 + $0x338] sm:$0xff]
    %v240 = vld [vmem:[#allocation6 + $0x340] sm:$0xff]
    %v241 = vld [vmem:[#allocation6 + $0x348] sm:$0xff]
    %v242 = vld [vmem:[#allocation6 + $0x350] sm:$0xff]
    %v243 = vld [vmem:[#allocation6 + $0x358] sm:$0xff]
    %v244 = vld [vmem:[#allocation6 + $0x360] sm:$0xff]
    %v245 = vld [vmem:[#allocation6 + $0x368] sm:$0xff]
    %v246 = vld [vmem:[#allocation6 + $0x370] sm:$0xff]
    %v247 = vld [vmem:[#allocation6 + $0x378] sm:$0xff]
    %v248 = vld [vmem:[#allocation6 + $0x380] sm:$0xff]
    %v249 = vld [vmem:[#allocation6 + $0x388] sm:$0xff]
    %v250 = vld [vmem:[#allocation6 + $0x390] sm:$0xff]
    %v251 = vld [vmem:[#allocation6 + $0x398] sm:$0xff]
    %v252 = vld [vmem:[#allocation6 + $0x3a0] sm:$0xff]
    %v253 = vld [vmem:[#allocation6 + $0x3a8] sm:$0xff]
    %v254 = vld [vmem:[#allocation6 + $0x3b0] sm:$0xff]
    %v255 = vld [vmem:[#allocation6 + $0x3b8] sm:$0xff]
    %v256 = vld [vmem:[#allocation6 + $0x3c0] sm:$0xff]
    %v257 = vld [vmem:[#allocation6 + $0x3c8] sm:$0xff]
    %v258 = vld [vmem:[#allocation6 + $0x3d0] sm:$0xff]
    %v259 = vld [vmem:[#allocation6 + $0x3d8] sm:$0xff]
    %v260 = vld [vmem:[#allocation6 + $0x3e0] sm:$0xff]
    %v261 = vld [vmem:[#allocation6 + $0x3e8] sm:$0xff]
    %v262 = vld [vmem:[#allocation6 + $0x3f0] sm:$0xff]
    %v263 = vld [vmem:[#allocation6 + $0x3f8] sm:$0xff]
    %v264 = vld [vmem:[#allocation6 + $0x400] sm:$0xff]
    %v265 = vld [vmem:[#allocation6 + $0x408] sm:$0xff]
    %v266 = vld [vmem:[#allocation6 + $0x410] sm:$0xff]
    %v267 = vld [vmem:[#allocation6 + $0x418] sm:$0xff]
    %v268 = vld [vmem:[#allocation6 + $0x420] sm:$0xff]
    %v269 = vld [vmem:[#allocation6 + $0x428] sm:$0xff]
    %v270 = vld [vmem:[#allocation6 + $0x430] sm:$0xff]
    %v271 = vld [vmem:[#allocation6 + $0x438] sm:$0xff]
    %v272 = vld [vmem:[#allocation6 + $0x440] sm:$0xff]
    %v273 = vld [vmem:[#allocation6 + $0x448] sm:$0xff]
    %v274 = vld [vmem:[#allocation6 + $0x450] sm:$0xff]
    %v275 = vld [vmem:[#allocation6 + $0x458] sm:$0xff]
    %v276 = vld [vmem:[#allocation6 + $0x460] sm:$0xff]
    %v277 = vld [vmem:[#allocation6 + $0x468] sm:$0xff]
    %v278 = vld [vmem:[#allocation6 + $0x470] sm:$0xff]
    %v279 = vld [vmem:[#allocation6 + $0x478] sm:$0xff]
    %v280 = vld [vmem:[#allocation6 + $0x480] sm:$0xff]
    %v281 = vld [vmem:[#allocation6 + $0x488] sm:$0xff]
    %v282 = vld [vmem:[#allocation6 + $0x490] sm:$0xff]
    %v283 = vld [vmem:[#allocation6 + $0x498] sm:$0xff]
    %v284 = vld [vmem:[#allocation6 + $0x4a0] sm:$0xff]
    %v285 = vld [vmem:[#allocation6 + $0x4a8] sm:$0xff]
    %v286 = vld [vmem:[#allocation6 + $0x4b0] sm:$0xff]
    %v287 = vld [vmem:[#allocation6 + $0x4b8] sm:$0xff]
    %v288 = vld [vmem:[#allocation6 + $0x4c0] sm:$0xff]
    %v289 = vld [vmem:[#allocation6 + $0x4c8] sm:$0xff]
    %v290 = vld [vmem:[#allocation6 + $0x4d0] sm:$0xff]
    %v291 = vld [vmem:[#allocation6 + $0x4d8] sm:$0xff]
    %v292 = vld [vmem:[#allocation6 + $0x4e0] sm:$0xff]
    %v293 = vld [vmem:[#allocation6 + $0x4e8] sm:$0xff]
    %v294 = vld [vmem:[#allocation6 + $0x4f0] sm:$0xff]
    %v295 = vld [vmem:[#allocation6 + $0x4f8] sm:$0xff]
    %v296 = vld [vmem:[#allocation6 + $0x500] sm:$0xff]
    %v297 = vld [vmem:[#allocation6 + $0x508] sm:$0xff]
    %v298 = vld [vmem:[#allocation6 + $0x510] sm:$0xff]
    %v299 = vld [vmem:[#allocation6 + $0x518] sm:$0xff]
    %v300 = vld [vmem:[#allocation6 + $0x520] sm:$0xff]
    %v301 = vld [vmem:[#allocation6 + $0x528] sm:$0xff]
    %v302 = vld [vmem:[#allocation6 + $0x530] sm:$0xff]
    %v303 = vld [vmem:[#allocation6 + $0x538] sm:$0xff]
    %v304 = vld [vmem:[#allocation6 + $0x540] sm:$0xff]
    %v305 = vld [vmem:[#allocation6 + $0x548] sm:$0xff]
    %v306 = vld [vmem:[#allocation6 + $0x550] sm:$0xff]
    %v307 = vld [vmem:[#allocation6 + $0x558] sm:$0xff]
    %v308 = vld [vmem:[#allocation6 + $0x560] sm:$0xff]
    %v309 = vld [vmem:[#allocation6 + $0x568] sm:$0xff]
    %v310 = vld [vmem:[#allocation6 + $0x570] sm:$0xff]
    %v311 = vld [vmem:[#allocation6 + $0x578] sm:$0xff]
    %v312 = vld [vmem:[#allocation6 + $0x580] sm:$0xff]
    %v313 = vld [vmem:[#allocation6 + $0x588] sm:$0xff]
    %v314 = vld [vmem:[#allocation6 + $0x590] sm:$0xff]
    %v315 = vld [vmem:[#allocation6 + $0x598] sm:$0xff]
    %v316 = vld [vmem:[#allocation6 + $0x5a0] sm:$0xff]
    %v317 = vld [vmem:[#allocation6 + $0x5a8] sm:$0xff]
    %v318 = vld [vmem:[#allocation6 + $0x5b0] sm:$0xff]
    %v319 = vld [vmem:[#allocation6 + $0x5b8] sm:$0xff]
    %v320 = vld [vmem:[#allocation6 + $0x5c0] sm:$0xff]
    %v321 = vld [vmem:[#allocation6 + $0x5c8] sm:$0xff]
    %v322 = vld [vmem:[#allocation6 + $0x5d0] sm:$0xff]
    %v323 = vld [vmem:[#allocation6 + $0x5d8] sm:$0xff]
    %v324 = vld [vmem:[#allocation6 + $0x5e0] sm:$0xff]
    %v325 = vld [vmem:[#allocation6 + $0x5e8] sm:$0xff]
    %v326 = vld [vmem:[#allocation6 + $0x5f0] sm:$0xff]
    %v327 = vld [vmem:[#allocation6 + $0x5f8] sm:$0xff]
    %v328 = vld [vmem:[#allocation6 + $0x600] sm:$0xff]
    %v329 = vld [vmem:[#allocation6 + $0x608] sm:$0xff]
    %v330 = vld [vmem:[#allocation6 + $0x610] sm:$0xff]
    %v331 = vld [vmem:[#allocation6 + $0x618] sm:$0xff]
    %v332 = vld [vmem:[#allocation6 + $0x620] sm:$0xff]
    %v333 = vld [vmem:[#allocation6 + $0x628] sm:$0xff]
    %v334 = vld [vmem:[#allocation6 + $0x630] sm:$0xff]
    %v335 = vld [vmem:[#allocation6 + $0x638] sm:$0xff]
    %v336 = vld [vmem:[#allocation6 + $0x640] sm:$0xff]
    %v337 = vld [vmem:[#allocation6 + $0x648] sm:$0xff]
    %v338 = vld [vmem:[#allocation6 + $0x650] sm:$0xff]
    %v339 = vld [vmem:[#allocation6 + $0x658] sm:$0xff]
    %v340 = vld [vmem:[#allocation6 + $0x660] sm:$0xff]
    %v341 = vld [vmem:[#allocation6 + $0x668] sm:$0xff]
    %v342 = vld [vmem:[#allocation6 + $0x670] sm:$0xff]
    %v343 = vld [vmem:[#allocation6 + $0x678] sm:$0xff]
    %v344 = vld [vmem:[#allocation6 + $0x680] sm:$0xff]
    %v345 = vld [vmem:[#allocation6 + $0x688] sm:$0xff]
    %v346 = vld [vmem:[#allocation6 + $0x690] sm:$0xff]
    %v347 = vld [vmem:[#allocation6 + $0x698] sm:$0xff]
    %v348 = vld [vmem:[#allocation6 + $0x6a0] sm:$0xff]
    %v349 = vld [vmem:[#allocation6 + $0x6a8] sm:$0xff]
    %v350 = vld [vmem:[#allocation6 + $0x6b0] sm:$0xff]
    %v351 = vld [vmem:[#allocation6 + $0x6b8] sm:$0xff]
    %v352 = vld [vmem:[#allocation6 + $0x6c0] sm:$0xff]
    %v353 = vld [vmem:[#allocation6 + $0x6c8] sm:$0xff]
    %v354 = vld [vmem:[#allocation6 + $0x6d0] sm:$0xff]
    %v355 = vld [vmem:[#allocation6 + $0x6d8] sm:$0xff]
    %v356 = vld [vmem:[#allocation6 + $0x6e0] sm:$0xff]
    %v357 = vld [vmem:[#allocation6 + $0x6e8] sm:$0xff]
    %v358 = vld [vmem:[#allocation6 + $0x6f0] sm:$0xff]
    %v359 = vld [vmem:[#allocation6 + $0x6f8] sm:$0xff]
    %v360 = vld [vmem:[#allocation6 + $0x700] sm:$0xff]
    %v361 = vld [vmem:[#allocation6 + $0x708] sm:$0xff]
    %v362 = vld [vmem:[#allocation6 + $0x710] sm:$0xff]
    %v363 = vld [vmem:[#allocation6 + $0x718] sm:$0xff]
    %v364 = vld [vmem:[#allocation6 + $0x720] sm:$0xff]
    %v365 = vld [vmem:[#allocation6 + $0x728] sm:$0xff]
    %v366 = vld [vmem:[#allocation6 + $0x730] sm:$0xff]
    %v367 = vld [vmem:[#allocation6 + $0x738] sm:$0xff]
    %v368 = vld [vmem:[#allocation6 + $0x740] sm:$0xff]
    %v369 = vld [vmem:[#allocation6 + $0x748] sm:$0xff]
    %v370 = vld [vmem:[#allocation6 + $0x750] sm:$0xff]
    %v371 = vld [vmem:[#allocation6 + $0x758] sm:$0xff]
    %v372 = vld [vmem:[#allocation6 + $0x760] sm:$0xff]
    %v373 = vld [vmem:[#allocation6 + $0x768] sm:$0xff]
    %v374 = vld [vmem:[#allocation6 + $0x770] sm:$0xff]
    %v375 = vld [vmem:[#allocation6 + $0x778] sm:$0xff]
    %v376 = vld [vmem:[#allocation6 + $0x780] sm:$0xff]
    %v377 = vld [vmem:[#allocation6 + $0x788] sm:$0xff]
    %v378 = vld [vmem:[#allocation6 + $0x790] sm:$0xff]
    %v379 = vld [vmem:[#allocation6 + $0x798] sm:$0xff]
    %v380 = vld [vmem:[#allocation6 + $0x7a0] sm:$0xff]
    %v381 = vld [vmem:[#allocation6 + $0x7a8] sm:$0xff]
    %v382 = vld [vmem:[#allocation6 + $0x7b0] sm:$0xff]
    %v383 = vld [vmem:[#allocation6 + $0x7b8] sm:$0xff]
    %v384 = vld [vmem:[#allocation6 + $0x7c0] sm:$0xff]
    %v385 = vld [vmem:[#allocation6 + $0x7c8] sm:$0xff]
    %v386 = vld [vmem:[#allocation6 + $0x7d0] sm:$0xff]
    %v387 = vld [vmem:[#allocation6 + $0x7d8] sm:$0xff]
    %v388 = vld [vmem:[#allocation6 + $0x7e0] sm:$0xff]
    %v389 = vld [vmem:[#allocation6 + $0x7e8] sm:$0xff]
    %v390 = vld [vmem:[#allocation6 + $0x7f0] sm:$0xff]
    %v391 = vld [vmem:[#allocation6 + $0x7f8] sm:$0xff]
    %392 = vmatprep.subr.mxu0 %v137
    %393 = vmatpush1.msra.mxu0 %v136
    %394 = vmatprep.subr.mxu0 %v145
    %395 = vmatpush1.msra.mxu0 %v144
    %396 = vmatprep.subr.mxu0 %v153
    %397 = vmatpush1.msra.mxu0 %v152
    %398 = vmatprep.subr.mxu0 %v161
    %399 = vmatpush1.msra.mxu0 %v160
    %400 = vmatprep.subr.mxu0 %v169
    %401 = vmatpush1.msra.mxu0 %v168
    %402 = vmatprep.subr.mxu0 %v177
    %403 = vmatpush1.msra.mxu0 %v176
    %404 = vmatprep.subr.mxu0 %v185
    %405 = vmatpush1.msra.mxu0 %v184
    %406 = vmatprep.subr.mxu0 %v193
    %407 = vmatpush1.msra.mxu0 %v192
    %408 = vmatprep.subr.mxu0 %v201
    %409 = vmatpush1.msra.mxu0 %v200
    %410 = vmatprep.subr.mxu0 %v209
    %411 = vmatpush1.msra.mxu0 %v208
    %412 = vmatprep.subr.mxu0 %v217
    %413 = vmatpush1.msra.mxu0 %v216
    %414 = vmatprep.subr.mxu0 %v225
    %415 = vmatpush1.msra.mxu0 %v224
    %416 = vmatprep.subr.mxu0 %v233
    %417 = vmatpush1.msra.mxu0 %v232
    %418 = vmatprep.subr.mxu0 %v241
    %419 = vmatpush1.msra.mxu0 %v240
    %420 = vmatprep.subr.mxu0 %v249
    %421 = vmatpush1.msra.mxu0 %v248
    %422 = vmatprep.subr.mxu0 %v257
    %423 = vmatpush1.msra.mxu0 %v256
    %424 = vmatprep.subr.mxu0 %v265
    %425 = vmatpush1.msra.mxu0 %v264
    %426 = vmatprep.subr.mxu0 %v273
    %427 = vmatpush1.msra.mxu0 %v272
    %428 = vmatprep.subr.mxu0 %v281
    %429 = vmatpush1.msra.mxu0 %v280
    %430 = vmatprep.subr.mxu0 %v289
    %431 = vmatpush1.msra.mxu0 %v288
    %432 = vmatprep.subr.mxu0 %v297
    %433 = vmatpush1.msra.mxu0 %v296
    %434 = vmatprep.subr.mxu0 %v305
    %435 = vmatpush1.msra.mxu0 %v304
    %436 = vmatprep.subr.mxu0 %v313
    %437 = vmatpush1.msra.mxu0 %v312
    %438 = vmatprep.subr.mxu0 %v321
    %439 = vmatpush1.msra.mxu0 %v320
    %440 = vmatprep.subr.mxu0 %v329
    %441 = vmatpush1.msra.mxu0 %v328
    %442 = vmatprep.subr.mxu0 %v337
    %443 = vmatpush1.msra.mxu0 %v336
    %444 = vmatprep.subr.mxu0 %v345
    %445 = vmatpush1.msra.mxu0 %v344
    %446 = vmatprep.subr.mxu0 %v353
    %447 = vmatpush1.msra.mxu0 %v352
    %448 = vmatprep.subr.mxu0 %v361
    %449 = vmatpush1.msra.mxu0 %v360
    %450 = vmatprep.subr.mxu0 %v369
    %451 = vmatpush1.msra.mxu0 %v368
    %452 = vmatprep.subr.mxu0 %v377
    %453 = vmatpush1.msra.mxu0 %v376
    %454 = vmatprep.subr.mxu0 %v385
    %455 = vmatpush1.msra.mxu0 %v384
    %456 = vmatprep.mubr.f32.mxu0 %v135
    %457 = vmatmul.mubr.f32.gmra.mrb[0].mxu0 %v134
    %v458 = vpop.f32.mrb[0].mxu0
    %v459 = vadd.f32 0.0, %v458
    %v460 = vpop.f32.mrb[0].mxu0
    %v461 = vadd.f32 0.0, %v460
    %462 = vdwg.mxu0
    %463 = vmatprep.subr.mxu0 %v139
    %464 = vmatpush1.msra.mxu0 %v138
    %465 = vmatprep.subr.mxu0 %v147
    %466 = vmatpush1.msra.mxu0 %v146
    %467 = vmatprep.subr.mxu0 %v155
    %468 = vmatpush1.msra.mxu0 %v154
    %469 = vmatprep.subr.mxu0 %v163
    %470 = vmatpush1.msra.mxu0 %v162
    %471 = vmatprep.subr.mxu0 %v171
    %472 = vmatpush1.msra.mxu0 %v170
    %473 = vmatprep.subr.mxu0 %v179
    %474 = vmatpush1.msra.mxu0 %v178
    %475 = vmatprep.subr.mxu0 %v187
    %476 = vmatpush1.msra.mxu0 %v186
    %477 = vmatprep.subr.mxu0 %v195
    %478 = vmatpush1.msra.mxu0 %v194
    %479 = vmatprep.subr.mxu0 %v203
    %480 = vmatpush1.msra.mxu0 %v202
    %481 = vmatprep.subr.mxu0 %v211
    %482 = vmatpush1.msra.mxu0 %v210
    %483 = vmatprep.subr.mxu0 %v219
    %484 = vmatpush1.msra.mxu0 %v218
    %485 = vmatprep.subr.mxu0 %v227
    %486 = vmatpush1.msra.mxu0 %v226
    %487 = vmatprep.subr.mxu0 %v235
    %488 = vmatpush1.msra.mxu0 %v234
    %489 = vmatprep.subr.mxu0 %v243
    %490 = vmatpush1.msra.mxu0 %v242
    %491 = vmatprep.subr.mxu0 %v251
    %492 = vmatpush1.msra.mxu0 %v250
    %493 = vmatprep.subr.mxu0 %v259
    %494 = vmatpush1.msra.mxu0 %v258
    %495 = vmatprep.subr.mxu0 %v267
    %496 = vmatpush1.msra.mxu0 %v266
    %497 = vmatprep.subr.mxu0 %v275
    %498 = vmatpush1.msra.mxu0 %v274
    %499 = vmatprep.subr.mxu0 %v283
    %500 = vmatpush1.msra.mxu0 %v282
    %501 = vmatprep.subr.mxu0 %v291
    %502 = vmatpush1.msra.mxu0 %v290
    %503 = vmatprep.subr.mxu0 %v299
    %504 = vmatpush1.msra.mxu0 %v298
    %505 = vmatprep.subr.mxu0 %v307
    %506 = vmatpush1.msra.mxu0 %v306
    %507 = vmatprep.subr.mxu0 %v315
    %508 = vmatpush1.msra.mxu0 %v314
    %509 = vmatprep.subr.mxu0 %v323
    %510 = vmatpush1.msra.mxu0 %v322
    %511 = vmatprep.subr.mxu0 %v331
    %512 = vmatpush1.msra.mxu0 %v330
    %513 = vmatprep.subr.mxu0 %v339
    %514 = vmatpush1.msra.mxu0 %v338
    %515 = vmatprep.subr.mxu0 %v347
    %516 = vmatpush1.msra.mxu0 %v346
    %517 = vmatprep.subr.mxu0 %v355
    %518 = vmatpush1.msra.mxu0 %v354
    %519 = vmatprep.subr.mxu0 %v363
    %520 = vmatpush1.msra.mxu0 %v362
    %521 = vmatprep.subr.mxu0 %v371
    %522 = vmatpush1.msra.mxu0 %v370
    %523 = vmatprep.subr.mxu0 %v379
    %524 = vmatpush1.msra.mxu0 %v378
    %525 = vmatprep.subr.mxu0 %v387
    %526 = vmatpush1.msra.mxu0 %v386
    %527 = vmatprep.mubr.f32.mxu0 %v135
    %528 = vmatmul.mubr.f32.gmra.mrb[0].mxu0 %v134
    %v529 = vpop.f32.mrb[0].mxu0
    %v530 = vadd.f32 0.0, %v529
    %v531 = vpop.f32.mrb[0].mxu0
    %v532 = vadd.f32 0.0, %v531
    %533 = vdwg.mxu0
    %534 = vmatprep.subr.mxu0 %v141
    %535 = vmatpush1.msra.mxu0 %v140
    %536 = vmatprep.subr.mxu0 %v149
    %537 = vmatpush1.msra.mxu0 %v148
    %538 = vmatprep.subr.mxu0 %v157
    %539 = vmatpush1.msra.mxu0 %v156
    %540 = vmatprep.subr.mxu0 %v165
    %541 = vmatpush1.msra.mxu0 %v164
    %542 = vmatprep.subr.mxu0 %v173
    %543 = vmatpush1.msra.mxu0 %v172
    %544 = vmatprep.subr.mxu0 %v181
    %545 = vmatpush1.msra.mxu0 %v180
    %546 = vmatprep.subr.mxu0 %v189
    %547 = vmatpush1.msra.mxu0 %v188
    %548 = vmatprep.subr.mxu0 %v197
    %549 = vmatpush1.msra.mxu0 %v196
    %550 = vmatprep.subr.mxu0 %v205
    %551 = vmatpush1.msra.mxu0 %v204
    %552 = vmatprep.subr.mxu0 %v213
    %553 = vmatpush1.msra.mxu0 %v212
    %554 = vmatprep.subr.mxu0 %v221
    %555 = vmatpush1.msra.mxu0 %v220
    %556 = vmatprep.subr.mxu0 %v229
    %557 = vmatpush1.msra.mxu0 %v228
    %558 = vmatprep.subr.mxu0 %v237
    %559 = vmatpush1.msra.mxu0 %v236
    %560 = vmatprep.subr.mxu0 %v245
    %561 = vmatpush1.msra.mxu0 %v244
    %562 = vmatprep.subr.mxu0 %v253
    %563 = vmatpush1.msra.mxu0 %v252
    %564 = vmatprep.subr.mxu0 %v261
    %565 = vmatpush1.msra.mxu0 %v260
    %566 = vmatprep.subr.mxu0 %v269
    %567 = vmatpush1.msra.mxu0 %v268
    %568 = vmatprep.subr.mxu0 %v277
    %569 = vmatpush1.msra.mxu0 %v276
    %570 = vmatprep.subr.mxu0 %v285
    %571 = vmatpush1.msra.mxu0 %v284
    %572 = vmatprep.subr.mxu0 %v293
    %573 = vmatpush1.msra.mxu0 %v292
    %574 = vmatprep.subr.mxu0 %v301
    %575 = vmatpush1.msra.mxu0 %v300
    %576 = vmatprep.subr.mxu0 %v309
    %577 = vmatpush1.msra.mxu0 %v308
    %578 = vmatprep.subr.mxu0 %v317
    %579 = vmatpush1.msra.mxu0 %v316
    %580 = vmatprep.subr.mxu0 %v325
    %581 = vmatpush1.msra.mxu0 %v324
    %582 = vmatprep.subr.mxu0 %v333
    %583 = vmatpush1.msra.mxu0 %v332
    %584 = vmatprep.subr.mxu0 %v341
    %585 = vmatpush1.msra.mxu0 %v340
    %586 = vmatprep.subr.mxu0 %v349
    %587 = vmatpush1.msra.mxu0 %v348
    %588 = vmatprep.subr.mxu0 %v357
    %589 = vmatpush1.msra.mxu0 %v356
    %590 = vmatprep.subr.mxu0 %v365
    %591 = vmatpush1.msra.mxu0 %v364
    %592 = vmatprep.subr.mxu0 %v373
    %593 = vmatpush1.msra.mxu0 %v372
    %594 = vmatprep.subr.mxu0 %v381
    %595 = vmatpush1.msra.mxu0 %v380
    %596 = vmatprep.subr.mxu0 %v389
    %597 = vmatpush1.msra.mxu0 %v388
    %598 = vmatprep.mubr.f32.mxu0 %v135
    %599 = vmatmul.mubr.f32.gmra.mrb[0].mxu0 %v134
    %v600 = vpop.f32.mrb[0].mxu0
    %v601 = vadd.f32 0.0, %v600
    %v602 = vpop.f32.mrb[0].mxu0
    %v603 = vadd.f32 0.0, %v602
    %604 = vdwg.mxu0
    %605 = vmatprep.subr.mxu0 %v143
    %606 = vmatpush1.msra.mxu0 %v142
    %607 = vmatprep.subr.mxu0 %v151
    %608 = vmatpush1.msra.mxu0 %v150
    %609 = vmatprep.subr.mxu0 %v159
    %610 = vmatpush1.msra.mxu0 %v158
    %611 = vmatprep.subr.mxu0 %v167
    %612 = vmatpush1.msra.mxu0 %v166
    %613 = vmatprep.subr.mxu0 %v175
    %614 = vmatpush1.msra.mxu0 %v174
    %615 = vmatprep.subr.mxu0 %v183
    %616 = vmatpush1.msra.mxu0 %v182
    %617 = vmatprep.subr.mxu0 %v191
    %618 = vmatpush1.msra.mxu0 %v190
    %619 = vmatprep.subr.mxu0 %v199
    %620 = vmatpush1.msra.mxu0 %v198
    %621 = vmatprep.subr.mxu0 %v207
    %622 = vmatpush1.msra.mxu0 %v206
    %623 = vmatprep.subr.mxu0 %v215
    %624 = vmatpush1.msra.mxu0 %v214
    %625 = vmatprep.subr.mxu0 %v223
    %626 = vmatpush1.msra.mxu0 %v222
    %627 = vmatprep.subr.mxu0 %v231
    %628 = vmatpush1.msra.mxu0 %v230
    %629 = vmatprep.subr.mxu0 %v239
    %630 = vmatpush1.msra.mxu0 %v238
    %631 = vmatprep.subr.mxu0 %v247
    %632 = vmatpush1.msra.mxu0 %v246
    %633 = vmatprep.subr.mxu0 %v255
    %634 = vmatpush1.msra.mxu0 %v254
    %635 = vmatprep.subr.mxu0 %v263
    %636 = vmatpush1.msra.mxu0 %v262
    %637 = vmatprep.subr.mxu0 %v271
    %638 = vmatpush1.msra.mxu0 %v270
    %639 = vmatprep.subr.mxu0 %v279
    %640 = vmatpush1.msra.mxu0 %v278
    %641 = vmatprep.subr.mxu0 %v287
    %642 = vmatpush1.msra.mxu0 %v286
    %643 = vmatprep.subr.mxu0 %v295
    %644 = vmatpush1.msra.mxu0 %v294
    %645 = vmatprep.subr.mxu0 %v303
    %646 = vmatpush1.msra.mxu0 %v302
    %647 = vmatprep.subr.mxu0 %v311
    %648 = vmatpush1.msra.mxu0 %v310
    %649 = vmatprep.subr.mxu0 %v319
    %650 = vmatpush1.msra.mxu0 %v318
    %651 = vmatprep.subr.mxu0 %v327
    %652 = vmatpush1.msra.mxu0 %v326
    %653 = vmatprep.subr.mxu0 %v335
    %654 = vmatpush1.msra.mxu0 %v334
    %655 = vmatprep.subr.mxu0 %v343
    %656 = vmatpush1.msra.mxu0 %v342
    %657 = vmatprep.subr.mxu0 %v351
    %658 = vmatpush1.msra.mxu0 %v350
    %659 = vmatprep.subr.mxu0 %v359
    %660 = vmatpush1.msra.mxu0 %v358
    %661 = vmatprep.subr.mxu0 %v367
    %662 = vmatpush1.msra.mxu0 %v366
    %663 = vmatprep.subr.mxu0 %v375
    %664 = vmatpush1.msra.mxu0 %v374
    %665 = vmatprep.subr.mxu0 %v383
    %666 = vmatpush1.msra.mxu0 %v382
    %667 = vmatprep.subr.mxu0 %v391
    %668 = vmatpush1.msra.mxu0 %v390
    %669 = vmatprep.mubr.f32.mxu0 %v135
    %670 = vmatmul.mubr.f32.gmra.mrb[0].mxu0 %v134
    %v671 = vpop.f32.mrb[0].mxu0
    %v672 = vadd.f32 0.0, %v671
    %v673 = vpop.f32.mrb[0].mxu0
    %v674 = vadd.f32 0.0, %v673
    %675 = vdwg.mxu0
    %v676 = vadd.f32 %v126, %v459
    %v677 = vadd.f32 %v127, %v461
    %v678 = vadd.f32 %v128, %v530
    %v679 = vadd.f32 %v129, %v532
    %v680 = vadd.f32 %v130, %v601
    %v681 = vadd.f32 %v131, %v603
    %v682 = vadd.f32 %v132, %v672
    %v683 = vadd.f32 %v133, %v674
    %684 = vst [vmem:[#allocation2] sm:$0xff] %v676
    %685 = vst [vmem:[#allocation2 + $0x8] sm:$0xff] %v677
    %686 = vst [vmem:[#allocation2 + $0x10] sm:$0xff] %v678
    %687 = vst [vmem:[#allocation2 + $0x18] sm:$0xff] %v679
    %688 = vst [vmem:[#allocation2 + $0x20] sm:$0xff] %v680
    %689 = vst [vmem:[#allocation2 + $0x28] sm:$0xff] %v681
    %690 = vst [vmem:[#allocation2 + $0x30] sm:$0xff] %v682
    %691 = vst [vmem:[#allocation2 + $0x38] sm:$0xff] %v683
    // Predicated region
    $region62: #{tpu_custom_call.1} parent=1 // pred_check
      %p692 = pneg %p114
    $region63: #{tpu_custom_call.1} parent=1 // pred_check_branch
      %694 = sbr.rel (%p692) target = $region65
    $region64: #{tpu_custom_call.1} parent=1 // pred_region
      %v695 = vld [vmem:[#allocation2] sm:$0xff]
      %v696 = vld [vmem:[#allocation2 + $0x8] sm:$0xff]
      %v697 = vld [vmem:[#allocation2 + $0x10] sm:$0xff]
      %v698 = vld [vmem:[#allocation2 + $0x18] sm:$0xff]
      %v699 = vld [vmem:[#allocation2 + $0x20] sm:$0xff]
      %v700 = vld [vmem:[#allocation2 + $0x28] sm:$0xff]
      %v701 = vld [vmem:[#allocation2 + $0x30] sm:$0xff]
      %v702 = vld [vmem:[#allocation2 + $0x38] sm:$0xff]
      %v703 = vld [vmem:[#allocation8] sm:$0xff]
      %v705 = vlaneseq
      %v706 = vshrl.u32 %v705, 7
      %v707 = vsub.s32 0, %v706
      %v708 = vrot.slane %v703, %v707
      %v709 = vlaneseq
      %v710 = vshrl.u32 %v709, 7
      %v711 = vsub.s32 1, %v710
      %v712 = vrot.slane %v703, %v711
      %v713 = vlaneseq
      %v714 = vshrl.u32 %v713, 7
      %v715 = vsub.s32 2, %v714
      %v716 = vrot.slane %v703, %v715
      %v717 = vlaneseq
      %v718 = vshrl.u32 %v717, 7
      %v719 = vsub.s32 3, %v718
      %v720 = vrot.slane %v703, %v719
      %v721 = vlaneseq
      %v722 = vshrl.u32 %v721, 7
      %v723 = vsub.s32 4, %v722
      %v724 = vrot.slane %v703, %v723
      %v725 = vlaneseq
      %v726 = vshrl.u32 %v725, 7
      %v727 = vsub.s32 5, %v726
      %v728 = vrot.slane %v703, %v727
      %v729 = vlaneseq
      %v730 = vshrl.u32 %v729, 7
      %v731 = vsub.s32 6, %v730
      %v732 = vrot.slane %v703, %v731
      %v733 = vlaneseq
      %v734 = vshrl.u32 %v733, 7
      %v735 = vsub.s32 7, %v734
      %v736 = vrot.slane %v703, %v735
      %v745 = vadd.f32 %v695, %v708
      %v746 = vadd.f32 %v696, %v712
      %v747 = vadd.f32 %v697, %v716
      %v748 = vadd.f32 %v698, %v720
      %v749 = vadd.f32 %v699, %v724
      %v750 = vadd.f32 %v700, %v728
      %v751 = vadd.f32 %v701, %v732
      %v752 = vadd.f32 %v702, %v736
      %vm753 = vcmp.gt.f32.partialorder %v745, 0.0
      %vm754 = vcmp.gt.f32.partialorder %v746, 0.0
      %vm755 = vcmp.gt.f32.partialorder %v747, 0.0
      %vm756 = vcmp.gt.f32.partialorder %v748, 0.0
      %vm757 = vcmp.gt.f32.partialorder %v749, 0.0
      %vm758 = vcmp.gt.f32.partialorder %v750, 0.0
      %vm759 = vcmp.gt.f32.partialorder %v751, 0.0
      %vm760 = vcmp.gt.f32.partialorder %v752, 0.0
      %v761 = vmul.f32 %v745, 0.1
      %v762 = vmul.f32 %v746, 0.1
      %v763 = vmul.f32 %v747, 0.1
      %v764 = vmul.f32 %v748, 0.1
      %v765 = vmul.f32 %v749, 0.1
      %v766 = vmul.f32 %v750, 0.1
      %v767 = vmul.f32 %v751, 0.1
      %v768 = vmul.f32 %v752, 0.1
      %v769 = vsel %vm753, %v745, %v761
      %v770 = vsel %vm754, %v746, %v762
      %v771 = vsel %vm755, %v747, %v763
      %v772 = vsel %vm756, %v748, %v764
      %v773 = vsel %vm757, %v749, %v765
      %v774 = vsel %vm758, %v750, %v766
      %v775 = vsel %vm759, %v751, %v767
      %v776 = vsel %vm760, %v752, %v768
      %v777 = vld [vmem:[#allocation9] sm:$0xff]
      %v778 = vld [vmem:[#allocation9 + $0x8] sm:$0xff]
      %v779 = vld [vmem:[#allocation9 + $0x10] sm:$0xff]
      %v780 = vld [vmem:[#allocation9 + $0x18] sm:$0xff]
      %v781 = vld [vmem:[#allocation9 + $0x20] sm:$0xff]
      %v782 = vld [vmem:[#allocation9 + $0x28] sm:$0xff]
      %v783 = vld [vmem:[#allocation9 + $0x30] sm:$0xff]
      %v784 = vld [vmem:[#allocation9 + $0x38] sm:$0xff]
      %v785 = vld [vmem:[#allocation9 + $0x40] sm:$0xff]
      %v786 = vld [vmem:[#allocation9 + $0x48] sm:$0xff]
      %v787 = vld [vmem:[#allocation9 + $0x50] sm:$0xff]
      %v788 = vld [vmem:[#allocation9 + $0x58] sm:$0xff]
      %v789 = vld [vmem:[#allocation9 + $0x60] sm:$0xff]
      %v790 = vld [vmem:[#allocation9 + $0x68] sm:$0xff]
      %v791 = vld [vmem:[#allocation9 + $0x70] sm:$0xff]
      %v792 = vld [vmem:[#allocation9 + $0x78] sm:$0xff]
      %v793 = vld [vmem:[#allocation9 + $0x80] sm:$0xff]
      %v794 = vld [vmem:[#allocation9 + $0x88] sm:$0xff]
      %v795 = vld [vmem:[#allocation9 + $0x90] sm:$0xff]
      %v796 = vld [vmem:[#allocation9 + $0x98] sm:$0xff]
      %v797 = vld [vmem:[#allocation9 + $0xa0] sm:$0xff]
      %v798 = vld [vmem:[#allocation9 + $0xa8] sm:$0xff]
      %v799 = vld [vmem:[#allocation9 + $0xb0] sm:$0xff]
      %v800 = vld [vmem:[#allocation9 + $0xb8] sm:$0xff]
      %v801 = vld [vmem:[#allocation9 + $0xc0] sm:$0xff]
      %v802 = vld [vmem:[#allocation9 + $0xc8] sm:$0xff]
      %v803 = vld [vmem:[#allocation9 + $0xd0] sm:$0xff]
      %v804 = vld [vmem:[#allocation9 + $0xd8] sm:$0xff]
      %v805 = vld [vmem:[#allocation9 + $0xe0] sm:$0xff]
      %v806 = vld [vmem:[#allocation9 + $0xe8] sm:$0xff]
      %v807 = vld [vmem:[#allocation9 + $0xf0] sm:$0xff]
      %v808 = vld [vmem:[#allocation9 + $0xf8] sm:$0xff]
      %v809 = vld [vmem:[#allocation9 + $0x100] sm:$0xff]
      %v810 = vld [vmem:[#allocation9 + $0x108] sm:$0xff]
      %v811 = vld [vmem:[#allocation9 + $0x110] sm:$0xff]
      %v812 = vld [vmem:[#allocation9 + $0x118] sm:$0xff]
      %v813 = vld [vmem:[#allocation9 + $0x120] sm:$0xff]
      %v814 = vld [vmem:[#allocation9 + $0x128] sm:$0xff]
      %v815 = vld [vmem:[#allocation9 + $0x130] sm:$0xff]
      %v816 = vld [vmem:[#allocation9 + $0x138] sm:$0xff]
      %v817 = vld [vmem:[#allocation9 + $0x140] sm:$0xff]
      %v818 = vld [vmem:[#allocation9 + $0x148] sm:$0xff]
      %v819 = vld [vmem:[#allocation9 + $0x150] sm:$0xff]
      %v820 = vld [vmem:[#allocation9 + $0x158] sm:$0xff]
      %v821 = vld [vmem:[#allocation9 + $0x160] sm:$0xff]
      %v822 = vld [vmem:[#allocation9 + $0x168] sm:$0xff]
      %v823 = vld [vmem:[#allocation9 + $0x170] sm:$0xff]
      %v824 = vld [vmem:[#allocation9 + $0x178] sm:$0xff]
      %v825 = vld [vmem:[#allocation9 + $0x180] sm:$0xff]
      %v826 = vld [vmem:[#allocation9 + $0x188] sm:$0xff]
      %v827 = vld [vmem:[#allocation9 + $0x190] sm:$0xff]
      %v828 = vld [vmem:[#allocation9 + $0x198] sm:$0xff]
      %v829 = vld [vmem:[#allocation9 + $0x1a0] sm:$0xff]
      %v830 = vld [vmem:[#allocation9 + $0x1a8] sm:$0xff]
      %v831 = vld [vmem:[#allocation9 + $0x1b0] sm:$0xff]
      %v832 = vld [vmem:[#allocation9 + $0x1b8] sm:$0xff]
      %v833 = vld [vmem:[#allocation9 + $0x1c0] sm:$0xff]
      %v834 = vld [vmem:[#allocation9 + $0x1c8] sm:$0xff]
      %v835 = vld [vmem:[#allocation9 + $0x1d0] sm:$0xff]
      %v836 = vld [vmem:[#allocation9 + $0x1d8] sm:$0xff]
      %v837 = vld [vmem:[#allocation9 + $0x1e0] sm:$0xff]
      %v838 = vld [vmem:[#allocation9 + $0x1e8] sm:$0xff]
      %v839 = vld [vmem:[#allocation9 + $0x1f0] sm:$0xff]
      %v840 = vld [vmem:[#allocation9 + $0x1f8] sm:$0xff]
      %v841 = vld [vmem:[#allocation9 + $0x200] sm:$0xff]
      %v842 = vld [vmem:[#allocation9 + $0x208] sm:$0xff]
      %v843 = vld [vmem:[#allocation9 + $0x210] sm:$0xff]
      %v844 = vld [vmem:[#allocation9 + $0x218] sm:$0xff]
      %v845 = vld [vmem:[#allocation9 + $0x220] sm:$0xff]
      %v846 = vld [vmem:[#allocation9 + $0x228] sm:$0xff]
      %v847 = vld [vmem:[#allocation9 + $0x230] sm:$0xff]
      %v848 = vld [vmem:[#allocation9 + $0x238] sm:$0xff]
      %v849 = vld [vmem:[#allocation9 + $0x240] sm:$0xff]
      %v850 = vld [vmem:[#allocation9 + $0x248] sm:$0xff]
      %v851 = vld [vmem:[#allocation9 + $0x250] sm:$0xff]
      %v852 = vld [vmem:[#allocation9 + $0x258] sm:$0xff]
      %v853 = vld [vmem:[#allocation9 + $0x260] sm:$0xff]
      %v854 = vld [vmem:[#allocation9 + $0x268] sm:$0xff]
      %v855 = vld [vmem:[#allocation9 + $0x270] sm:$0xff]
      %v856 = vld [vmem:[#allocation9 + $0x278] sm:$0xff]
      %v857 = vld [vmem:[#allocation9 + $0x280] sm:$0xff]
      %v858 = vld [vmem:[#allocation9 + $0x288] sm:$0xff]
      %v859 = vld [vmem:[#allocation9 + $0x290] sm:$0xff]
      %v860 = vld [vmem:[#allocation9 + $0x298] sm:$0xff]
      %v861 = vld [vmem:[#allocation9 + $0x2a0] sm:$0xff]
      %v862 = vld [vmem:[#allocation9 + $0x2a8] sm:$0xff]
      %v863 = vld [vmem:[#allocation9 + $0x2b0] sm:$0xff]
      %v864 = vld [vmem:[#allocation9 + $0x2b8] sm:$0xff]
      %v865 = vld [vmem:[#allocation9 + $0x2c0] sm:$0xff]
      %v866 = vld [vmem:[#allocation9 + $0x2c8] sm:$0xff]
      %v867 = vld [vmem:[#allocation9 + $0x2d0] sm:$0xff]
      %v868 = vld [vmem:[#allocation9 + $0x2d8] sm:$0xff]
      %v869 = vld [vmem:[#allocation9 + $0x2e0] sm:$0xff]
      %v870 = vld [vmem:[#allocation9 + $0x2e8] sm:$0xff]
      %v871 = vld [vmem:[#allocation9 + $0x2f0] sm:$0xff]
      %v872 = vld [vmem:[#allocation9 + $0x2f8] sm:$0xff]
      %v873 = vld [vmem:[#allocation9 + $0x300] sm:$0xff]
      %v874 = vld [vmem:[#allocation9 + $0x308] sm:$0xff]
      %v875 = vld [vmem:[#allocation9 + $0x310] sm:$0xff]
      %v876 = vld [vmem:[#allocation9 + $0x318] sm:$0xff]
      %v877 = vld [vmem:[#allocation9 + $0x320] sm:$0xff]
      %v878 = vld [vmem:[#allocation9 + $0x328] sm:$0xff]
      %v879 = vld [vmem:[#allocation9 + $0x330] sm:$0xff]
      %v880 = vld [vmem:[#allocation9 + $0x338] sm:$0xff]
      %v881 = vld [vmem:[#allocation9 + $0x340] sm:$0xff]
      %v882 = vld [vmem:[#allocation9 + $0x348] sm:$0xff]
      %v883 = vld [vmem:[#allocation9 + $0x350] sm:$0xff]
      %v884 = vld [vmem:[#allocation9 + $0x358] sm:$0xff]
      %v885 = vld [vmem:[#allocation9 + $0x360] sm:$0xff]
      %v886 = vld [vmem:[#allocation9 + $0x368] sm:$0xff]
      %v887 = vld [vmem:[#allocation9 + $0x370] sm:$0xff]
      %v888 = vld [vmem:[#allocation9 + $0x378] sm:$0xff]
      %v889 = vld [vmem:[#allocation9 + $0x380] sm:$0xff]
      %v890 = vld [vmem:[#allocation9 + $0x388] sm:$0xff]
      %v891 = vld [vmem:[#allocation9 + $0x390] sm:$0xff]
      %v892 = vld [vmem:[#allocation9 + $0x398] sm:$0xff]
      %v893 = vld [vmem:[#allocation9 + $0x3a0] sm:$0xff]
      %v894 = vld [vmem:[#allocation9 + $0x3a8] sm:$0xff]
      %v895 = vld [vmem:[#allocation9 + $0x3b0] sm:$0xff]
      %v896 = vld [vmem:[#allocation9 + $0x3b8] sm:$0xff]
      %v897 = vld [vmem:[#allocation9 + $0x3c0] sm:$0xff]
      %v898 = vld [vmem:[#allocation9 + $0x3c8] sm:$0xff]
      %v899 = vld [vmem:[#allocation9 + $0x3d0] sm:$0xff]
      %v900 = vld [vmem:[#allocation9 + $0x3d8] sm:$0xff]
      %v901 = vld [vmem:[#allocation9 + $0x3e0] sm:$0xff]
      %v902 = vld [vmem:[#allocation9 + $0x3e8] sm:$0xff]
      %v903 = vld [vmem:[#allocation9 + $0x3f0] sm:$0xff]
      %v904 = vld [vmem:[#allocation9 + $0x3f8] sm:$0xff]
      %v905 = vld [vmem:[#allocation9 + $0x400] sm:$0xff]
      %v906 = vld [vmem:[#allocation9 + $0x408] sm:$0xff]
      %v907 = vld [vmem:[#allocation9 + $0x410] sm:$0xff]
      %v908 = vld [vmem:[#allocation9 + $0x418] sm:$0xff]
      %v909 = vld [vmem:[#allocation9 + $0x420] sm:$0xff]
      %v910 = vld [vmem:[#allocation9 + $0x428] sm:$0xff]
      %v911 = vld [vmem:[#allocation9 + $0x430] sm:$0xff]
      %v912 = vld [vmem:[#allocation9 + $0x438] sm:$0xff]
      %v913 = vld [vmem:[#allocation9 + $0x440] sm:$0xff]
      %v914 = vld [vmem:[#allocation9 + $0x448] sm:$0xff]
      %v915 = vld [vmem:[#allocation9 + $0x450] sm:$0xff]
      %v916 = vld [vmem:[#allocation9 + $0x458] sm:$0xff]
      %v917 = vld [vmem:[#allocation9 + $0x460] sm:$0xff]
      %v918 = vld [vmem:[#allocation9 + $0x468] sm:$0xff]
      %v919 = vld [vmem:[#allocation9 + $0x470] sm:$0xff]
      %v920 = vld [vmem:[#allocation9 + $0x478] sm:$0xff]
      %v921 = vld [vmem:[#allocation9 + $0x480] sm:$0xff]
      %v922 = vld [vmem:[#allocation9 + $0x488] sm:$0xff]
      %v923 = vld [vmem:[#allocation9 + $0x490] sm:$0xff]
      %v924 = vld [vmem:[#allocation9 + $0x498] sm:$0xff]
      %v925 = vld [vmem:[#allocation9 + $0x4a0] sm:$0xff]
      %v926 = vld [vmem:[#allocation9 + $0x4a8] sm:$0xff]
      %v927 = vld [vmem:[#allocation9 + $0x4b0] sm:$0xff]
      %v928 = vld [vmem:[#allocation9 + $0x4b8] sm:$0xff]
      %v929 = vld [vmem:[#allocation9 + $0x4c0] sm:$0xff]
      %v930 = vld [vmem:[#allocation9 + $0x4c8] sm:$0xff]
      %v931 = vld [vmem:[#allocation9 + $0x4d0] sm:$0xff]
      %v932 = vld [vmem:[#allocation9 + $0x4d8] sm:$0xff]
      %v933 = vld [vmem:[#allocation9 + $0x4e0] sm:$0xff]
      %v934 = vld [vmem:[#allocation9 + $0x4e8] sm:$0xff]
      %v935 = vld [vmem:[#allocation9 + $0x4f0] sm:$0xff]
      %v936 = vld [vmem:[#allocation9 + $0x4f8] sm:$0xff]
      %v937 = vld [vmem:[#allocation9 + $0x500] sm:$0xff]
      %v938 = vld [vmem:[#allocation9 + $0x508] sm:$0xff]
      %v939 = vld [vmem:[#allocation9 + $0x510] sm:$0xff]
      %v940 = vld [vmem:[#allocation9 + $0x518] sm:$0xff]
      %v941 = vld [vmem:[#allocation9 + $0x520] sm:$0xff]
      %v942 = vld [vmem:[#allocation9 + $0x528] sm:$0xff]
      %v943 = vld [vmem:[#allocation9 + $0x530] sm:$0xff]
      %v944 = vld [vmem:[#allocation9 + $0x538] sm:$0xff]
      %v945 = vld [vmem:[#allocation9 + $0x540] sm:$0xff]
      %v946 = vld [vmem:[#allocation9 + $0x548] sm:$0xff]
      %v947 = vld [vmem:[#allocation9 + $0x550] sm:$0xff]
      %v948 = vld [vmem:[#allocation9 + $0x558] sm:$0xff]
      %v949 = vld [vmem:[#allocation9 + $0x560] sm:$0xff]
      %v950 = vld [vmem:[#allocation9 + $0x568] sm:$0xff]
      %v951 = vld [vmem:[#allocation9 + $0x570] sm:$0xff]
      %v952 = vld [vmem:[#allocation9 + $0x578] sm:$0xff]
      %v953 = vld [vmem:[#allocation9 + $0x580] sm:$0xff]
      %v954 = vld [vmem:[#allocation9 + $0x588] sm:$0xff]
      %v955 = vld [vmem:[#allocation9 + $0x590] sm:$0xff]
      %v956 = vld [vmem:[#allocation9 + $0x598] sm:$0xff]
      %v957 = vld [vmem:[#allocation9 + $0x5a0] sm:$0xff]
      %v958 = vld [vmem:[#allocation9 + $0x5a8] sm:$0xff]
      %v959 = vld [vmem:[#allocation9 + $0x5b0] sm:$0xff]
      %v960 = vld [vmem:[#allocation9 + $0x5b8] sm:$0xff]
      %v961 = vld [vmem:[#allocation9 + $0x5c0] sm:$0xff]
      %v962 = vld [vmem:[#allocation9 + $0x5c8] sm:$0xff]
      %v963 = vld [vmem:[#allocation9 + $0x5d0] sm:$0xff]
      %v964 = vld [vmem:[#allocation9 + $0x5d8] sm:$0xff]
      %v965 = vld [vmem:[#allocation9 + $0x5e0] sm:$0xff]
      %v966 = vld [vmem:[#allocation9 + $0x5e8] sm:$0xff]
      %v967 = vld [vmem:[#allocation9 + $0x5f0] sm:$0xff]
      %v968 = vld [vmem:[#allocation9 + $0x5f8] sm:$0xff]
      %v969 = vld [vmem:[#allocation9 + $0x600] sm:$0xff]
      %v970 = vld [vmem:[#allocation9 + $0x608] sm:$0xff]
      %v971 = vld [vmem:[#allocation9 + $0x610] sm:$0xff]
      %v972 = vld [vmem:[#allocation9 + $0x618] sm:$0xff]
      %v973 = vld [vmem:[#allocation9 + $0x620] sm:$0xff]
      %v974 = vld [vmem:[#allocation9 + $0x628] sm:$0xff]
      %v975 = vld [vmem:[#allocation9 + $0x630] sm:$0xff]
      %v976 = vld [vmem:[#allocation9 + $0x638] sm:$0xff]
      %v977 = vld [vmem:[#allocation9 + $0x640] sm:$0xff]
      %v978 = vld [vmem:[#allocation9 + $0x648] sm:$0xff]
      %v979 = vld [vmem:[#allocation9 + $0x650] sm:$0xff]
      %v980 = vld [vmem:[#allocation9 + $0x658] sm:$0xff]
      %v981 = vld [vmem:[#allocation9 + $0x660] sm:$0xff]
      %v982 = vld [vmem:[#allocation9 + $0x668] sm:$0xff]
      %v983 = vld [vmem:[#allocation9 + $0x670] sm:$0xff]
      %v984 = vld [vmem:[#allocation9 + $0x678] sm:$0xff]
      %v985 = vld [vmem:[#allocation9 + $0x680] sm:$0xff]
      %v986 = vld [vmem:[#allocation9 + $0x688] sm:$0xff]
      %v987 = vld [vmem:[#allocation9 + $0x690] sm:$0xff]
      %v988 = vld [vmem:[#allocation9 + $0x698] sm:$0xff]
      %v989 = vld [vmem:[#allocation9 + $0x6a0] sm:$0xff]
      %v990 = vld [vmem:[#allocation9 + $0x6a8] sm:$0xff]
      %v991 = vld [vmem:[#allocation9 + $0x6b0] sm:$0xff]
      %v992 = vld [vmem:[#allocation9 + $0x6b8] sm:$0xff]
      %v993 = vld [vmem:[#allocation9 + $0x6c0] sm:$0xff]
      %v994 = vld [vmem:[#allocation9 + $0x6c8] sm:$0xff]
      %v995 = vld [vmem:[#allocation9 + $0x6d0] sm:$0xff]
      %v996 = vld [vmem:[#allocation9 + $0x6d8] sm:$0xff]
      %v997 = vld [vmem:[#allocation9 + $0x6e0] sm:$0xff]
      %v998 = vld [vmem:[#allocation9 + $0x6e8] sm:$0xff]
      %v999 = vld [vmem:[#allocation9 + $0x6f0] sm:$0xff]
      %v1000 = vld [vmem:[#allocation9 + $0x6f8] sm:$0xff]
      %v1001 = vld [vmem:[#allocation9 + $0x700] sm:$0xff]
      %v1002 = vld [vmem:[#allocation9 + $0x708] sm:$0xff]
      %v1003 = vld [vmem:[#allocation9 + $0x710] sm:$0xff]
      %v1004 = vld [vmem:[#allocation9 + $0x718] sm:$0xff]
      %v1005 = vld [vmem:[#allocation9 + $0x720] sm:$0xff]
      %v1006 = vld [vmem:[#allocation9 + $0x728] sm:$0xff]
      %v1007 = vld [vmem:[#allocation9 + $0x730] sm:$0xff]
      %v1008 = vld [vmem:[#allocation9 + $0x738] sm:$0xff]
      %v1009 = vld [vmem:[#allocation9 + $0x740] sm:$0xff]
      %v1010 = vld [vmem:[#allocation9 + $0x748] sm:$0xff]
      %v1011 = vld [vmem:[#allocation9 + $0x750] sm:$0xff]
      %v1012 = vld [vmem:[#allocation9 + $0x758] sm:$0xff]
      %v1013 = vld [vmem:[#allocation9 + $0x760] sm:$0xff]
      %v1014 = vld [vmem:[#allocation9 + $0x768] sm:$0xff]
      %v1015 = vld [vmem:[#allocation9 + $0x770] sm:$0xff]
      %v1016 = vld [vmem:[#allocation9 + $0x778] sm:$0xff]
      %v1017 = vld [vmem:[#allocation9 + $0x780] sm:$0xff]
      %v1018 = vld [vmem:[#allocation9 + $0x788] sm:$0xff]
      %v1019 = vld [vmem:[#allocation9 + $0x790] sm:$0xff]
      %v1020 = vld [vmem:[#allocation9 + $0x798] sm:$0xff]
      %v1021 = vld [vmem:[#allocation9 + $0x7a0] sm:$0xff]
      %v1022 = vld [vmem:[#allocation9 + $0x7a8] sm:$0xff]
      %v1023 = vld [vmem:[#allocation9 + $0x7b0] sm:$0xff]
      %v1024 = vld [vmem:[#allocation9 + $0x7b8] sm:$0xff]
      %v1025 = vld [vmem:[#allocation9 + $0x7c0] sm:$0xff]
      %v1026 = vld [vmem:[#allocation9 + $0x7c8] sm:$0xff]
      %v1027 = vld [vmem:[#allocation9 + $0x7d0] sm:$0xff]
      %v1028 = vld [vmem:[#allocation9 + $0x7d8] sm:$0xff]
      %v1029 = vld [vmem:[#allocation9 + $0x7e0] sm:$0xff]
      %v1030 = vld [vmem:[#allocation9 + $0x7e8] sm:$0xff]
      %v1031 = vld [vmem:[#allocation9 + $0x7f0] sm:$0xff]
      %v1032 = vld [vmem:[#allocation9 + $0x7f8] sm:$0xff]
      %v1033 = vld [vmem:[#allocation9 + $0x800] sm:$0xff]
      %v1034 = vld [vmem:[#allocation9 + $0x808] sm:$0xff]
      %v1035 = vld [vmem:[#allocation9 + $0x810] sm:$0xff]
      %v1036 = vld [vmem:[#allocation9 + $0x818] sm:$0xff]
      %v1037 = vld [vmem:[#allocation9 + $0x820] sm:$0xff]
      %v1038 = vld [vmem:[#allocation9 + $0x828] sm:$0xff]
      %v1039 = vld [vmem:[#allocation9 + $0x830] sm:$0xff]
      %v1040 = vld [vmem:[#allocation9 + $0x838] sm:$0xff]
      %v1041 = vld [vmem:[#allocation9 + $0x840] sm:$0xff]
      %v1042 = vld [vmem:[#allocation9 + $0x848] sm:$0xff]
      %v1043 = vld [vmem:[#allocation9 + $0x850] sm:$0xff]
      %v1044 = vld [vmem:[#allocation9 + $0x858] sm:$0xff]
      %v1045 = vld [vmem:[#allocation9 + $0x860] sm:$0xff]
      %v1046 = vld [vmem:[#allocation9 + $0x868] sm:$0xff]
      %v1047 = vld [vmem:[#allocation9 + $0x870] sm:$0xff]
      %v1048 = vld [vmem:[#allocation9 + $0x878] sm:$0xff]
      %v1049 = vld [vmem:[#allocation9 + $0x880] sm:$0xff]
      %v1050 = vld [vmem:[#allocation9 + $0x888] sm:$0xff]
      %v1051 = vld [vmem:[#allocation9 + $0x890] sm:$0xff]
      %v1052 = vld [vmem:[#allocation9 + $0x898] sm:$0xff]
      %v1053 = vld [vmem:[#allocation9 + $0x8a0] sm:$0xff]
      %v1054 = vld [vmem:[#allocation9 + $0x8a8] sm:$0xff]
      %v1055 = vld [vmem:[#allocation9 + $0x8b0] sm:$0xff]
      %v1056 = vld [vmem:[#allocation9 + $0x8b8] sm:$0xff]
      %v1057 = vld [vmem:[#allocation9 + $0x8c0] sm:$0xff]
      %v1058 = vld [vmem:[#allocation9 + $0x8c8] sm:$0xff]
      %v1059 = vld [vmem:[#allocation9 + $0x8d0] sm:$0xff]
      %v1060 = vld [vmem:[#allocation9 + $0x8d8] sm:$0xff]
      %v1061 = vld [vmem:[#allocation9 + $0x8e0] sm:$0xff]
      %v1062 = vld [vmem:[#allocation9 + $0x8e8] sm:$0xff]
      %v1063 = vld [vmem:[#allocation9 + $0x8f0] sm:$0xff]
      %v1064 = vld [vmem:[#allocation9 + $0x8f8] sm:$0xff]
      %v1065 = vld [vmem:[#allocation9 + $0x900] sm:$0xff]
      %v1066 = vld [vmem:[#allocation9 + $0x908] sm:$0xff]
      %v1067 = vld [vmem:[#allocation9 + $0x910] sm:$0xff]
      %v1068 = vld [vmem:[#allocation9 + $0x918] sm:$0xff]
      %v1069 = vld [vmem:[#allocation9 + $0x920] sm:$0xff]
      %v1070 = vld [vmem:[#allocation9 + $0x928] sm:$0xff]
      %v1071 = vld [vmem:[#allocation9 + $0x930] sm:$0xff]
      %v1072 = vld [vmem:[#allocation9 + $0x938] sm:$0xff]
      %v1073 = vld [vmem:[#allocation9 + $0x940] sm:$0xff]
      %v1074 = vld [vmem:[#allocation9 + $0x948] sm:$0xff]
      %v1075 = vld [vmem:[#allocation9 + $0x950] sm:$0xff]
      %v1076 = vld [vmem:[#allocation9 + $0x958] sm:$0xff]
      %v1077 = vld [vmem:[#allocation9 + $0x960] sm:$0xff]
      %v1078 = vld [vmem:[#allocation9 + $0x968] sm:$0xff]
      %v1079 = vld [vmem:[#allocation9 + $0x970] sm:$0xff]
      %v1080 = vld [vmem:[#allocation9 + $0x978] sm:$0xff]
      %v1081 = vld [vmem:[#allocation9 + $0x980] sm:$0xff]
      %v1082 = vld [vmem:[#allocation9 + $0x988] sm:$0xff]
      %v1083 = vld [vmem:[#allocation9 + $0x990] sm:$0xff]
      %v1084 = vld [vmem:[#allocation9 + $0x998] sm:$0xff]
      %v1085 = vld [vmem:[#allocation9 + $0x9a0] sm:$0xff]
      %v1086 = vld [vmem:[#allocation9 + $0x9a8] sm:$0xff]
      %v1087 = vld [vmem:[#allocation9 + $0x9b0] sm:$0xff]
      %v1088 = vld [vmem:[#allocation9 + $0x9b8] sm:$0xff]
      %v1089 = vld [vmem:[#allocation9 + $0x9c0] sm:$0xff]
      %v1090 = vld [vmem:[#allocation9 + $0x9c8] sm:$0xff]
      %v1091 = vld [vmem:[#allocation9 + $0x9d0] sm:$0xff]
      %v1092 = vld [vmem:[#allocation9 + $0x9d8] sm:$0xff]
      %v1093 = vld [vmem:[#allocation9 + $0x9e0] sm:$0xff]
      %v1094 = vld [vmem:[#allocation9 + $0x9e8] sm:$0xff]
      %v1095 = vld [vmem:[#allocation9 + $0x9f0] sm:$0xff]
      %v1096 = vld [vmem:[#allocation9 + $0x9f8] sm:$0xff]
      %v1097 = vld [vmem:[#allocation9 + $0xa00] sm:$0xff]
      %v1098 = vld [vmem:[#allocation9 + $0xa08] sm:$0xff]
      %v1099 = vld [vmem:[#allocation9 + $0xa10] sm:$0xff]
      %v1100 = vld [vmem:[#allocation9 + $0xa18] sm:$0xff]
      %v1101 = vld [vmem:[#allocation9 + $0xa20] sm:$0xff]
      %v1102 = vld [vmem:[#allocation9 + $0xa28] sm:$0xff]
      %v1103 = vld [vmem:[#allocation9 + $0xa30] sm:$0xff]
      %v1104 = vld [vmem:[#allocation9 + $0xa38] sm:$0xff]
      %v1105 = vld [vmem:[#allocation9 + $0xa40] sm:$0xff]
      %v1106 = vld [vmem:[#allocation9 + $0xa48] sm:$0xff]
      %v1107 = vld [vmem:[#allocation9 + $0xa50] sm:$0xff]
      %v1108 = vld [vmem:[#allocation9 + $0xa58] sm:$0xff]
      %v1109 = vld [vmem:[#allocation9 + $0xa60] sm:$0xff]
      %v1110 = vld [vmem:[#allocation9 + $0xa68] sm:$0xff]
      %v1111 = vld [vmem:[#allocation9 + $0xa70] sm:$0xff]
      %v1112 = vld [vmem:[#allocation9 + $0xa78] sm:$0xff]
      %v1113 = vld [vmem:[#allocation9 + $0xa80] sm:$0xff]
      %v1114 = vld [vmem:[#allocation9 + $0xa88] sm:$0xff]
      %v1115 = vld [vmem:[#allocation9 + $0xa90] sm:$0xff]
      %v1116 = vld [vmem:[#allocation9 + $0xa98] sm:$0xff]
      %v1117 = vld [vmem:[#allocation9 + $0xaa0] sm:$0xff]
      %v1118 = vld [vmem:[#allocation9 + $0xaa8] sm:$0xff]
      %v1119 = vld [vmem:[#allocation9 + $0xab0] sm:$0xff]
      %v1120 = vld [vmem:[#allocation9 + $0xab8] sm:$0xff]
      %v1121 = vld [vmem:[#allocation9 + $0xac0] sm:$0xff]
      %v1122 = vld [vmem:[#allocation9 + $0xac8] sm:$0xff]
      %v1123 = vld [vmem:[#allocation9 + $0xad0] sm:$0xff]
      %v1124 = vld [vmem:[#allocation9 + $0xad8] sm:$0xff]
      %v1125 = vld [vmem:[#allocation9 + $0xae0] sm:$0xff]
      %v1126 = vld [vmem:[#allocation9 + $0xae8] sm:$0xff]
      %v1127 = vld [vmem:[#allocation9 + $0xaf0] sm:$0xff]
      %v1128 = vld [vmem:[#allocation9 + $0xaf8] sm:$0xff]
      %v1129 = vld [vmem:[#allocation9 + $0xb00] sm:$0xff]
      %v1130 = vld [vmem:[#allocation9 + $0xb08] sm:$0xff]
      %v1131 = vld [vmem:[#allocation9 + $0xb10] sm:$0xff]
      %v1132 = vld [vmem:[#allocation9 + $0xb18] sm:$0xff]
      %v1133 = vld [vmem:[#allocation9 + $0xb20] sm:$0xff]
      %v1134 = vld [vmem:[#allocation9 + $0xb28] sm:$0xff]
      %v1135 = vld [vmem:[#allocation9 + $0xb30] sm:$0xff]
      %v1136 = vld [vmem:[#allocation9 + $0xb38] sm:$0xff]
      %v1137 = vld [vmem:[#allocation9 + $0xb40] sm:$0xff]
      %v1138 = vld [vmem:[#allocation9 + $0xb48] sm:$0xff]
      %v1139 = vld [vmem:[#allocation9 + $0xb50] sm:$0xff]
      %v1140 = vld [vmem:[#allocation9 + $0xb58] sm:$0xff]
      %v1141 = vld [vmem:[#allocation9 + $0xb60] sm:$0xff]
      %v1142 = vld [vmem:[#allocation9 + $0xb68] sm:$0xff]
      %v1143 = vld [vmem:[#allocation9 + $0xb70] sm:$0xff]
      %v1144 = vld [vmem:[#allocation9 + $0xb78] sm:$0xff]
      %v1145 = vld [vmem:[#allocation9 + $0xb80] sm:$0xff]
      %v1146 = vld [vmem:[#allocation9 + $0xb88] sm:$0xff]
      %v1147 = vld [vmem:[#allocation9 + $0xb90] sm:$0xff]
      %v1148 = vld [vmem:[#allocation9 + $0xb98] sm:$0xff]
      %v1149 = vld [vmem:[#allocation9 + $0xba0] sm:$0xff]
      %v1150 = vld [vmem:[#allocation9 + $0xba8] sm:$0xff]
      %v1151 = vld [vmem:[#allocation9 + $0xbb0] sm:$0xff]
      %v1152 = vld [vmem:[#allocation9 + $0xbb8] sm:$0xff]
      %v1153 = vld [vmem:[#allocation9 + $0xbc0] sm:$0xff]
      %v1154 = vld [vmem:[#allocation9 + $0xbc8] sm:$0xff]
      %v1155 = vld [vmem:[#allocation9 + $0xbd0] sm:$0xff]
      %v1156 = vld [vmem:[#allocation9 + $0xbd8] sm:$0xff]
      %v1157 = vld [vmem:[#allocation9 + $0xbe0] sm:$0xff]
      %v1158 = vld [vmem:[#allocation9 + $0xbe8] sm:$0xff]
      %v1159 = vld [vmem:[#allocation9 + $0xbf0] sm:$0xff]
      %v1160 = vld [vmem:[#allocation9 + $0xbf8] sm:$0xff]
      %v1161 = vld [vmem:[#allocation9 + $0xc00] sm:$0xff]
      %v1162 = vld [vmem:[#allocation9 + $0xc08] sm:$0xff]
      %v1163 = vld [vmem:[#allocation9 + $0xc10] sm:$0xff]
      %v1164 = vld [vmem:[#allocation9 + $0xc18] sm:$0xff]
      %v1165 = vld [vmem:[#allocation9 + $0xc20] sm:$0xff]
      %v1166 = vld [vmem:[#allocation9 + $0xc28] sm:$0xff]
      %v1167 = vld [vmem:[#allocation9 + $0xc30] sm:$0xff]
      %v1168 = vld [vmem:[#allocation9 + $0xc38] sm:$0xff]
      %v1169 = vld [vmem:[#allocation9 + $0xc40] sm:$0xff]
      %v1170 = vld [vmem:[#allocation9 + $0xc48] sm:$0xff]
      %v1171 = vld [vmem:[#allocation9 + $0xc50] sm:$0xff]
      %v1172 = vld [vmem:[#allocation9 + $0xc58] sm:$0xff]
      %v1173 = vld [vmem:[#allocation9 + $0xc60] sm:$0xff]
      %v1174 = vld [vmem:[#allocation9 + $0xc68] sm:$0xff]
      %v1175 = vld [vmem:[#allocation9 + $0xc70] sm:$0xff]
      %v1176 = vld [vmem:[#allocation9 + $0xc78] sm:$0xff]
      %v1177 = vld [vmem:[#allocation9 + $0xc80] sm:$0xff]
      %v1178 = vld [vmem:[#allocation9 + $0xc88] sm:$0xff]
      %v1179 = vld [vmem:[#allocation9 + $0xc90] sm:$0xff]
      %v1180 = vld [vmem:[#allocation9 + $0xc98] sm:$0xff]
      %v1181 = vld [vmem:[#allocation9 + $0xca0] sm:$0xff]
      %v1182 = vld [vmem:[#allocation9 + $0xca8] sm:$0xff]
      %v1183 = vld [vmem:[#allocation9 + $0xcb0] sm:$0xff]
      %v1184 = vld [vmem:[#allocation9 + $0xcb8] sm:$0xff]
      %v1185 = vld [vmem:[#allocation9 + $0xcc0] sm:$0xff]
      %v1186 = vld [vmem:[#allocation9 + $0xcc8] sm:$0xff]
      %v1187 = vld [vmem:[#allocation9 + $0xcd0] sm:$0xff]
      %v1188 = vld [vmem:[#allocation9 + $0xcd8] sm:$0xff]
      %v1189 = vld [vmem:[#allocation9 + $0xce0] sm:$0xff]
      %v1190 = vld [vmem:[#allocation9 + $0xce8] sm:$0xff]
      %v1191 = vld [vmem:[#allocation9 + $0xcf0] sm:$0xff]
      %v1192 = vld [vmem:[#allocation9 + $0xcf8] sm:$0xff]
      %v1193 = vld [vmem:[#allocation9 + $0xd00] sm:$0xff]
      %v1194 = vld [vmem:[#allocation9 + $0xd08] sm:$0xff]
      %v1195 = vld [vmem:[#allocation9 + $0xd10] sm:$0xff]
      %v1196 = vld [vmem:[#allocation9 + $0xd18] sm:$0xff]
      %v1197 = vld [vmem:[#allocation9 + $0xd20] sm:$0xff]
      %v1198 = vld [vmem:[#allocation9 + $0xd28] sm:$0xff]
      %v1199 = vld [vmem:[#allocation9 + $0xd30] sm:$0xff]
      %v1200 = vld [vmem:[#allocation9 + $0xd38] sm:$0xff]
      %v1201 = vld [vmem:[#allocation9 + $0xd40] sm:$0xff]
      %v1202 = vld [vmem:[#allocation9 + $0xd48] sm:$0xff]
      %v1203 = vld [vmem:[#allocation9 + $0xd50] sm:$0xff]
      %v1204 = vld [vmem:[#allocation9 + $0xd58] sm:$0xff]
      %v1205 = vld [vmem:[#allocation9 + $0xd60] sm:$0xff]
      %v1206 = vld [vmem:[#allocation9 + $0xd68] sm:$0xff]
      %v1207 = vld [vmem:[#allocation9 + $0xd70] sm:$0xff]
      %v1208 = vld [vmem:[#allocation9 + $0xd78] sm:$0xff]
      %v1209 = vld [vmem:[#allocation9 + $0xd80] sm:$0xff]
      %v1210 = vld [vmem:[#allocation9 + $0xd88] sm:$0xff]
      %v1211 = vld [vmem:[#allocation9 + $0xd90] sm:$0xff]
      %v1212 = vld [vmem:[#allocation9 + $0xd98] sm:$0xff]
      %v1213 = vld [vmem:[#allocation9 + $0xda0] sm:$0xff]
      %v1214 = vld [vmem:[#allocation9 + $0xda8] sm:$0xff]
      %v1215 = vld [vmem:[#allocation9 + $0xdb0] sm:$0xff]
      %v1216 = vld [vmem:[#allocation9 + $0xdb8] sm:$0xff]
      %v1217 = vld [vmem:[#allocation9 + $0xdc0] sm:$0xff]
      %v1218 = vld [vmem:[#allocation9 + $0xdc8] sm:$0xff]
      %v1219 = vld [vmem:[#allocation9 + $0xdd0] sm:$0xff]
      %v1220 = vld [vmem:[#allocation9 + $0xdd8] sm:$0xff]
      %v1221 = vld [vmem:[#allocation9 + $0xde0] sm:$0xff]
      %v1222 = vld [vmem:[#allocation9 + $0xde8] sm:$0xff]
      %v1223 = vld [vmem:[#allocation9 + $0xdf0] sm:$0xff]
      %v1224 = vld [vmem:[#allocation9 + $0xdf8] sm:$0xff]
      %v1225 = vld [vmem:[#allocation9 + $0xe00] sm:$0xff]
      %v1226 = vld [vmem:[#allocation9 + $0xe08] sm:$0xff]
      %v1227 = vld [vmem:[#allocation9 + $0xe10] sm:$0xff]
      %v1228 = vld [vmem:[#allocation9 + $0xe18] sm:$0xff]
      %v1229 = vld [vmem:[#allocation9 + $0xe20] sm:$0xff]
      %v1230 = vld [vmem:[#allocation9 + $0xe28] sm:$0xff]
      %v1231 = vld [vmem:[#allocation9 + $0xe30] sm:$0xff]
      %v1232 = vld [vmem:[#allocation9 + $0xe38] sm:$0xff]
      %v1233 = vld [vmem:[#allocation9 + $0xe40] sm:$0xff]
      %v1234 = vld [vmem:[#allocation9 + $0xe48] sm:$0xff]
      %v1235 = vld [vmem:[#allocation9 + $0xe50] sm:$0xff]
      %v1236 = vld [vmem:[#allocation9 + $0xe58] sm:$0xff]
      %v1237 = vld [vmem:[#allocation9 + $0xe60] sm:$0xff]
      %v1238 = vld [vmem:[#allocation9 + $0xe68] sm:$0xff]
      %v1239 = vld [vmem:[#allocation9 + $0xe70] sm:$0xff]
      %v1240 = vld [vmem:[#allocation9 + $0xe78] sm:$0xff]
      %v1241 = vld [vmem:[#allocation9 + $0xe80] sm:$0xff]
      %v1242 = vld [vmem:[#allocation9 + $0xe88] sm:$0xff]
      %v1243 = vld [vmem:[#allocation9 + $0xe90] sm:$0xff]
      %v1244 = vld [vmem:[#allocation9 + $0xe98] sm:$0xff]
      %v1245 = vld [vmem:[#allocation9 + $0xea0] sm:$0xff]
      %v1246 = vld [vmem:[#allocation9 + $0xea8] sm:$0xff]
      %v1247 = vld [vmem:[#allocation9 + $0xeb0] sm:$0xff]
      %v1248 = vld [vmem:[#allocation9 + $0xeb8] sm:$0xff]
      %v1249 = vld [vmem:[#allocation9 + $0xec0] sm:$0xff]
      %v1250 = vld [vmem:[#allocation9 + $0xec8] sm:$0xff]
      %v1251 = vld [vmem:[#allocation9 + $0xed0] sm:$0xff]
      %v1252 = vld [vmem:[#allocation9 + $0xed8] sm:$0xff]
      %v1253 = vld [vmem:[#allocation9 + $0xee0] sm:$0xff]
      %v1254 = vld [vmem:[#allocation9 + $0xee8] sm:$0xff]
      %v1255 = vld [vmem:[#allocation9 + $0xef0] sm:$0xff]
      %v1256 = vld [vmem:[#allocation9 + $0xef8] sm:$0xff]
      %v1257 = vld [vmem:[#allocation9 + $0xf00] sm:$0xff]
      %v1258 = vld [vmem:[#allocation9 + $0xf08] sm:$0xff]
      %v1259 = vld [vmem:[#allocation9 + $0xf10] sm:$0xff]
      %v1260 = vld [vmem:[#allocation9 + $0xf18] sm:$0xff]
      %v1261 = vld [vmem:[#allocation9 + $0xf20] sm:$0xff]
      %v1262 = vld [vmem:[#allocation9 + $0xf28] sm:$0xff]
      %v1263 = vld [vmem:[#allocation9 + $0xf30] sm:$0xff]
      %v1264 = vld [vmem:[#allocation9 + $0xf38] sm:$0xff]
      %v1265 = vld [vmem:[#allocation9 + $0xf40] sm:$0xff]
      %v1266 = vld [vmem:[#allocation9 + $0xf48] sm:$0xff]
      %v1267 = vld [vmem:[#allocation9 + $0xf50] sm:$0xff]
      %v1268 = vld [vmem:[#allocation9 + $0xf58] sm:$0xff]
      %v1269 = vld [vmem:[#allocation9 + $0xf60] sm:$0xff]
      %v1270 = vld [vmem:[#allocation9 + $0xf68] sm:$0xff]
      %v1271 = vld [vmem:[#allocation9 + $0xf70] sm:$0xff]
      %v1272 = vld [vmem:[#allocation9 + $0xf78] sm:$0xff]
      %v1273 = vld [vmem:[#allocation9 + $0xf80] sm:$0xff]
      %v1274 = vld [vmem:[#allocation9 + $0xf88] sm:$0xff]
      %v1275 = vld [vmem:[#allocation9 + $0xf90] sm:$0xff]
      %v1276 = vld [vmem:[#allocation9 + $0xf98] sm:$0xff]
      %v1277 = vld [vmem:[#allocation9 + $0xfa0] sm:$0xff]
      %v1278 = vld [vmem:[#allocation9 + $0xfa8] sm:$0xff]
      %v1279 = vld [vmem:[#allocation9 + $0xfb0] sm:$0xff]
      %v1280 = vld [vmem:[#allocation9 + $0xfb8] sm:$0xff]
      %v1281 = vld [vmem:[#allocation9 + $0xfc0] sm:$0xff]
      %v1282 = vld [vmem:[#allocation9 + $0xfc8] sm:$0xff]
      %v1283 = vld [vmem:[#allocation9 + $0xfd0] sm:$0xff]
      %v1284 = vld [vmem:[#allocation9 + $0xfd8] sm:$0xff]
      %v1285 = vld [vmem:[#allocation9 + $0xfe0] sm:$0xff]
      %v1286 = vld [vmem:[#allocation9 + $0xfe8] sm:$0xff]
      %v1287 = vld [vmem:[#allocation9 + $0xff0] sm:$0xff]
      %v1288 = vld [vmem:[#allocation9 + $0xff8] sm:$0xff]
      %v1289 = vld [vmem:[#allocation9 + $0x1000] sm:$0xff]
      %v1290 = vld [vmem:[#allocation9 + $0x1008] sm:$0xff]
      %v1291 = vld [vmem:[#allocation9 + $0x1010] sm:$0xff]
      %v1292 = vld [vmem:[#allocation9 + $0x1018] sm:$0xff]
      %v1293 = vld [vmem:[#allocation9 + $0x1020] sm:$0xff]
      %v1294 = vld [vmem:[#allocation9 + $0x1028] sm:$0xff]
      %v1295 = vld [vmem:[#allocation9 + $0x1030] sm:$0xff]
      %v1296 = vld [vmem:[#allocation9 + $0x1038] sm:$0xff]
      %v1297 = vld [vmem:[#allocation9 + $0x1040] sm:$0xff]
      %v1298 = vld [vmem:[#allocation9 + $0x1048] sm:$0xff]
      %v1299 = vld [vmem:[#allocation9 + $0x1050] sm:$0xff]
      %v1300 = vld [vmem:[#allocation9 + $0x1058] sm:$0xff]
      %v1301 = vld [vmem:[#allocation9 + $0x1060] sm:$0xff]
      %v1302 = vld [vmem:[#allocation9 + $0x1068] sm:$0xff]
      %v1303 = vld [vmem:[#allocation9 + $0x1070] sm:$0xff]
      %v1304 = vld [vmem:[#allocation9 + $0x1078] sm:$0xff]
      %v1305 = vld [vmem:[#allocation9 + $0x1080] sm:$0xff]
      %v1306 = vld [vmem:[#allocation9 + $0x1088] sm:$0xff]
      %v1307 = vld [vmem:[#allocation9 + $0x1090] sm:$0xff]
      %v1308 = vld [vmem:[#allocation9 + $0x1098] sm:$0xff]
      %v1309 = vld [vmem:[#allocation9 + $0x10a0] sm:$0xff]
      %v1310 = vld [vmem:[#allocation9 + $0x10a8] sm:$0xff]
      %v1311 = vld [vmem:[#allocation9 + $0x10b0] sm:$0xff]
      %v1312 = vld [vmem:[#allocation9 + $0x10b8] sm:$0xff]
      %v1313 = vld [vmem:[#allocation9 + $0x10c0] sm:$0xff]
      %v1314 = vld [vmem:[#allocation9 + $0x10c8] sm:$0xff]
      %v1315 = vld [vmem:[#allocation9 + $0x10d0] sm:$0xff]
      %v1316 = vld [vmem:[#allocation9 + $0x10d8] sm:$0xff]
      %v1317 = vld [vmem:[#allocation9 + $0x10e0] sm:$0xff]
      %v1318 = vld [vmem:[#allocation9 + $0x10e8] sm:$0xff]
      %v1319 = vld [vmem:[#allocation9 + $0x10f0] sm:$0xff]
      %v1320 = vld [vmem:[#allocation9 + $0x10f8] sm:$0xff]
      %v1321 = vld [vmem:[#allocation9 + $0x1100] sm:$0xff]
      %v1322 = vld [vmem:[#allocation9 + $0x1108] sm:$0xff]
      %v1323 = vld [vmem:[#allocation9 + $0x1110] sm:$0xff]
      %v1324 = vld [vmem:[#allocation9 + $0x1118] sm:$0xff]
      %v1325 = vld [vmem:[#allocation9 + $0x1120] sm:$0xff]
      %v1326 = vld [vmem:[#allocation9 + $0x1128] sm:$0xff]
      %v1327 = vld [vmem:[#allocation9 + $0x1130] sm:$0xff]
      %v1328 = vld [vmem:[#allocation9 + $0x1138] sm:$0xff]
      %v1329 = vld [vmem:[#allocation9 + $0x1140] sm:$0xff]
      %v1330 = vld [vmem:[#allocation9 + $0x1148] sm:$0xff]
      %v1331 = vld [vmem:[#allocation9 + $0x1150] sm:$0xff]
      %v1332 = vld [vmem:[#allocation9 + $0x1158] sm:$0xff]
      %v1333 = vld [vmem:[#allocation9 + $0x1160] sm:$0xff]
      %v1334 = vld [vmem:[#allocation9 + $0x1168] sm:$0xff]
      %v1335 = vld [vmem:[#allocation9 + $0x1170] sm:$0xff]
      %v1336 = vld [vmem:[#allocation9 + $0x1178] sm:$0xff]
      %v1337 = vld [vmem:[#allocation9 + $0x1180] sm:$0xff]
      %v1338 = vld [vmem:[#allocation9 + $0x1188] sm:$0xff]
      %v1339 = vld [vmem:[#allocation9 + $0x1190] sm:$0xff]
      %v1340 = vld [vmem:[#allocation9 + $0x1198] sm:$0xff]
      %v1341 = vld [vmem:[#allocation9 + $0x11a0] sm:$0xff]
      %v1342 = vld [vmem:[#allocation9 + $0x11a8] sm:$0xff]
      %v1343 = vld [vmem:[#allocation9 + $0x11b0] sm:$0xff]
      %v1344 = vld [vmem:[#allocation9 + $0x11b8] sm:$0xff]
      %v1345 = vld [vmem:[#allocation9 + $0x11c0] sm:$0xff]
      %v1346 = vld [vmem:[#allocation9 + $0x11c8] sm:$0xff]
      %v1347 = vld [vmem:[#allocation9 + $0x11d0] sm:$0xff]
      %v1348 = vld [vmem:[#allocation9 + $0x11d8] sm:$0xff]
      %v1349 = vld [vmem:[#allocation9 + $0x11e0] sm:$0xff]
      %v1350 = vld [vmem:[#allocation9 + $0x11e8] sm:$0xff]
      %v1351 = vld [vmem:[#allocation9 + $0x11f0] sm:$0xff]
      %v1352 = vld [vmem:[#allocation9 + $0x11f8] sm:$0xff]
      %v1353 = vld [vmem:[#allocation9 + $0x1200] sm:$0xff]
      %v1354 = vld [vmem:[#allocation9 + $0x1208] sm:$0xff]
      %v1355 = vld [vmem:[#allocation9 + $0x1210] sm:$0xff]
      %v1356 = vld [vmem:[#allocation9 + $0x1218] sm:$0xff]
      %v1357 = vld [vmem:[#allocation9 + $0x1220] sm:$0xff]
      %v1358 = vld [vmem:[#allocation9 + $0x1228] sm:$0xff]
      %v1359 = vld [vmem:[#allocation9 + $0x1230] sm:$0xff]
      %v1360 = vld [vmem:[#allocation9 + $0x1238] sm:$0xff]
      %v1361 = vld [vmem:[#allocation9 + $0x1240] sm:$0xff]
      %v1362 = vld [vmem:[#allocation9 + $0x1248] sm:$0xff]
      %v1363 = vld [vmem:[#allocation9 + $0x1250] sm:$0xff]
      %v1364 = vld [vmem:[#allocation9 + $0x1258] sm:$0xff]
      %v1365 = vld [vmem:[#allocation9 + $0x1260] sm:$0xff]
      %v1366 = vld [vmem:[#allocation9 + $0x1268] sm:$0xff]
      %v1367 = vld [vmem:[#allocation9 + $0x1270] sm:$0xff]
      %v1368 = vld [vmem:[#allocation9 + $0x1278] sm:$0xff]
      %v1369 = vld [vmem:[#allocation9 + $0x1280] sm:$0xff]
      %v1370 = vld [vmem:[#allocation9 + $0x1288] sm:$0xff]
      %v1371 = vld [vmem:[#allocation9 + $0x1290] sm:$0xff]
      %v1372 = vld [vmem:[#allocation9 + $0x1298] sm:$0xff]
      %v1373 = vld [vmem:[#allocation9 + $0x12a0] sm:$0xff]
      %v1374 = vld [vmem:[#allocation9 + $0x12a8] sm:$0xff]
      %v1375 = vld [vmem:[#allocation9 + $0x12b0] sm:$0xff]
      %v1376 = vld [vmem:[#allocation9 + $0x12b8] sm:$0xff]
      %v1377 = vld [vmem:[#allocation9 + $0x12c0] sm:$0xff]
      %v1378 = vld [vmem:[#allocation9 + $0x12c8] sm:$0xff]
      %v1379 = vld [vmem:[#allocation9 + $0x12d0] sm:$0xff]
      %v1380 = vld [vmem:[#allocation9 + $0x12d8] sm:$0xff]
      %v1381 = vld [vmem:[#allocation9 + $0x12e0] sm:$0xff]
      %v1382 = vld [vmem:[#allocation9 + $0x12e8] sm:$0xff]
      %v1383 = vld [vmem:[#allocation9 + $0x12f0] sm:$0xff]
      %v1384 = vld [vmem:[#allocation9 + $0x12f8] sm:$0xff]
      %v1385 = vld [vmem:[#allocation9 + $0x1300] sm:$0xff]
      %v1386 = vld [vmem:[#allocation9 + $0x1308] sm:$0xff]
      %v1387 = vld [vmem:[#allocation9 + $0x1310] sm:$0xff]
      %v1388 = vld [vmem:[#allocation9 + $0x1318] sm:$0xff]
      %v1389 = vld [vmem:[#allocation9 + $0x1320] sm:$0xff]
      %v1390 = vld [vmem:[#allocation9 + $0x1328] sm:$0xff]
      %v1391 = vld [vmem:[#allocation9 + $0x1330] sm:$0xff]
      %v1392 = vld [vmem:[#allocation9 + $0x1338] sm:$0xff]
      %v1393 = vld [vmem:[#allocation9 + $0x1340] sm:$0xff]
      %v1394 = vld [vmem:[#allocation9 + $0x1348] sm:$0xff]
      %v1395 = vld [vmem:[#allocation9 + $0x1350] sm:$0xff]
      %v1396 = vld [vmem:[#allocation9 + $0x1358] sm:$0xff]
      %v1397 = vld [vmem:[#allocation9 + $0x1360] sm:$0xff]
      %v1398 = vld [vmem:[#allocation9 + $0x1368] sm:$0xff]
      %v1399 = vld [vmem:[#allocation9 + $0x1370] sm:$0xff]
      %v1400 = vld [vmem:[#allocation9 + $0x1378] sm:$0xff]
      %v1401 = vld [vmem:[#allocation9 + $0x1380] sm:$0xff]
      %v1402 = vld [vmem:[#allocation9 + $0x1388] sm:$0xff]
      %v1403 = vld [vmem:[#allocation9 + $0x1390] sm:$0xff]
      %v1404 = vld [vmem:[#allocation9 + $0x1398] sm:$0xff]
      %v1405 = vld [vmem:[#allocation9 + $0x13a0] sm:$0xff]
      %v1406 = vld [vmem:[#allocation9 + $0x13a8] sm:$0xff]
      %v1407 = vld [vmem:[#allocation9 + $0x13b0] sm:$0xff]
      %v1408 = vld [vmem:[#allocation9 + $0x13b8] sm:$0xff]
      %v1409 = vld [vmem:[#allocation9 + $0x13c0] sm:$0xff]
      %v1410 = vld [vmem:[#allocation9 + $0x13c8] sm:$0xff]
      %v1411 = vld [vmem:[#allocation9 + $0x13d0] sm:$0xff]
      %v1412 = vld [vmem:[#allocation9 + $0x13d8] sm:$0xff]
      %v1413 = vld [vmem:[#allocation9 + $0x13e0] sm:$0xff]
      %v1414 = vld [vmem:[#allocation9 + $0x13e8] sm:$0xff]
      %v1415 = vld [vmem:[#allocation9 + $0x13f0] sm:$0xff]
      %v1416 = vld [vmem:[#allocation9 + $0x13f8] sm:$0xff]
      %v1417 = vld [vmem:[#allocation9 + $0x1400] sm:$0xff]
      %v1418 = vld [vmem:[#allocation9 + $0x1408] sm:$0xff]
      %v1419 = vld [vmem:[#allocation9 + $0x1410] sm:$0xff]
      %v1420 = vld [vmem:[#allocation9 + $0x1418] sm:$0xff]
      %v1421 = vld [vmem:[#allocation9 + $0x1420] sm:$0xff]
      %v1422 = vld [vmem:[#allocation9 + $0x1428] sm:$0xff]
      %v1423 = vld [vmem:[#allocation9 + $0x1430] sm:$0xff]
      %v1424 = vld [vmem:[#allocation9 + $0x1438] sm:$0xff]
      %v1425 = vld [vmem:[#allocation9 + $0x1440] sm:$0xff]
      %v1426 = vld [vmem:[#allocation9 + $0x1448] sm:$0xff]
      %v1427 = vld [vmem:[#allocation9 + $0x1450] sm:$0xff]
      %v1428 = vld [vmem:[#allocation9 + $0x1458] sm:$0xff]
      %v1429 = vld [vmem:[#allocation9 + $0x1460] sm:$0xff]
      %v1430 = vld [vmem:[#allocation9 + $0x1468] sm:$0xff]
      %v1431 = vld [vmem:[#allocation9 + $0x1470] sm:$0xff]
      %v1432 = vld [vmem:[#allocation9 + $0x1478] sm:$0xff]
      %v1433 = vld [vmem:[#allocation9 + $0x1480] sm:$0xff]
      %v1434 = vld [vmem:[#allocation9 + $0x1488] sm:$0xff]
      %v1435 = vld [vmem:[#allocation9 + $0x1490] sm:$0xff]
      %v1436 = vld [vmem:[#allocation9 + $0x1498] sm:$0xff]
      %v1437 = vld [vmem:[#allocation9 + $0x14a0] sm:$0xff]
      %v1438 = vld [vmem:[#allocation9 + $0x14a8] sm:$0xff]
      %v1439 = vld [vmem:[#allocation9 + $0x14b0] sm:$0xff]
      %v1440 = vld [vmem:[#allocation9 + $0x14b8] sm:$0xff]
      %v1441 = vld [vmem:[#allocation9 + $0x14c0] sm:$0xff]
      %v1442 = vld [vmem:[#allocation9 + $0x14c8] sm:$0xff]
      %v1443 = vld [vmem:[#allocation9 + $0x14d0] sm:$0xff]
      %v1444 = vld [vmem:[#allocation9 + $0x14d8] sm:$0xff]
      %v1445 = vld [vmem:[#allocation9 + $0x14e0] sm:$0xff]
      %v1446 = vld [vmem:[#allocation9 + $0x14e8] sm:$0xff]
      %v1447 = vld [vmem:[#allocation9 + $0x14f0] sm:$0xff]
      %v1448 = vld [vmem:[#allocation9 + $0x14f8] sm:$0xff]
      %v1449 = vld [vmem:[#allocation9 + $0x1500] sm:$0xff]
      %v1450 = vld [vmem:[#allocation9 + $0x1508] sm:$0xff]
      %v1451 = vld [vmem:[#allocation9 + $0x1510] sm:$0xff]
      %v1452 = vld [vmem:[#allocation9 + $0x1518] sm:$0xff]
      %v1453 = vld [vmem:[#allocation9 + $0x1520] sm:$0xff]
      %v1454 = vld [vmem:[#allocation9 + $0x1528] sm:$0xff]
      %v1455 = vld [vmem:[#allocation9 + $0x1530] sm:$0xff]
      %v1456 = vld [vmem:[#allocation9 + $0x1538] sm:$0xff]
      %v1457 = vld [vmem:[#allocation9 + $0x1540] sm:$0xff]
      %v1458 = vld [vmem:[#allocation9 + $0x1548] sm:$0xff]
      %v1459 = vld [vmem:[#allocation9 + $0x1550] sm:$0xff]
      %v1460 = vld [vmem:[#allocation9 + $0x1558] sm:$0xff]
      %v1461 = vld [vmem:[#allocation9 + $0x1560] sm:$0xff]
      %v1462 = vld [vmem:[#allocation9 + $0x1568] sm:$0xff]
      %v1463 = vld [vmem:[#allocation9 + $0x1570] sm:$0xff]
      %v1464 = vld [vmem:[#allocation9 + $0x1578] sm:$0xff]
      %v1465 = vld [vmem:[#allocation9 + $0x1580] sm:$0xff]
      %v1466 = vld [vmem:[#allocation9 + $0x1588] sm:$0xff]
      %v1467 = vld [vmem:[#allocation9 + $0x1590] sm:$0xff]
      %v1468 = vld [vmem:[#allocation9 + $0x1598] sm:$0xff]
      %v1469 = vld [vmem:[#allocation9 + $0x15a0] sm:$0xff]
      %v1470 = vld [vmem:[#allocation9 + $0x15a8] sm:$0xff]
      %v1471 = vld [vmem:[#allocation9 + $0x15b0] sm:$0xff]
      %v1472 = vld [vmem:[#allocation9 + $0x15b8] sm:$0xff]
      %v1473 = vld [vmem:[#allocation9 + $0x15c0] sm:$0xff]
      %v1474 = vld [vmem:[#allocation9 + $0x15c8] sm:$0xff]
      %v1475 = vld [vmem:[#allocation9 + $0x15d0] sm:$0xff]
      %v1476 = vld [vmem:[#allocation9 + $0x15d8] sm:$0xff]
      %v1477 = vld [vmem:[#allocation9 + $0x15e0] sm:$0xff]
      %v1478 = vld [vmem:[#allocation9 + $0x15e8] sm:$0xff]
      %v1479 = vld [vmem:[#allocation9 + $0x15f0] sm:$0xff]
      %v1480 = vld [vmem:[#allocation9 + $0x15f8] sm:$0xff]
      %v1481 = vld [vmem:[#allocation9 + $0x1600] sm:$0xff]
      %v1482 = vld [vmem:[#allocation9 + $0x1608] sm:$0xff]
      %v1483 = vld [vmem:[#allocation9 + $0x1610] sm:$0xff]
      %v1484 = vld [vmem:[#allocation9 + $0x1618] sm:$0xff]
      %v1485 = vld [vmem:[#allocation9 + $0x1620] sm:$0xff]
      %v1486 = vld [vmem:[#allocation9 + $0x1628] sm:$0xff]
      %v1487 = vld [vmem:[#allocation9 + $0x1630] sm:$0xff]
      %v1488 = vld [vmem:[#allocation9 + $0x1638] sm:$0xff]
      %v1489 = vld [vmem:[#allocation9 + $0x1640] sm:$0xff]
      %v1490 = vld [vmem:[#allocation9 + $0x1648] sm:$0xff]
      %v1491 = vld [vmem:[#allocation9 + $0x1650] sm:$0xff]
      %v1492 = vld [vmem:[#allocation9 + $0x1658] sm:$0xff]
      %v1493 = vld [vmem:[#allocation9 + $0x1660] sm:$0xff]
      %v1494 = vld [vmem:[#allocation9 + $0x1668] sm:$0xff]
      %v1495 = vld [vmem:[#allocation9 + $0x1670] sm:$0xff]
      %v1496 = vld [vmem:[#allocation9 + $0x1678] sm:$0xff]
      %v1497 = vld [vmem:[#allocation9 + $0x1680] sm:$0xff]
      %v1498 = vld [vmem:[#allocation9 + $0x1688] sm:$0xff]
      %v1499 = vld [vmem:[#allocation9 + $0x1690] sm:$0xff]
      %v1500 = vld [vmem:[#allocation9 + $0x1698] sm:$0xff]
      %v1501 = vld [vmem:[#allocation9 + $0x16a0] sm:$0xff]
      %v1502 = vld [vmem:[#allocation9 + $0x16a8] sm:$0xff]
      %v1503 = vld [vmem:[#allocation9 + $0x16b0] sm:$0xff]
      %v1504 = vld [vmem:[#allocation9 + $0x16b8] sm:$0xff]
      %v1505 = vld [vmem:[#allocation9 + $0x16c0] sm:$0xff]
      %v1506 = vld [vmem:[#allocation9 + $0x16c8] sm:$0xff]
      %v1507 = vld [vmem:[#allocation9 + $0x16d0] sm:$0xff]
      %v1508 = vld [vmem:[#allocation9 + $0x16d8] sm:$0xff]
      %v1509 = vld [vmem:[#allocation9 + $0x16e0] sm:$0xff]
      %v1510 = vld [vmem:[#allocation9 + $0x16e8] sm:$0xff]
      %v1511 = vld [vmem:[#allocation9 + $0x16f0] sm:$0xff]
      %v1512 = vld [vmem:[#allocation9 + $0x16f8] sm:$0xff]
      %v1513 = vld [vmem:[#allocation9 + $0x1700] sm:$0xff]
      %v1514 = vld [vmem:[#allocation9 + $0x1708] sm:$0xff]
      %v1515 = vld [vmem:[#allocation9 + $0x1710] sm:$0xff]
      %v1516 = vld [vmem:[#allocation9 + $0x1718] sm:$0xff]
      %v1517 = vld [vmem:[#allocation9 + $0x1720] sm:$0xff]
      %v1518 = vld [vmem:[#allocation9 + $0x1728] sm:$0xff]
      %v1519 = vld [vmem:[#allocation9 + $0x1730] sm:$0xff]
      %v1520 = vld [vmem:[#allocation9 + $0x1738] sm:$0xff]
      %v1521 = vld [vmem:[#allocation9 + $0x1740] sm:$0xff]
      %v1522 = vld [vmem:[#allocation9 + $0x1748] sm:$0xff]
      %v1523 = vld [vmem:[#allocation9 + $0x1750] sm:$0xff]
      %v1524 = vld [vmem:[#allocation9 + $0x1758] sm:$0xff]
      %v1525 = vld [vmem:[#allocation9 + $0x1760] sm:$0xff]
      %v1526 = vld [vmem:[#allocation9 + $0x1768] sm:$0xff]
      %v1527 = vld [vmem:[#allocation9 + $0x1770] sm:$0xff]
      %v1528 = vld [vmem:[#allocation9 + $0x1778] sm:$0xff]
      %v1529 = vld [vmem:[#allocation9 + $0x1780] sm:$0xff]
      %v1530 = vld [vmem:[#allocation9 + $0x1788] sm:$0xff]
      %v1531 = vld [vmem:[#allocation9 + $0x1790] sm:$0xff]
      %v1532 = vld [vmem:[#allocation9 + $0x1798] sm:$0xff]
      %v1533 = vld [vmem:[#allocation9 + $0x17a0] sm:$0xff]
      %v1534 = vld [vmem:[#allocation9 + $0x17a8] sm:$0xff]
      %v1535 = vld [vmem:[#allocation9 + $0x17b0] sm:$0xff]
      %v1536 = vld [vmem:[#allocation9 + $0x17b8] sm:$0xff]
      %v1537 = vld [vmem:[#allocation9 + $0x17c0] sm:$0xff]
      %v1538 = vld [vmem:[#allocation9 + $0x17c8] sm:$0xff]
      %v1539 = vld [vmem:[#allocation9 + $0x17d0] sm:$0xff]
      %v1540 = vld [vmem:[#allocation9 + $0x17d8] sm:$0xff]
      %v1541 = vld [vmem:[#allocation9 + $0x17e0] sm:$0xff]
      %v1542 = vld [vmem:[#allocation9 + $0x17e8] sm:$0xff]
      %v1543 = vld [vmem:[#allocation9 + $0x17f0] sm:$0xff]
      %v1544 = vld [vmem:[#allocation9 + $0x17f8] sm:$0xff]
      %v1545 = vld [vmem:[#allocation9 + $0x1800] sm:$0xff]
      %v1546 = vld [vmem:[#allocation9 + $0x1808] sm:$0xff]
      %v1547 = vld [vmem:[#allocation9 + $0x1810] sm:$0xff]
      %v1548 = vld [vmem:[#allocation9 + $0x1818] sm:$0xff]
      %v1549 = vld [vmem:[#allocation9 + $0x1820] sm:$0xff]
      %v1550 = vld [vmem:[#allocation9 + $0x1828] sm:$0xff]
      %v1551 = vld [vmem:[#allocation9 + $0x1830] sm:$0xff]
      %v1552 = vld [vmem:[#allocation9 + $0x1838] sm:$0xff]
      %v1553 = vld [vmem:[#allocation9 + $0x1840] sm:$0xff]
      %v1554 = vld [vmem:[#allocation9 + $0x1848] sm:$0xff]
      %v1555 = vld [vmem:[#allocation9 + $0x1850] sm:$0xff]
      %v1556 = vld [vmem:[#allocation9 + $0x1858] sm:$0xff]
      %v1557 = vld [vmem:[#allocation9 + $0x1860] sm:$0xff]
      %v1558 = vld [vmem:[#allocation9 + $0x1868] sm:$0xff]
      %v1559 = vld [vmem:[#allocation9 + $0x1870] sm:$0xff]
      %v1560 = vld [vmem:[#allocation9 + $0x1878] sm:$0xff]
      %v1561 = vld [vmem:[#allocation9 + $0x1880] sm:$0xff]
      %v1562 = vld [vmem:[#allocation9 + $0x1888] sm:$0xff]
      %v1563 = vld [vmem:[#allocation9 + $0x1890] sm:$0xff]
      %v1564 = vld [vmem:[#allocation9 + $0x1898] sm:$0xff]
      %v1565 = vld [vmem:[#allocation9 + $0x18a0] sm:$0xff]
      %v1566 = vld [vmem:[#allocation9 + $0x18a8] sm:$0xff]
      %v1567 = vld [vmem:[#allocation9 + $0x18b0] sm:$0xff]
      %v1568 = vld [vmem:[#allocation9 + $0x18b8] sm:$0xff]
      %v1569 = vld [vmem:[#allocation9 + $0x18c0] sm:$0xff]
      %v1570 = vld [vmem:[#allocation9 + $0x18c8] sm:$0xff]
      %v1571 = vld [vmem:[#allocation9 + $0x18d0] sm:$0xff]
      %v1572 = vld [vmem:[#allocation9 + $0x18d8] sm:$0xff]
      %v1573 = vld [vmem:[#allocation9 + $0x18e0] sm:$0xff]
      %v1574 = vld [vmem:[#allocation9 + $0x18e8] sm:$0xff]
      %v1575 = vld [vmem:[#allocation9 + $0x18f0] sm:$0xff]
      %v1576 = vld [vmem:[#allocation9 + $0x18f8] sm:$0xff]
      %v1577 = vld [vmem:[#allocation9 + $0x1900] sm:$0xff]
      %v1578 = vld [vmem:[#allocation9 + $0x1908] sm:$0xff]
      %v1579 = vld [vmem:[#allocation9 + $0x1910] sm:$0xff]
      %v1580 = vld [vmem:[#allocation9 + $0x1918] sm:$0xff]
      %v1581 = vld [vmem:[#allocation9 + $0x1920] sm:$0xff]
      %v1582 = vld [vmem:[#allocation9 + $0x1928] sm:$0xff]
      %v1583 = vld [vmem:[#allocation9 + $0x1930] sm:$0xff]
      %v1584 = vld [vmem:[#allocation9 + $0x1938] sm:$0xff]
      %v1585 = vld [vmem:[#allocation9 + $0x1940] sm:$0xff]
      %v1586 = vld [vmem:[#allocation9 + $0x1948] sm:$0xff]
      %v1587 = vld [vmem:[#allocation9 + $0x1950] sm:$0xff]
      %v1588 = vld [vmem:[#allocation9 + $0x1958] sm:$0xff]
      %v1589 = vld [vmem:[#allocation9 + $0x1960] sm:$0xff]
      %v1590 = vld [vmem:[#allocation9 + $0x1968] sm:$0xff]
      %v1591 = vld [vmem:[#allocation9 + $0x1970] sm:$0xff]
      %v1592 = vld [vmem:[#allocation9 + $0x1978] sm:$0xff]
      %v1593 = vld [vmem:[#allocation9 + $0x1980] sm:$0xff]
      %v1594 = vld [vmem:[#allocation9 + $0x1988] sm:$0xff]
      %v1595 = vld [vmem:[#allocation9 + $0x1990] sm:$0xff]
      %v1596 = vld [vmem:[#allocation9 + $0x1998] sm:$0xff]
      %v1597 = vld [vmem:[#allocation9 + $0x19a0] sm:$0xff]
      %v1598 = vld [vmem:[#allocation9 + $0x19a8] sm:$0xff]
      %v1599 = vld [vmem:[#allocation9 + $0x19b0] sm:$0xff]
      %v1600 = vld [vmem:[#allocation9 + $0x19b8] sm:$0xff]
      %v1601 = vld [vmem:[#allocation9 + $0x19c0] sm:$0xff]
      %v1602 = vld [vmem:[#allocation9 + $0x19c8] sm:$0xff]
      %v1603 = vld [vmem:[#allocation9 + $0x19d0] sm:$0xff]
      %v1604 = vld [vmem:[#allocation9 + $0x19d8] sm:$0xff]
      %v1605 = vld [vmem:[#allocation9 + $0x19e0] sm:$0xff]
      %v1606 = vld [vmem:[#allocation9 + $0x19e8] sm:$0xff]
      %v1607 = vld [vmem:[#allocation9 + $0x19f0] sm:$0xff]
      %v1608 = vld [vmem:[#allocation9 + $0x19f8] sm:$0xff]
      %v1609 = vld [vmem:[#allocation9 + $0x1a00] sm:$0xff]
      %v1610 = vld [vmem:[#allocation9 + $0x1a08] sm:$0xff]
      %v1611 = vld [vmem:[#allocation9 + $0x1a10] sm:$0xff]
      %v1612 = vld [vmem:[#allocation9 + $0x1a18] sm:$0xff]
      %v1613 = vld [vmem:[#allocation9 + $0x1a20] sm:$0xff]
      %v1614 = vld [vmem:[#allocation9 + $0x1a28] sm:$0xff]
      %v1615 = vld [vmem:[#allocation9 + $0x1a30] sm:$0xff]
      %v1616 = vld [vmem:[#allocation9 + $0x1a38] sm:$0xff]
      %v1617 = vld [vmem:[#allocation9 + $0x1a40] sm:$0xff]
      %v1618 = vld [vmem:[#allocation9 + $0x1a48] sm:$0xff]
      %v1619 = vld [vmem:[#allocation9 + $0x1a50] sm:$0xff]
      %v1620 = vld [vmem:[#allocation9 + $0x1a58] sm:$0xff]
      %v1621 = vld [vmem:[#allocation9 + $0x1a60] sm:$0xff]
      %v1622 = vld [vmem:[#allocation9 + $0x1a68] sm:$0xff]
      %v1623 = vld [vmem:[#allocation9 + $0x1a70] sm:$0xff]
      %v1624 = vld [vmem:[#allocation9 + $0x1a78] sm:$0xff]
      %v1625 = vld [vmem:[#allocation9 + $0x1a80] sm:$0xff]
      %v1626 = vld [vmem:[#allocation9 + $0x1a88] sm:$0xff]
      %v1627 = vld [vmem:[#allocation9 + $0x1a90] sm:$0xff]
      %v1628 = vld [vmem:[#allocation9 + $0x1a98] sm:$0xff]
      %v1629 = vld [vmem:[#allocation9 + $0x1aa0] sm:$0xff]
      %v1630 = vld [vmem:[#allocation9 + $0x1aa8] sm:$0xff]
      %v1631 = vld [vmem:[#allocation9 + $0x1ab0] sm:$0xff]
      %v1632 = vld [vmem:[#allocation9 + $0x1ab8] sm:$0xff]
      %v1633 = vld [vmem:[#allocation9 + $0x1ac0] sm:$0xff]
      %v1634 = vld [vmem:[#allocation9 + $0x1ac8] sm:$0xff]
      %v1635 = vld [vmem:[#allocation9 + $0x1ad0] sm:$0xff]
      %v1636 = vld [vmem:[#allocation9 + $0x1ad8] sm:$0xff]
      %v1637 = vld [vmem:[#allocation9 + $0x1ae0] sm:$0xff]
      %v1638 = vld [vmem:[#allocation9 + $0x1ae8] sm:$0xff]
      %v1639 = vld [vmem:[#allocation9 + $0x1af0] sm:$0xff]
      %v1640 = vld [vmem:[#allocation9 + $0x1af8] sm:$0xff]
      %v1641 = vld [vmem:[#allocation9 + $0x1b00] sm:$0xff]
      %v1642 = vld [vmem:[#allocation9 + $0x1b08] sm:$0xff]
      %v1643 = vld [vmem:[#allocation9 + $0x1b10] sm:$0xff]
      %v1644 = vld [vmem:[#allocation9 + $0x1b18] sm:$0xff]
      %v1645 = vld [vmem:[#allocation9 + $0x1b20] sm:$0xff]
      %v1646 = vld [vmem:[#allocation9 + $0x1b28] sm:$0xff]
      %v1647 = vld [vmem:[#allocation9 + $0x1b30] sm:$0xff]
      %v1648 = vld [vmem:[#allocation9 + $0x1b38] sm:$0xff]
      %v1649 = vld [vmem:[#allocation9 + $0x1b40] sm:$0xff]
      %v1650 = vld [vmem:[#allocation9 + $0x1b48] sm:$0xff]
      %v1651 = vld [vmem:[#allocation9 + $0x1b50] sm:$0xff]
      %v1652 = vld [vmem:[#allocation9 + $0x1b58] sm:$0xff]
      %v1653 = vld [vmem:[#allocation9 + $0x1b60] sm:$0xff]
      %v1654 = vld [vmem:[#allocation9 + $0x1b68] sm:$0xff]
      %v1655 = vld [vmem:[#allocation9 + $0x1b70] sm:$0xff]
      %v1656 = vld [vmem:[#allocation9 + $0x1b78] sm:$0xff]
      %v1657 = vld [vmem:[#allocation9 + $0x1b80] sm:$0xff]
      %v1658 = vld [vmem:[#allocation9 + $0x1b88] sm:$0xff]
      %v1659 = vld [vmem:[#allocation9 + $0x1b90] sm:$0xff]
      %v1660 = vld [vmem:[#allocation9 + $0x1b98] sm:$0xff]
      %v1661 = vld [vmem:[#allocation9 + $0x1ba0] sm:$0xff]
      %v1662 = vld [vmem:[#allocation9 + $0x1ba8] sm:$0xff]
      %v1663 = vld [vmem:[#allocation9 + $0x1bb0] sm:$0xff]
      %v1664 = vld [vmem:[#allocation9 + $0x1bb8] sm:$0xff]
      %v1665 = vld [vmem:[#allocation9 + $0x1bc0] sm:$0xff]
      %v1666 = vld [vmem:[#allocation9 + $0x1bc8] sm:$0xff]
      %v1667 = vld [vmem:[#allocation9 + $0x1bd0] sm:$0xff]
      %v1668 = vld [vmem:[#allocation9 + $0x1bd8] sm:$0xff]
      %v1669 = vld [vmem:[#allocation9 + $0x1be0] sm:$0xff]
      %v1670 = vld [vmem:[#allocation9 + $0x1be8] sm:$0xff]
      %v1671 = vld [vmem:[#allocation9 + $0x1bf0] sm:$0xff]
      %v1672 = vld [vmem:[#allocation9 + $0x1bf8] sm:$0xff]
      %v1673 = vld [vmem:[#allocation9 + $0x1c00] sm:$0xff]
      %v1674 = vld [vmem:[#allocation9 + $0x1c08] sm:$0xff]
      %v1675 = vld [vmem:[#allocation9 + $0x1c10] sm:$0xff]
      %v1676 = vld [vmem:[#allocation9 + $0x1c18] sm:$0xff]
      %v1677 = vld [vmem:[#allocation9 + $0x1c20] sm:$0xff]
      %v1678 = vld [vmem:[#allocation9 + $0x1c28] sm:$0xff]
      %v1679 = vld [vmem:[#allocation9 + $0x1c30] sm:$0xff]
      %v1680 = vld [vmem:[#allocation9 + $0x1c38] sm:$0xff]
      %v1681 = vld [vmem:[#allocation9 + $0x1c40] sm:$0xff]
      %v1682 = vld [vmem:[#allocation9 + $0x1c48] sm:$0xff]
      %v1683 = vld [vmem:[#allocation9 + $0x1c50] sm:$0xff]
      %v1684 = vld [vmem:[#allocation9 + $0x1c58] sm:$0xff]
      %v1685 = vld [vmem:[#allocation9 + $0x1c60] sm:$0xff]
      %v1686 = vld [vmem:[#allocation9 + $0x1c68] sm:$0xff]
      %v1687 = vld [vmem:[#allocation9 + $0x1c70] sm:$0xff]
      %v1688 = vld [vmem:[#allocation9 + $0x1c78] sm:$0xff]
      %v1689 = vld [vmem:[#allocation9 + $0x1c80] sm:$0xff]
      %v1690 = vld [vmem:[#allocation9 + $0x1c88] sm:$0xff]
      %v1691 = vld [vmem:[#allocation9 + $0x1c90] sm:$0xff]
      %v1692 = vld [vmem:[#allocation9 + $0x1c98] sm:$0xff]
      %v1693 = vld [vmem:[#allocation9 + $0x1ca0] sm:$0xff]
      %v1694 = vld [vmem:[#allocation9 + $0x1ca8] sm:$0xff]
      %v1695 = vld [vmem:[#allocation9 + $0x1cb0] sm:$0xff]
      %v1696 = vld [vmem:[#allocation9 + $0x1cb8] sm:$0xff]
      %v1697 = vld [vmem:[#allocation9 + $0x1cc0] sm:$0xff]
      %v1698 = vld [vmem:[#allocation9 + $0x1cc8] sm:$0xff]
      %v1699 = vld [vmem:[#allocation9 + $0x1cd0] sm:$0xff]
      %v1700 = vld [vmem:[#allocation9 + $0x1cd8] sm:$0xff]
      %v1701 = vld [vmem:[#allocation9 + $0x1ce0] sm:$0xff]
      %v1702 = vld [vmem:[#allocation9 + $0x1ce8] sm:$0xff]
      %v1703 = vld [vmem:[#allocation9 + $0x1cf0] sm:$0xff]
      %v1704 = vld [vmem:[#allocation9 + $0x1cf8] sm:$0xff]
      %v1705 = vld [vmem:[#allocation9 + $0x1d00] sm:$0xff]
      %v1706 = vld [vmem:[#allocation9 + $0x1d08] sm:$0xff]
      %v1707 = vld [vmem:[#allocation9 + $0x1d10] sm:$0xff]
      %v1708 = vld [vmem:[#allocation9 + $0x1d18] sm:$0xff]
      %v1709 = vld [vmem:[#allocation9 + $0x1d20] sm:$0xff]
      %v1710 = vld [vmem:[#allocation9 + $0x1d28] sm:$0xff]
      %v1711 = vld [vmem:[#allocation9 + $0x1d30] sm:$0xff]
      %v1712 = vld [vmem:[#allocation9 + $0x1d38] sm:$0xff]
      %v1713 = vld [vmem:[#allocation9 + $0x1d40] sm:$0xff]
      %v1714 = vld [vmem:[#allocation9 + $0x1d48] sm:$0xff]
      %v1715 = vld [vmem:[#allocation9 + $0x1d50] sm:$0xff]
      %v1716 = vld [vmem:[#allocation9 + $0x1d58] sm:$0xff]
      %v1717 = vld [vmem:[#allocation9 + $0x1d60] sm:$0xff]
      %v1718 = vld [vmem:[#allocation9 + $0x1d68] sm:$0xff]
      %v1719 = vld [vmem:[#allocation9 + $0x1d70] sm:$0xff]
      %v1720 = vld [vmem:[#allocation9 + $0x1d78] sm:$0xff]
      %v1721 = vld [vmem:[#allocation9 + $0x1d80] sm:$0xff]
      %v1722 = vld [vmem:[#allocation9 + $0x1d88] sm:$0xff]
      %v1723 = vld [vmem:[#allocation9 + $0x1d90] sm:$0xff]
      %v1724 = vld [vmem:[#allocation9 + $0x1d98] sm:$0xff]
      %v1725 = vld [vmem:[#allocation9 + $0x1da0] sm:$0xff]
      %v1726 = vld [vmem:[#allocation9 + $0x1da8] sm:$0xff]
      %v1727 = vld [vmem:[#allocation9 + $0x1db0] sm:$0xff]
      %v1728 = vld [vmem:[#allocation9 + $0x1db8] sm:$0xff]
      %v1729 = vld [vmem:[#allocation9 + $0x1dc0] sm:$0xff]
      %v1730 = vld [vmem:[#allocation9 + $0x1dc8] sm:$0xff]
      %v1731 = vld [vmem:[#allocation9 + $0x1dd0] sm:$0xff]
      %v1732 = vld [vmem:[#allocation9 + $0x1dd8] sm:$0xff]
      %v1733 = vld [vmem:[#allocation9 + $0x1de0] sm:$0xff]
      %v1734 = vld [vmem:[#allocation9 + $0x1de8] sm:$0xff]
      %v1735 = vld [vmem:[#allocation9 + $0x1df0] sm:$0xff]
      %v1736 = vld [vmem:[#allocation9 + $0x1df8] sm:$0xff]
      %v1737 = vld [vmem:[#allocation9 + $0x1e00] sm:$0xff]
      %v1738 = vld [vmem:[#allocation9 + $0x1e08] sm:$0xff]
      %v1739 = vld [vmem:[#allocation9 + $0x1e10] sm:$0xff]
      %v1740 = vld [vmem:[#allocation9 + $0x1e18] sm:$0xff]
      %v1741 = vld [vmem:[#allocation9 + $0x1e20] sm:$0xff]
      %v1742 = vld [vmem:[#allocation9 + $0x1e28] sm:$0xff]
      %v1743 = vld [vmem:[#allocation9 + $0x1e30] sm:$0xff]
      %v1744 = vld [vmem:[#allocation9 + $0x1e38] sm:$0xff]
      %v1745 = vld [vmem:[#allocation9 + $0x1e40] sm:$0xff]
      %v1746 = vld [vmem:[#allocation9 + $0x1e48] sm:$0xff]
      %v1747 = vld [vmem:[#allocation9 + $0x1e50] sm:$0xff]
      %v1748 = vld [vmem:[#allocation9 + $0x1e58] sm:$0xff]
      %v1749 = vld [vmem:[#allocation9 + $0x1e60] sm:$0xff]
      %v1750 = vld [vmem:[#allocation9 + $0x1e68] sm:$0xff]
      %v1751 = vld [vmem:[#allocation9 + $0x1e70] sm:$0xff]
      %v1752 = vld [vmem:[#allocation9 + $0x1e78] sm:$0xff]
      %v1753 = vld [vmem:[#allocation9 + $0x1e80] sm:$0xff]
      %v1754 = vld [vmem:[#allocation9 + $0x1e88] sm:$0xff]
      %v1755 = vld [vmem:[#allocation9 + $0x1e90] sm:$0xff]
      %v1756 = vld [vmem:[#allocation9 + $0x1e98] sm:$0xff]
      %v1757 = vld [vmem:[#allocation9 + $0x1ea0] sm:$0xff]
      %v1758 = vld [vmem:[#allocation9 + $0x1ea8] sm:$0xff]
      %v1759 = vld [vmem:[#allocation9 + $0x1eb0] sm:$0xff]
      %v1760 = vld [vmem:[#allocation9 + $0x1eb8] sm:$0xff]
      %v1761 = vld [vmem:[#allocation9 + $0x1ec0] sm:$0xff]
      %v1762 = vld [vmem:[#allocation9 + $0x1ec8] sm:$0xff]
      %v1763 = vld [vmem:[#allocation9 + $0x1ed0] sm:$0xff]
      %v1764 = vld [vmem:[#allocation9 + $0x1ed8] sm:$0xff]
      %v1765 = vld [vmem:[#allocation9 + $0x1ee0] sm:$0xff]
      %v1766 = vld [vmem:[#allocation9 + $0x1ee8] sm:$0xff]
      %v1767 = vld [vmem:[#allocation9 + $0x1ef0] sm:$0xff]
      %v1768 = vld [vmem:[#allocation9 + $0x1ef8] sm:$0xff]
      %v1769 = vld [vmem:[#allocation9 + $0x1f00] sm:$0xff]
      %v1770 = vld [vmem:[#allocation9 + $0x1f08] sm:$0xff]
      %v1771 = vld [vmem:[#allocation9 + $0x1f10] sm:$0xff]
      %v1772 = vld [vmem:[#allocation9 + $0x1f18] sm:$0xff]
      %v1773 = vld [vmem:[#allocation9 + $0x1f20] sm:$0xff]
      %v1774 = vld [vmem:[#allocation9 + $0x1f28] sm:$0xff]
      %v1775 = vld [vmem:[#allocation9 + $0x1f30] sm:$0xff]
      %v1776 = vld [vmem:[#allocation9 + $0x1f38] sm:$0xff]
      %v1777 = vld [vmem:[#allocation9 + $0x1f40] sm:$0xff]
      %v1778 = vld [vmem:[#allocation9 + $0x1f48] sm:$0xff]
      %v1779 = vld [vmem:[#allocation9 + $0x1f50] sm:$0xff]
      %v1780 = vld [vmem:[#allocation9 + $0x1f58] sm:$0xff]
      %v1781 = vld [vmem:[#allocation9 + $0x1f60] sm:$0xff]
      %v1782 = vld [vmem:[#allocation9 + $0x1f68] sm:$0xff]
      %v1783 = vld [vmem:[#allocation9 + $0x1f70] sm:$0xff]
      %v1784 = vld [vmem:[#allocation9 + $0x1f78] sm:$0xff]
      %v1785 = vld [vmem:[#allocation9 + $0x1f80] sm:$0xff]
      %v1786 = vld [vmem:[#allocation9 + $0x1f88] sm:$0xff]
      %v1787 = vld [vmem:[#allocation9 + $0x1f90] sm:$0xff]
      %v1788 = vld [vmem:[#allocation9 + $0x1f98] sm:$0xff]
      %v1789 = vld [vmem:[#allocation9 + $0x1fa0] sm:$0xff]
      %v1790 = vld [vmem:[#allocation9 + $0x1fa8] sm:$0xff]
      %v1791 = vld [vmem:[#allocation9 + $0x1fb0] sm:$0xff]
      %v1792 = vld [vmem:[#allocation9 + $0x1fb8] sm:$0xff]
      %v1793 = vld [vmem:[#allocation9 + $0x1fc0] sm:$0xff]
      %v1794 = vld [vmem:[#allocation9 + $0x1fc8] sm:$0xff]
      %v1795 = vld [vmem:[#allocation9 + $0x1fd0] sm:$0xff]
      %v1796 = vld [vmem:[#allocation9 + $0x1fd8] sm:$0xff]
      %v1797 = vld [vmem:[#allocation9 + $0x1fe0] sm:$0xff]
      %v1798 = vld [vmem:[#allocation9 + $0x1fe8] sm:$0xff]
      %v1799 = vld [vmem:[#allocation9 + $0x1ff0] sm:$0xff]
      %v1800 = vld [vmem:[#allocation9 + $0x1ff8] sm:$0xff]
      %v1801 = vld [vmem:[#allocation11] sm:$0xff]
      %v1803 = vlaneseq
      %v1804 = vshrl.u32 %v1803, 7
      %v1805 = vsub.s32 0, %v1804
      %v1806 = vrot.slane %v1801, %v1805
      %v1807 = vlaneseq
      %v1808 = vshrl.u32 %v1807, 7
      %v1809 = vsub.s32 1, %v1808
      %v1810 = vrot.slane %v1801, %v1809
      %v1811 = vlaneseq
      %v1812 = vshrl.u32 %v1811, 7
      %v1813 = vsub.s32 2, %v1812
      %v1814 = vrot.slane %v1801, %v1813
      %v1815 = vlaneseq
      %v1816 = vshrl.u32 %v1815, 7
      %v1817 = vsub.s32 3, %v1816
      %v1818 = vrot.slane %v1801, %v1817
      %v1819 = vlaneseq
      %v1820 = vshrl.u32 %v1819, 7
      %v1821 = vsub.s32 4, %v1820
      %v1822 = vrot.slane %v1801, %v1821
      %v1823 = vlaneseq
      %v1824 = vshrl.u32 %v1823, 7
      %v1825 = vsub.s32 5, %v1824
      %v1826 = vrot.slane %v1801, %v1825
      %v1827 = vlaneseq
      %v1828 = vshrl.u32 %v1827, 7
      %v1829 = vsub.s32 6, %v1828
      %v1830 = vrot.slane %v1801, %v1829
      %v1831 = vlaneseq
      %v1832 = vshrl.u32 %v1831, 7
      %v1833 = vsub.s32 7, %v1832
      %v1834 = vrot.slane %v1801, %v1833
      %1843 = vmatprep.subr.mxu0 %v778
      %1844 = vmatpush1.msra.mxu0 %v777
      %1845 = vmatprep.subr.mxu0 %v786
      %1846 = vmatpush1.msra.mxu0 %v785
      %1847 = vmatprep.subr.mxu0 %v794
      %1848 = vmatpush1.msra.mxu0 %v793
      %1849 = vmatprep.subr.mxu0 %v802
      %1850 = vmatpush1.msra.mxu0 %v801
      %1851 = vmatprep.subr.mxu0 %v810
      %1852 = vmatpush1.msra.mxu0 %v809
      %1853 = vmatprep.subr.mxu0 %v818
      %1854 = vmatpush1.msra.mxu0 %v817
      %1855 = vmatprep.subr.mxu0 %v826
      %1856 = vmatpush1.msra.mxu0 %v825
      %1857 = vmatprep.subr.mxu0 %v834
      %1858 = vmatpush1.msra.mxu0 %v833
      %1859 = vmatprep.subr.mxu0 %v842
      %1860 = vmatpush1.msra.mxu0 %v841
      %1861 = vmatprep.subr.mxu0 %v850
      %1862 = vmatpush1.msra.mxu0 %v849
      %1863 = vmatprep.subr.mxu0 %v858
      %1864 = vmatpush1.msra.mxu0 %v857
      %1865 = vmatprep.subr.mxu0 %v866
      %1866 = vmatpush1.msra.mxu0 %v865
      %1867 = vmatprep.subr.mxu0 %v874
      %1868 = vmatpush1.msra.mxu0 %v873
      %1869 = vmatprep.subr.mxu0 %v882
      %1870 = vmatpush1.msra.mxu0 %v881
      %1871 = vmatprep.subr.mxu0 %v890
      %1872 = vmatpush1.msra.mxu0 %v889
      %1873 = vmatprep.subr.mxu0 %v898
      %1874 = vmatpush1.msra.mxu0 %v897
      %1875 = vmatprep.subr.mxu0 %v906
      %1876 = vmatpush1.msra.mxu0 %v905
      %1877 = vmatprep.subr.mxu0 %v914
      %1878 = vmatpush1.msra.mxu0 %v913
      %1879 = vmatprep.subr.mxu0 %v922
      %1880 = vmatpush1.msra.mxu0 %v921
      %1881 = vmatprep.subr.mxu0 %v930
      %1882 = vmatpush1.msra.mxu0 %v929
      %1883 = vmatprep.subr.mxu0 %v938
      %1884 = vmatpush1.msra.mxu0 %v937
      %1885 = vmatprep.subr.mxu0 %v946
      %1886 = vmatpush1.msra.mxu0 %v945
      %1887 = vmatprep.subr.mxu0 %v954
      %1888 = vmatpush1.msra.mxu0 %v953
      %1889 = vmatprep.subr.mxu0 %v962
      %1890 = vmatpush1.msra.mxu0 %v961
      %1891 = vmatprep.subr.mxu0 %v970
      %1892 = vmatpush1.msra.mxu0 %v969
      %1893 = vmatprep.subr.mxu0 %v978
      %1894 = vmatpush1.msra.mxu0 %v977
      %1895 = vmatprep.subr.mxu0 %v986
      %1896 = vmatpush1.msra.mxu0 %v985
      %1897 = vmatprep.subr.mxu0 %v994
      %1898 = vmatpush1.msra.mxu0 %v993
      %1899 = vmatprep.subr.mxu0 %v1002
      %1900 = vmatpush1.msra.mxu0 %v1001
      %1901 = vmatprep.subr.mxu0 %v1010
      %1902 = vmatpush1.msra.mxu0 %v1009
      %1903 = vmatprep.subr.mxu0 %v1018
      %1904 = vmatpush1.msra.mxu0 %v1017
      %1905 = vmatprep.subr.mxu0 %v1026
      %1906 = vmatpush1.msra.mxu0 %v1025
      %1907 = vmatprep.mubr.f32.mxu0 %v770
      %1908 = vmatmul.mubr.f32.gmra.mrb[0].mxu0 %v769
      %v1909 = vpop.f32.mrb[0].mxu0
      %v1910 = vadd.f32 %v1806, %v1909
      %v1911 = vpop.f32.mrb[0].mxu0
      %v1912 = vadd.f32 %v1810, %v1911
      %1913 = vdwg.mxu0
      %1914 = vmatprep.subr.mxu0 %v1034
      %1915 = vmatpush1.msra.mxu0 %v1033
      %1916 = vmatprep.subr.mxu0 %v1042
      %1917 = vmatpush1.msra.mxu0 %v1041
      %1918 = vmatprep.subr.mxu0 %v1050
      %1919 = vmatpush1.msra.mxu0 %v1049
      %1920 = vmatprep.subr.mxu0 %v1058
      %1921 = vmatpush1.msra.mxu0 %v1057
      %1922 = vmatprep.subr.mxu0 %v1066
      %1923 = vmatpush1.msra.mxu0 %v1065
      %1924 = vmatprep.subr.mxu0 %v1074
      %1925 = vmatpush1.msra.mxu0 %v1073
      %1926 = vmatprep.subr.mxu0 %v1082
      %1927 = vmatpush1.msra.mxu0 %v1081
      %1928 = vmatprep.subr.mxu0 %v1090
      %1929 = vmatpush1.msra.mxu0 %v1089
      %1930 = vmatprep.subr.mxu0 %v1098
      %1931 = vmatpush1.msra.mxu0 %v1097
      %1932 = vmatprep.subr.mxu0 %v1106
      %1933 = vmatpush1.msra.mxu0 %v1105
      %1934 = vmatprep.subr.mxu0 %v1114
      %1935 = vmatpush1.msra.mxu0 %v1113
      %1936 = vmatprep.subr.mxu0 %v1122
      %1937 = vmatpush1.msra.mxu0 %v1121
      %1938 = vmatprep.subr.mxu0 %v1130
      %1939 = vmatpush1.msra.mxu0 %v1129
      %1940 = vmatprep.subr.mxu0 %v1138
      %1941 = vmatpush1.msra.mxu0 %v1137
      %1942 = vmatprep.subr.mxu0 %v1146
      %1943 = vmatpush1.msra.mxu0 %v1145
      %1944 = vmatprep.subr.mxu0 %v1154
      %1945 = vmatpush1.msra.mxu0 %v1153
      %1946 = vmatprep.subr.mxu0 %v1162
      %1947 = vmatpush1.msra.mxu0 %v1161
      %1948 = vmatprep.subr.mxu0 %v1170
      %1949 = vmatpush1.msra.mxu0 %v1169
      %1950 = vmatprep.subr.mxu0 %v1178
      %1951 = vmatpush1.msra.mxu0 %v1177
      %1952 = vmatprep.subr.mxu0 %v1186
      %1953 = vmatpush1.msra.mxu0 %v1185
      %1954 = vmatprep.subr.mxu0 %v1194
      %1955 = vmatpush1.msra.mxu0 %v1193
      %1956 = vmatprep.subr.mxu0 %v1202
      %1957 = vmatpush1.msra.mxu0 %v1201
      %1958 = vmatprep.subr.mxu0 %v1210
      %1959 = vmatpush1.msra.mxu0 %v1209
      %1960 = vmatprep.subr.mxu0 %v1218
      %1961 = vmatpush1.msra.mxu0 %v1217
      %1962 = vmatprep.subr.mxu0 %v1226
      %1963 = vmatpush1.msra.mxu0 %v1225
      %1964 = vmatprep.subr.mxu0 %v1234
      %1965 = vmatpush1.msra.mxu0 %v1233
      %1966 = vmatprep.subr.mxu0 %v1242
      %1967 = vmatpush1.msra.mxu0 %v1241
      %1968 = vmatprep.subr.mxu0 %v1250
      %1969 = vmatpush1.msra.mxu0 %v1249
      %1970 = vmatprep.subr.mxu0 %v1258
      %1971 = vmatpush1.msra.mxu0 %v1257
      %1972 = vmatprep.subr.mxu0 %v1266
      %1973 = vmatpush1.msra.mxu0 %v1265
      %1974 = vmatprep.subr.mxu0 %v1274
      %1975 = vmatpush1.msra.mxu0 %v1273
      %1976 = vmatprep.subr.mxu0 %v1282
      %1977 = vmatpush1.msra.mxu0 %v1281
      %1978 = vmatprep.mubr.f32.mxu0 %v772
      %1979 = vmatmul.mubr.f32.gmra.mrb[0].mxu0 %v771
      %v1980 = vpop.f32.mrb[0].mxu0
      %v1981 = vadd.f32 %v1910, %v1980
      %v1982 = vpop.f32.mrb[0].mxu0
      %v1983 = vadd.f32 %v1912, %v1982
      %1984 = vdwg.mxu0
      %1985 = vmatprep.subr.mxu0 %v1290
      %1986 = vmatpush1.msra.mxu0 %v1289
      %1987 = vmatprep.subr.mxu0 %v1298
      %1988 = vmatpush1.msra.mxu0 %v1297
      %1989 = vmatprep.subr.mxu0 %v1306
      %1990 = vmatpush1.msra.mxu0 %v1305
      %1991 = vmatprep.subr.mxu0 %v1314
      %1992 = vmatpush1.msra.mxu0 %v1313
      %1993 = vmatprep.subr.mxu0 %v1322
      %1994 = vmatpush1.msra.mxu0 %v1321
      %1995 = vmatprep.subr.mxu0 %v1330
      %1996 = vmatpush1.msra.mxu0 %v1329
      %1997 = vmatprep.subr.mxu0 %v1338
      %1998 = vmatpush1.msra.mxu0 %v1337
      %1999 = vmatprep.subr.mxu0 %v1346
      %2000 = vmatpush1.msra.mxu0 %v1345
      %2001 = vmatprep.subr.mxu0 %v1354
      %2002 = vmatpush1.msra.mxu0 %v1353
      %2003 = vmatprep.subr.mxu0 %v1362
      %2004 = vmatpush1.msra.mxu0 %v1361
      %2005 = vmatprep.subr.mxu0 %v1370
      %2006 = vmatpush1.msra.mxu0 %v1369
      %2007 = vmatprep.subr.mxu0 %v1378
      %2008 = vmatpush1.msra.mxu0 %v1377
      %2009 = vmatprep.subr.mxu0 %v1386
      %2010 = vmatpush1.msra.mxu0 %v1385
      %2011 = vmatprep.subr.mxu0 %v1394
      %2012 = vmatpush1.msra.mxu0 %v1393
      %2013 = vmatprep.subr.mxu0 %v1402
      %2014 = vmatpush1.msra.mxu0 %v1401
      %2015 = vmatprep.subr.mxu0 %v1410
      %2016 = vmatpush1.msra.mxu0 %v1409
      %2017 = vmatprep.subr.mxu0 %v1418
      %2018 = vmatpush1.msra.mxu0 %v1417
      %2019 = vmatprep.subr.mxu0 %v1426
      %2020 = vmatpush1.msra.mxu0 %v1425
      %2021 = vmatprep.subr.mxu0 %v1434
      %2022 = vmatpush1.msra.mxu0 %v1433
      %2023 = vmatprep.subr.mxu0 %v1442
      %2024 = vmatpush1.msra.mxu0 %v1441
      %2025 = vmatprep.subr.mxu0 %v1450
      %2026 = vmatpush1.msra.mxu0 %v1449
      %2027 = vmatprep.subr.mxu0 %v1458
      %2028 = vmatpush1.msra.mxu0 %v1457
      %2029 = vmatprep.subr.mxu0 %v1466
      %2030 = vmatpush1.msra.mxu0 %v1465
      %2031 = vmatprep.subr.mxu0 %v1474
      %2032 = vmatpush1.msra.mxu0 %v1473
      %2033 = vmatprep.subr.mxu0 %v1482
      %2034 = vmatpush1.msra.mxu0 %v1481
      %2035 = vmatprep.subr.mxu0 %v1490
      %2036 = vmatpush1.msra.mxu0 %v1489
      %2037 = vmatprep.subr.mxu0 %v1498
      %2038 = vmatpush1.msra.mxu0 %v1497
      %2039 = vmatprep.subr.mxu0 %v1506
      %2040 = vmatpush1.msra.mxu0 %v1505
      %2041 = vmatprep.subr.mxu0 %v1514
      %2042 = vmatpush1.msra.mxu0 %v1513
      %2043 = vmatprep.subr.mxu0 %v1522
      %2044 = vmatpush1.msra.mxu0 %v1521
      %2045 = vmatprep.subr.mxu0 %v1530
      %2046 = vmatpush1.msra.mxu0 %v1529
      %2047 = vmatprep.subr.mxu0 %v1538
      %2048 = vmatpush1.msra.mxu0 %v1537
      %2049 = vmatprep.mubr.f32.mxu0 %v774
      %2050 = vmatmul.mubr.f32.gmra.mrb[0].mxu0 %v773
      %v2051 = vpop.f32.mrb[0].mxu0
      %v2052 = vadd.f32 %v1981, %v2051
      %v2053 = vpop.f32.mrb[0].mxu0
      %v2054 = vadd.f32 %v1983, %v2053
      %2055 = vdwg.mxu0
      %2056 = vmatprep.subr.mxu0 %v1546
      %2057 = vmatpush1.msra.mxu0 %v1545
      %2058 = vmatprep.subr.mxu0 %v1554
      %2059 = vmatpush1.msra.mxu0 %v1553
      %2060 = vmatprep.subr.mxu0 %v1562
      %2061 = vmatpush1.msra.mxu0 %v1561
      %2062 = vmatprep.subr.mxu0 %v1570
      %2063 = vmatpush1.msra.mxu0 %v1569
      %2064 = vmatprep.subr.mxu0 %v1578
      %2065 = vmatpush1.msra.mxu0 %v1577
      %2066 = vmatprep.subr.mxu0 %v1586
      %2067 = vmatpush1.msra.mxu0 %v1585
      %2068 = vmatprep.subr.mxu0 %v1594
      %2069 = vmatpush1.msra.mxu0 %v1593
      %2070 = vmatprep.subr.mxu0 %v1602
      %2071 = vmatpush1.msra.mxu0 %v1601
      %2072 = vmatprep.subr.mxu0 %v1610
      %2073 = vmatpush1.msra.mxu0 %v1609
      %2074 = vmatprep.subr.mxu0 %v1618
      %2075 = vmatpush1.msra.mxu0 %v1617
      %2076 = vmatprep.subr.mxu0 %v1626
      %2077 = vmatpush1.msra.mxu0 %v1625
      %2078 = vmatprep.subr.mxu0 %v1634
      %2079 = vmatpush1.msra.mxu0 %v1633
      %2080 = vmatprep.subr.mxu0 %v1642
      %2081 = vmatpush1.msra.mxu0 %v1641
      %2082 = vmatprep.subr.mxu0 %v1650
      %2083 = vmatpush1.msra.mxu0 %v1649
      %2084 = vmatprep.subr.mxu0 %v1658
      %2085 = vmatpush1.msra.mxu0 %v1657
      %2086 = vmatprep.subr.mxu0 %v1666
      %2087 = vmatpush1.msra.mxu0 %v1665
      %2088 = vmatprep.subr.mxu0 %v1674
      %2089 = vmatpush1.msra.mxu0 %v1673
      %2090 = vmatprep.subr.mxu0 %v1682
      %2091 = vmatpush1.msra.mxu0 %v1681
      %2092 = vmatprep.subr.mxu0 %v1690
      %2093 = vmatpush1.msra.mxu0 %v1689
      %2094 = vmatprep.subr.mxu0 %v1698
      %2095 = vmatpush1.msra.mxu0 %v1697
      %2096 = vmatprep.subr.mxu0 %v1706
      %2097 = vmatpush1.msra.mxu0 %v1705
      %2098 = vmatprep.subr.mxu0 %v1714
      %2099 = vmatpush1.msra.mxu0 %v1713
      %2100 = vmatprep.subr.mxu0 %v1722
      %2101 = vmatpush1.msra.mxu0 %v1721
      %2102 = vmatprep.subr.mxu0 %v1730
      %2103 = vmatpush1.msra.mxu0 %v1729
      %2104 = vmatprep.subr.mxu0 %v1738
      %2105 = vmatpush1.msra.mxu0 %v1737
      %2106 = vmatprep.subr.mxu0 %v1746
      %2107 = vmatpush1.msra.mxu0 %v1745
      %2108 = vmatprep.subr.mxu0 %v1754
      %2109 = vmatpush1.msra.mxu0 %v1753
      %2110 = vmatprep.subr.mxu0 %v1762
      %2111 = vmatpush1.msra.mxu0 %v1761
      %2112 = vmatprep.subr.mxu0 %v1770
      %2113 = vmatpush1.msra.mxu0 %v1769
      %2114 = vmatprep.subr.mxu0 %v1778
      %2115 = vmatpush1.msra.mxu0 %v1777
      %2116 = vmatprep.subr.mxu0 %v1786
      %2117 = vmatpush1.msra.mxu0 %v1785
      %2118 = vmatprep.subr.mxu0 %v1794
      %2119 = vmatpush1.msra.mxu0 %v1793
      %2120 = vmatprep.mubr.f32.mxu0 %v776
      %2121 = vmatmul.mubr.f32.gmra.mrb[0].mxu0 %v775
      %v2122 = vpop.f32.mrb[0].mxu0
      %v2123 = vadd.f32 %v2052, %v2122
      %v2124 = vpop.f32.mrb[0].mxu0
      %v2125 = vadd.f32 %v2054, %v2124
      %2126 = vdwg.mxu0
      %2127 = vmatprep.subr.mxu0 %v780
      %2128 = vmatpush1.msra.mxu0 %v779
      %2129 = vmatprep.subr.mxu0 %v788
      %2130 = vmatpush1.msra.mxu0 %v787
      %2131 = vmatprep.subr.mxu0 %v796
      %2132 = vmatpush1.msra.mxu0 %v795
      %2133 = vmatprep.subr.mxu0 %v804
      %2134 = vmatpush1.msra.mxu0 %v803
      %2135 = vmatprep.subr.mxu0 %v812
      %2136 = vmatpush1.msra.mxu0 %v811
      %2137 = vmatprep.subr.mxu0 %v820
      %2138 = vmatpush1.msra.mxu0 %v819
      %2139 = vmatprep.subr.mxu0 %v828
      %2140 = vmatpush1.msra.mxu0 %v827
      %2141 = vmatprep.subr.mxu0 %v836
      %2142 = vmatpush1.msra.mxu0 %v835
      %2143 = vmatprep.subr.mxu0 %v844
      %2144 = vmatpush1.msra.mxu0 %v843
      %2145 = vmatprep.subr.mxu0 %v852
      %2146 = vmatpush1.msra.mxu0 %v851
      %2147 = vmatprep.subr.mxu0 %v860
      %2148 = vmatpush1.msra.mxu0 %v859
      %2149 = vmatprep.subr.mxu0 %v868
      %2150 = vmatpush1.msra.mxu0 %v867
      %2151 = vmatprep.subr.mxu0 %v876
      %2152 = vmatpush1.msra.mxu0 %v875
      %2153 = vmatprep.subr.mxu0 %v884
      %2154 = vmatpush1.msra.mxu0 %v883
      %2155 = vmatprep.subr.mxu0 %v892
      %2156 = vmatpush1.msra.mxu0 %v891
      %2157 = vmatprep.subr.mxu0 %v900
      %2158 = vmatpush1.msra.mxu0 %v899
      %2159 = vmatprep.subr.mxu0 %v908
      %2160 = vmatpush1.msra.mxu0 %v907
      %2161 = vmatprep.subr.mxu0 %v916
      %2162 = vmatpush1.msra.mxu0 %v915
      %2163 = vmatprep.subr.mxu0 %v924
      %2164 = vmatpush1.msra.mxu0 %v923
      %2165 = vmatprep.subr.mxu0 %v932
      %2166 = vmatpush1.msra.mxu0 %v931
      %2167 = vmatprep.subr.mxu0 %v940
      %2168 = vmatpush1.msra.mxu0 %v939
      %2169 = vmatprep.subr.mxu0 %v948
      %2170 = vmatpush1.msra.mxu0 %v947
      %2171 = vmatprep.subr.mxu0 %v956
      %2172 = vmatpush1.msra.mxu0 %v955
      %2173 = vmatprep.subr.mxu0 %v964
      %2174 = vmatpush1.msra.mxu0 %v963
      %2175 = vmatprep.subr.mxu0 %v972
      %2176 = vmatpush1.msra.mxu0 %v971
      %2177 = vmatprep.subr.mxu0 %v980
      %2178 = vmatpush1.msra.mxu0 %v979
      %2179 = vmatprep.subr.mxu0 %v988
      %2180 = vmatpush1.msra.mxu0 %v987
      %2181 = vmatprep.subr.mxu0 %v996
      %2182 = vmatpush1.msra.mxu0 %v995
      %2183 = vmatprep.subr.mxu0 %v1004
      %2184 = vmatpush1.msra.mxu0 %v1003
      %2185 = vmatprep.subr.mxu0 %v1012
      %2186 = vmatpush1.msra.mxu0 %v1011
      %2187 = vmatprep.subr.mxu0 %v1020
      %2188 = vmatpush1.msra.mxu0 %v1019
      %2189 = vmatprep.subr.mxu0 %v1028
      %2190 = vmatpush1.msra.mxu0 %v1027
      %2191 = vmatprep.mubr.f32.mxu0 %v770
      %2192 = vmatmul.mubr.f32.gmra.mrb[0].mxu0 %v769
      %v2193 = vpop.f32.mrb[0].mxu0
      %v2194 = vadd.f32 %v1814, %v2193
      %v2195 = vpop.f32.mrb[0].mxu0
      %v2196 = vadd.f32 %v1818, %v2195
      %2197 = vdwg.mxu0
      %2198 = vmatprep.subr.mxu0 %v1036
      %2199 = vmatpush1.msra.mxu0 %v1035
      %2200 = vmatprep.subr.mxu0 %v1044
      %2201 = vmatpush1.msra.mxu0 %v1043
      %2202 = vmatprep.subr.mxu0 %v1052
      %2203 = vmatpush1.msra.mxu0 %v1051
      %2204 = vmatprep.subr.mxu0 %v1060
      %2205 = vmatpush1.msra.mxu0 %v1059
      %2206 = vmatprep.subr.mxu0 %v1068
      %2207 = vmatpush1.msra.mxu0 %v1067
      %2208 = vmatprep.subr.mxu0 %v1076
      %2209 = vmatpush1.msra.mxu0 %v1075
      %2210 = vmatprep.subr.mxu0 %v1084
      %2211 = vmatpush1.msra.mxu0 %v1083
      %2212 = vmatprep.subr.mxu0 %v1092
      %2213 = vmatpush1.msra.mxu0 %v1091
      %2214 = vmatprep.subr.mxu0 %v1100
      %2215 = vmatpush1.msra.mxu0 %v1099
      %2216 = vmatprep.subr.mxu0 %v1108
      %2217 = vmatpush1.msra.mxu0 %v1107
      %2218 = vmatprep.subr.mxu0 %v1116
      %2219 = vmatpush1.msra.mxu0 %v1115
      %2220 = vmatprep.subr.mxu0 %v1124
      %2221 = vmatpush1.msra.mxu0 %v1123
      %2222 = vmatprep.subr.mxu0 %v1132
      %2223 = vmatpush1.msra.mxu0 %v1131
      %2224 = vmatprep.subr.mxu0 %v1140
      %2225 = vmatpush1.msra.mxu0 %v1139
      %2226 = vmatprep.subr.mxu0 %v1148
      %2227 = vmatpush1.msra.mxu0 %v1147
      %2228 = vmatprep.subr.mxu0 %v1156
      %2229 = vmatpush1.msra.mxu0 %v1155
      %2230 = vmatprep.subr.mxu0 %v1164
      %2231 = vmatpush1.msra.mxu0 %v1163
      %2232 = vmatprep.subr.mxu0 %v1172
      %2233 = vmatpush1.msra.mxu0 %v1171
      %2234 = vmatprep.subr.mxu0 %v1180
      %2235 = vmatpush1.msra.mxu0 %v1179
      %2236 = vmatprep.subr.mxu0 %v1188
      %2237 = vmatpush1.msra.mxu0 %v1187
      %2238 = vmatprep.subr.mxu0 %v1196
      %2239 = vmatpush1.msra.mxu0 %v1195
      %2240 = vmatprep.subr.mxu0 %v1204
      %2241 = vmatpush1.msra.mxu0 %v1203
      %2242 = vmatprep.subr.mxu0 %v1212
      %2243 = vmatpush1.msra.mxu0 %v1211
      %2244 = vmatprep.subr.mxu0 %v1220
      %2245 = vmatpush1.msra.mxu0 %v1219
      %2246 = vmatprep.subr.mxu0 %v1228
      %2247 = vmatpush1.msra.mxu0 %v1227
      %2248 = vmatprep.subr.mxu0 %v1236
      %2249 = vmatpush1.msra.mxu0 %v1235
      %2250 = vmatprep.subr.mxu0 %v1244
      %2251 = vmatpush1.msra.mxu0 %v1243
      %2252 = vmatprep.subr.mxu0 %v1252
      %2253 = vmatpush1.msra.mxu0 %v1251
      %2254 = vmatprep.subr.mxu0 %v1260
      %2255 = vmatpush1.msra.mxu0 %v1259
      %2256 = vmatprep.subr.mxu0 %v1268
      %2257 = vmatpush1.msra.mxu0 %v1267
      %2258 = vmatprep.subr.mxu0 %v1276
      %2259 = vmatpush1.msra.mxu0 %v1275
      %2260 = vmatprep.subr.mxu0 %v1284
      %2261 = vmatpush1.msra.mxu0 %v1283
      %2262 = vmatprep.mubr.f32.mxu0 %v772
      %2263 = vmatmul.mubr.f32.gmra.mrb[0].mxu0 %v771
      %v2264 = vpop.f32.mrb[0].mxu0
      %v2265 = vadd.f32 %v2194, %v2264
      %v2266 = vpop.f32.mrb[0].mxu0
      %v2267 = vadd.f32 %v2196, %v2266
      %2268 = vdwg.mxu0
      %2269 = vmatprep.subr.mxu0 %v1292
      %2270 = vmatpush1.msra.mxu0 %v1291
      %2271 = vmatprep.subr.mxu0 %v1300
      %2272 = vmatpush1.msra.mxu0 %v1299
      %2273 = vmatprep.subr.mxu0 %v1308
      %2274 = vmatpush1.msra.mxu0 %v1307
      %2275 = vmatprep.subr.mxu0 %v1316
      %2276 = vmatpush1.msra.mxu0 %v1315
      %2277 = vmatprep.subr.mxu0 %v1324
      %2278 = vmatpush1.msra.mxu0 %v1323
      %2279 = vmatprep.subr.mxu0 %v1332
      %2280 = vmatpush1.msra.mxu0 %v1331
      %2281 = vmatprep.subr.mxu0 %v1340
      %2282 = vmatpush1.msra.mxu0 %v1339
      %2283 = vmatprep.subr.mxu0 %v1348
      %2284 = vmatpush1.msra.mxu0 %v1347
      %2285 = vmatprep.subr.mxu0 %v1356
      %2286 = vmatpush1.msra.mxu0 %v1355
      %2287 = vmatprep.subr.mxu0 %v1364
      %2288 = vmatpush1.msra.mxu0 %v1363
      %2289 = vmatprep.subr.mxu0 %v1372
      %2290 = vmatpush1.msra.mxu0 %v1371
      %2291 = vmatprep.subr.mxu0 %v1380
      %2292 = vmatpush1.msra.mxu0 %v1379
      %2293 = vmatprep.subr.mxu0 %v1388
      %2294 = vmatpush1.msra.mxu0 %v1387
      %2295 = vmatprep.subr.mxu0 %v1396
      %2296 = vmatpush1.msra.mxu0 %v1395
      %2297 = vmatprep.subr.mxu0 %v1404
      %2298 = vmatpush1.msra.mxu0 %v1403
      %2299 = vmatprep.subr.mxu0 %v1412
      %2300 = vmatpush1.msra.mxu0 %v1411
      %2301 = vmatprep.subr.mxu0 %v1420
      %2302 = vmatpush1.msra.mxu0 %v1419
      %2303 = vmatprep.subr.mxu0 %v1428
      %2304 = vmatpush1.msra.mxu0 %v1427
      %2305 = vmatprep.subr.mxu0 %v1436
      %2306 = vmatpush1.msra.mxu0 %v1435
      %2307 = vmatprep.subr.mxu0 %v1444
      %2308 = vmatpush1.msra.mxu0 %v1443
      %2309 = vmatprep.subr.mxu0 %v1452
      %2310 = vmatpush1.msra.mxu0 %v1451
      %2311 = vmatprep.subr.mxu0 %v1460
      %2312 = vmatpush1.msra.mxu0 %v1459
      %2313 = vmatprep.subr.mxu0 %v1468
      %2314 = vmatpush1.msra.mxu0 %v1467
      %2315 = vmatprep.subr.mxu0 %v1476
      %2316 = vmatpush1.msra.mxu0 %v1475
      %2317 = vmatprep.subr.mxu0 %v1484
      %2318 = vmatpush1.msra.mxu0 %v1483
      %2319 = vmatprep.subr.mxu0 %v1492
      %2320 = vmatpush1.msra.mxu0 %v1491
      %2321 = vmatprep.subr.mxu0 %v1500
      %2322 = vmatpush1.msra.mxu0 %v1499
      %2323 = vmatprep.subr.mxu0 %v1508
      %2324 = vmatpush1.msra.mxu0 %v1507
      %2325 = vmatprep.subr.mxu0 %v1516
      %2326 = vmatpush1.msra.mxu0 %v1515
      %2327 = vmatprep.subr.mxu0 %v1524
      %2328 = vmatpush1.msra.mxu0 %v1523
      %2329 = vmatprep.subr.mxu0 %v1532
      %2330 = vmatpush1.msra.mxu0 %v1531
      %2331 = vmatprep.subr.mxu0 %v1540
      %2332 = vmatpush1.msra.mxu0 %v1539
      %2333 = vmatprep.mubr.f32.mxu0 %v774
      %2334 = vmatmul.mubr.f32.gmra.mrb[0].mxu0 %v773
      %v2335 = vpop.f32.mrb[0].mxu0
      %v2336 = vadd.f32 %v2265, %v2335
      %v2337 = vpop.f32.mrb[0].mxu0
      %v2338 = vadd.f32 %v2267, %v2337
      %2339 = vdwg.mxu0
      %2340 = vmatprep.subr.mxu0 %v1548
      %2341 = vmatpush1.msra.mxu0 %v1547
      %2342 = vmatprep.subr.mxu0 %v1556
      %2343 = vmatpush1.msra.mxu0 %v1555
      %2344 = vmatprep.subr.mxu0 %v1564
      %2345 = vmatpush1.msra.mxu0 %v1563
      %2346 = vmatprep.subr.mxu0 %v1572
      %2347 = vmatpush1.msra.mxu0 %v1571
      %2348 = vmatprep.subr.mxu0 %v1580
      %2349 = vmatpush1.msra.mxu0 %v1579
      %2350 = vmatprep.subr.mxu0 %v1588
      %2351 = vmatpush1.msra.mxu0 %v1587
      %2352 = vmatprep.subr.mxu0 %v1596
      %2353 = vmatpush1.msra.mxu0 %v1595
      %2354 = vmatprep.subr.mxu0 %v1604
      %2355 = vmatpush1.msra.mxu0 %v1603
      %2356 = vmatprep.subr.mxu0 %v1612
      %2357 = vmatpush1.msra.mxu0 %v1611
      %2358 = vmatprep.subr.mxu0 %v1620
      %2359 = vmatpush1.msra.mxu0 %v1619
      %2360 = vmatprep.subr.mxu0 %v1628
      %2361 = vmatpush1.msra.mxu0 %v1627
      %2362 = vmatprep.subr.mxu0 %v1636
      %2363 = vmatpush1.msra.mxu0 %v1635
      %2364 = vmatprep.subr.mxu0 %v1644
      %2365 = vmatpush1.msra.mxu0 %v1643
      %2366 = vmatprep.subr.mxu0 %v1652
      %2367 = vmatpush1.msra.mxu0 %v1651
      %2368 = vmatprep.subr.mxu0 %v1660
      %2369 = vmatpush1.msra.mxu0 %v1659
      %2370 = vmatprep.subr.mxu0 %v1668
      %2371 = vmatpush1.msra.mxu0 %v1667
      %2372 = vmatprep.subr.mxu0 %v1676
      %2373 = vmatpush1.msra.mxu0 %v1675
      %2374 = vmatprep.subr.mxu0 %v1684
      %2375 = vmatpush1.msra.mxu0 %v1683
      %2376 = vmatprep.subr.mxu0 %v1692
      %2377 = vmatpush1.msra.mxu0 %v1691
      %2378 = vmatprep.subr.mxu0 %v1700
      %2379 = vmatpush1.msra.mxu0 %v1699
      %2380 = vmatprep.subr.mxu0 %v1708
      %2381 = vmatpush1.msra.mxu0 %v1707
      %2382 = vmatprep.subr.mxu0 %v1716
      %2383 = vmatpush1.msra.mxu0 %v1715
      %2384 = vmatprep.subr.mxu0 %v1724
      %2385 = vmatpush1.msra.mxu0 %v1723
      %2386 = vmatprep.subr.mxu0 %v1732
      %2387 = vmatpush1.msra.mxu0 %v1731
      %2388 = vmatprep.subr.mxu0 %v1740
      %2389 = vmatpush1.msra.mxu0 %v1739
      %2390 = vmatprep.subr.mxu0 %v1748
      %2391 = vmatpush1.msra.mxu0 %v1747
      %2392 = vmatprep.subr.mxu0 %v1756
      %2393 = vmatpush1.msra.mxu0 %v1755
      %2394 = vmatprep.subr.mxu0 %v1764
      %2395 = vmatpush1.msra.mxu0 %v1763
      %2396 = vmatprep.subr.mxu0 %v1772
      %2397 = vmatpush1.msra.mxu0 %v1771
      %2398 = vmatprep.subr.mxu0 %v1780
      %2399 = vmatpush1.msra.mxu0 %v1779
      %2400 = vmatprep.subr.mxu0 %v1788
      %2401 = vmatpush1.msra.mxu0 %v1787
      %2402 = vmatprep.subr.mxu0 %v1796
      %2403 = vmatpush1.msra.mxu0 %v1795
      %2404 = vmatprep.mubr.f32.mxu0 %v776
      %2405 = vmatmul.mubr.f32.gmra.mrb[0].mxu0 %v775
      %v2406 = vpop.f32.mrb[0].mxu0
      %v2407 = vadd.f32 %v2336, %v2406
      %v2408 = vpop.f32.mrb[0].mxu0
      %v2409 = vadd.f32 %v2338, %v2408
      %2410 = vdwg.mxu0
      %2411 = vmatprep.subr.mxu0 %v782
      %2412 = vmatpush1.msra.mxu0 %v781
      %2413 = vmatprep.subr.mxu0 %v790
      %2414 = vmatpush1.msra.mxu0 %v789
      %2415 = vmatprep.subr.mxu0 %v798
      %2416 = vmatpush1.msra.mxu0 %v797
      %2417 = vmatprep.subr.mxu0 %v806
      %2418 = vmatpush1.msra.mxu0 %v805
      %2419 = vmatprep.subr.mxu0 %v814
      %2420 = vmatpush1.msra.mxu0 %v813
      %2421 = vmatprep.subr.mxu0 %v822
      %2422 = vmatpush1.msra.mxu0 %v821
      %2423 = vmatprep.subr.mxu0 %v830
      %2424 = vmatpush1.msra.mxu0 %v829
      %2425 = vmatprep.subr.mxu0 %v838
      %2426 = vmatpush1.msra.mxu0 %v837
      %2427 = vmatprep.subr.mxu0 %v846
      %2428 = vmatpush1.msra.mxu0 %v845
      %2429 = vmatprep.subr.mxu0 %v854
      %2430 = vmatpush1.msra.mxu0 %v853
      %2431 = vmatprep.subr.mxu0 %v862
      %2432 = vmatpush1.msra.mxu0 %v861
      %2433 = vmatprep.subr.mxu0 %v870
      %2434 = vmatpush1.msra.mxu0 %v869
      %2435 = vmatprep.subr.mxu0 %v878
      %2436 = vmatpush1.msra.mxu0 %v877
      %2437 = vmatprep.subr.mxu0 %v886
      %2438 = vmatpush1.msra.mxu0 %v885
      %2439 = vmatprep.subr.mxu0 %v894
      %2440 = vmatpush1.msra.mxu0 %v893
      %2441 = vmatprep.subr.mxu0 %v902
      %2442 = vmatpush1.msra.mxu0 %v901
      %2443 = vmatprep.subr.mxu0 %v910
      %2444 = vmatpush1.msra.mxu0 %v909
      %2445 = vmatprep.subr.mxu0 %v918
      %2446 = vmatpush1.msra.mxu0 %v917
      %2447 = vmatprep.subr.mxu0 %v926
      %2448 = vmatpush1.msra.mxu0 %v925
      %2449 = vmatprep.subr.mxu0 %v934
      %2450 = vmatpush1.msra.mxu0 %v933
      %2451 = vmatprep.subr.mxu0 %v942
      %2452 = vmatpush1.msra.mxu0 %v941
      %2453 = vmatprep.subr.mxu0 %v950
      %2454 = vmatpush1.msra.mxu0 %v949
      %2455 = vmatprep.subr.mxu0 %v958
      %2456 = vmatpush1.msra.mxu0 %v957
      %2457 = vmatprep.subr.mxu0 %v966
      %2458 = vmatpush1.msra.mxu0 %v965
      %2459 = vmatprep.subr.mxu0 %v974
      %2460 = vmatpush1.msra.mxu0 %v973
      %2461 = vmatprep.subr.mxu0 %v982
      %2462 = vmatpush1.msra.mxu0 %v981
      %2463 = vmatprep.subr.mxu0 %v990
      %2464 = vmatpush1.msra.mxu0 %v989
      %2465 = vmatprep.subr.mxu0 %v998
      %2466 = vmatpush1.msra.mxu0 %v997
      %2467 = vmatprep.subr.mxu0 %v1006
      %2468 = vmatpush1.msra.mxu0 %v1005
      %2469 = vmatprep.subr.mxu0 %v1014
      %2470 = vmatpush1.msra.mxu0 %v1013
      %2471 = vmatprep.subr.mxu0 %v1022
      %2472 = vmatpush1.msra.mxu0 %v1021
      %2473 = vmatprep.subr.mxu0 %v1030
      %2474 = vmatpush1.msra.mxu0 %v1029
      %2475 = vmatprep.mubr.f32.mxu0 %v770
      %2476 = vmatmul.mubr.f32.gmra.mrb[0].mxu0 %v769
      %v2477 = vpop.f32.mrb[0].mxu0
      %v2478 = vadd.f32 %v1822, %v2477
      %v2479 = vpop.f32.mrb[0].mxu0
      %v2480 = vadd.f32 %v1826, %v2479
      %2481 = vdwg.mxu0
      %2482 = vmatprep.subr.mxu0 %v1038
      %2483 = vmatpush1.msra.mxu0 %v1037
      %2484 = vmatprep.subr.mxu0 %v1046
      %2485 = vmatpush1.msra.mxu0 %v1045
      %2486 = vmatprep.subr.mxu0 %v1054
      %2487 = vmatpush1.msra.mxu0 %v1053
      %2488 = vmatprep.subr.mxu0 %v1062
      %2489 = vmatpush1.msra.mxu0 %v1061
      %2490 = vmatprep.subr.mxu0 %v1070
      %2491 = vmatpush1.msra.mxu0 %v1069
      %2492 = vmatprep.subr.mxu0 %v1078
      %2493 = vmatpush1.msra.mxu0 %v1077
      %2494 = vmatprep.subr.mxu0 %v1086
      %2495 = vmatpush1.msra.mxu0 %v1085
      %2496 = vmatprep.subr.mxu0 %v1094
      %2497 = vmatpush1.msra.mxu0 %v1093
      %2498 = vmatprep.subr.mxu0 %v1102
      %2499 = vmatpush1.msra.mxu0 %v1101
      %2500 = vmatprep.subr.mxu0 %v1110
      %2501 = vmatpush1.msra.mxu0 %v1109
      %2502 = vmatprep.subr.mxu0 %v1118
      %2503 = vmatpush1.msra.mxu0 %v1117
      %2504 = vmatprep.subr.mxu0 %v1126
      %2505 = vmatpush1.msra.mxu0 %v1125
      %2506 = vmatprep.subr.mxu0 %v1134
      %2507 = vmatpush1.msra.mxu0 %v1133
      %2508 = vmatprep.subr.mxu0 %v1142
      %2509 = vmatpush1.msra.mxu0 %v1141
      %2510 = vmatprep.subr.mxu0 %v1150
      %2511 = vmatpush1.msra.mxu0 %v1149
      %2512 = vmatprep.subr.mxu0 %v1158
      %2513 = vmatpush1.msra.mxu0 %v1157
      %2514 = vmatprep.subr.mxu0 %v1166
      %2515 = vmatpush1.msra.mxu0 %v1165
      %2516 = vmatprep.subr.mxu0 %v1174
      %2517 = vmatpush1.msra.mxu0 %v1173
      %2518 = vmatprep.subr.mxu0 %v1182
      %2519 = vmatpush1.msra.mxu0 %v1181
      %2520 = vmatprep.subr.mxu0 %v1190
      %2521 = vmatpush1.msra.mxu0 %v1189
      %2522 = vmatprep.subr.mxu0 %v1198
      %2523 = vmatpush1.msra.mxu0 %v1197
      %2524 = vmatprep.subr.mxu0 %v1206
      %2525 = vmatpush1.msra.mxu0 %v1205
      %2526 = vmatprep.subr.mxu0 %v1214
      %2527 = vmatpush1.msra.mxu0 %v1213
      %2528 = vmatprep.subr.mxu0 %v1222
      %2529 = vmatpush1.msra.mxu0 %v1221
      %2530 = vmatprep.subr.mxu0 %v1230
      %2531 = vmatpush1.msra.mxu0 %v1229
      %2532 = vmatprep.subr.mxu0 %v1238
      %2533 = vmatpush1.msra.mxu0 %v1237
      %2534 = vmatprep.subr.mxu0 %v1246
      %2535 = vmatpush1.msra.mxu0 %v1245
      %2536 = vmatprep.subr.mxu0 %v1254
      %2537 = vmatpush1.msra.mxu0 %v1253
      %2538 = vmatprep.subr.mxu0 %v1262
      %2539 = vmatpush1.msra.mxu0 %v1261
      %2540 = vmatprep.subr.mxu0 %v1270
      %2541 = vmatpush1.msra.mxu0 %v1269
      %2542 = vmatprep.subr.mxu0 %v1278
      %2543 = vmatpush1.msra.mxu0 %v1277
      %2544 = vmatprep.subr.mxu0 %v1286
      %2545 = vmatpush1.msra.mxu0 %v1285
      %2546 = vmatprep.mubr.f32.mxu0 %v772
      %2547 = vmatmul.mubr.f32.gmra.mrb[0].mxu0 %v771
      %v2548 = vpop.f32.mrb[0].mxu0
      %v2549 = vadd.f32 %v2478, %v2548
      %v2550 = vpop.f32.mrb[0].mxu0
      %v2551 = vadd.f32 %v2480, %v2550
      %2552 = vdwg.mxu0
      %2553 = vmatprep.subr.mxu0 %v1294
      %2554 = vmatpush1.msra.mxu0 %v1293
      %2555 = vmatprep.subr.mxu0 %v1302
      %2556 = vmatpush1.msra.mxu0 %v1301
      %2557 = vmatprep.subr.mxu0 %v1310
      %2558 = vmatpush1.msra.mxu0 %v1309
      %2559 = vmatprep.subr.mxu0 %v1318
      %2560 = vmatpush1.msra.mxu0 %v1317
      %2561 = vmatprep.subr.mxu0 %v1326
      %2562 = vmatpush1.msra.mxu0 %v1325
      %2563 = vmatprep.subr.mxu0 %v1334
      %2564 = vmatpush1.msra.mxu0 %v1333
      %2565 = vmatprep.subr.mxu0 %v1342
      %2566 = vmatpush1.msra.mxu0 %v1341
      %2567 = vmatprep.subr.mxu0 %v1350
      %2568 = vmatpush1.msra.mxu0 %v1349
      %2569 = vmatprep.subr.mxu0 %v1358
      %2570 = vmatpush1.msra.mxu0 %v1357
      %2571 = vmatprep.subr.mxu0 %v1366
      %2572 = vmatpush1.msra.mxu0 %v1365
      %2573 = vmatprep.subr.mxu0 %v1374
      %2574 = vmatpush1.msra.mxu0 %v1373
      %2575 = vmatprep.subr.mxu0 %v1382
      %2576 = vmatpush1.msra.mxu0 %v1381
      %2577 = vmatprep.subr.mxu0 %v1390
      %2578 = vmatpush1.msra.mxu0 %v1389
      %2579 = vmatprep.subr.mxu0 %v1398
      %2580 = vmatpush1.msra.mxu0 %v1397
      %2581 = vmatprep.subr.mxu0 %v1406
      %2582 = vmatpush1.msra.mxu0 %v1405
      %2583 = vmatprep.subr.mxu0 %v1414
      %2584 = vmatpush1.msra.mxu0 %v1413
      %2585 = vmatprep.subr.mxu0 %v1422
      %2586 = vmatpush1.msra.mxu0 %v1421
      %2587 = vmatprep.subr.mxu0 %v1430
      %2588 = vmatpush1.msra.mxu0 %v1429
      %2589 = vmatprep.subr.mxu0 %v1438
      %2590 = vmatpush1.msra.mxu0 %v1437
      %2591 = vmatprep.subr.mxu0 %v1446
      %2592 = vmatpush1.msra.mxu0 %v1445
      %2593 = vmatprep.subr.mxu0 %v1454
      %2594 = vmatpush1.msra.mxu0 %v1453
      %2595 = vmatprep.subr.mxu0 %v1462
      %2596 = vmatpush1.msra.mxu0 %v1461
      %2597 = vmatprep.subr.mxu0 %v1470
      %2598 = vmatpush1.msra.mxu0 %v1469
      %2599 = vmatprep.subr.mxu0 %v1478
      %2600 = vmatpush1.msra.mxu0 %v1477
      %2601 = vmatprep.subr.mxu0 %v1486
      %2602 = vmatpush1.msra.mxu0 %v1485
      %2603 = vmatprep.subr.mxu0 %v1494
      %2604 = vmatpush1.msra.mxu0 %v1493
      %2605 = vmatprep.subr.mxu0 %v1502
      %2606 = vmatpush1.msra.mxu0 %v1501
      %2607 = vmatprep.subr.mxu0 %v1510
      %2608 = vmatpush1.msra.mxu0 %v1509
      %2609 = vmatprep.subr.mxu0 %v1518
      %2610 = vmatpush1.msra.mxu0 %v1517
      %2611 = vmatprep.subr.mxu0 %v1526
      %2612 = vmatpush1.msra.mxu0 %v1525
      %2613 = vmatprep.subr.mxu0 %v1534
      %2614 = vmatpush1.msra.mxu0 %v1533
      %2615 = vmatprep.subr.mxu0 %v1542
      %2616 = vmatpush1.msra.mxu0 %v1541
      %2617 = vmatprep.mubr.f32.mxu0 %v774
      %2618 = vmatmul.mubr.f32.gmra.mrb[0].mxu0 %v773
      %v2619 = vpop.f32.mrb[0].mxu0
      %v2620 = vadd.f32 %v2549, %v2619
      %v2621 = vpop.f32.mrb[0].mxu0
      %v2622 = vadd.f32 %v2551, %v2621
      %2623 = vdwg.mxu0
      %2624 = vmatprep.subr.mxu0 %v1550
      %2625 = vmatpush1.msra.mxu0 %v1549
      %2626 = vmatprep.subr.mxu0 %v1558
      %2627 = vmatpush1.msra.mxu0 %v1557
      %2628 = vmatprep.subr.mxu0 %v1566
      %2629 = vmatpush1.msra.mxu0 %v1565
      %2630 = vmatprep.subr.mxu0 %v1574
      %2631 = vmatpush1.msra.mxu0 %v1573
      %2632 = vmatprep.subr.mxu0 %v1582
      %2633 = vmatpush1.msra.mxu0 %v1581
      %2634 = vmatprep.subr.mxu0 %v1590
      %2635 = vmatpush1.msra.mxu0 %v1589
      %2636 = vmatprep.subr.mxu0 %v1598
      %2637 = vmatpush1.msra.mxu0 %v1597
      %2638 = vmatprep.subr.mxu0 %v1606
      %2639 = vmatpush1.msra.mxu0 %v1605
      %2640 = vmatprep.subr.mxu0 %v1614
      %2641 = vmatpush1.msra.mxu0 %v1613
      %2642 = vmatprep.subr.mxu0 %v1622
      %2643 = vmatpush1.msra.mxu0 %v1621
      %2644 = vmatprep.subr.mxu0 %v1630
      %2645 = vmatpush1.msra.mxu0 %v1629
      %2646 = vmatprep.subr.mxu0 %v1638
      %2647 = vmatpush1.msra.mxu0 %v1637
      %2648 = vmatprep.subr.mxu0 %v1646
      %2649 = vmatpush1.msra.mxu0 %v1645
      %2650 = vmatprep.subr.mxu0 %v1654
      %2651 = vmatpush1.msra.mxu0 %v1653
      %2652 = vmatprep.subr.mxu0 %v1662
      %2653 = vmatpush1.msra.mxu0 %v1661
      %2654 = vmatprep.subr.mxu0 %v1670
      %2655 = vmatpush1.msra.mxu0 %v1669
      %2656 = vmatprep.subr.mxu0 %v1678
      %2657 = vmatpush1.msra.mxu0 %v1677
      %2658 = vmatprep.subr.mxu0 %v1686
      %2659 = vmatpush1.msra.mxu0 %v1685
      %2660 = vmatprep.subr.mxu0 %v1694
      %2661 = vmatpush1.msra.mxu0 %v1693
      %2662 = vmatprep.subr.mxu0 %v1702
      %2663 = vmatpush1.msra.mxu0 %v1701
      %2664 = vmatprep.subr.mxu0 %v1710
      %2665 = vmatpush1.msra.mxu0 %v1709
      %2666 = vmatprep.subr.mxu0 %v1718
      %2667 = vmatpush1.msra.mxu0 %v1717
      %2668 = vmatprep.subr.mxu0 %v1726
      %2669 = vmatpush1.msra.mxu0 %v1725
      %2670 = vmatprep.subr.mxu0 %v1734
      %2671 = vmatpush1.msra.mxu0 %v1733
      %2672 = vmatprep.subr.mxu0 %v1742
      %2673 = vmatpush1.msra.mxu0 %v1741
      %2674 = vmatprep.subr.mxu0 %v1750
      %2675 = vmatpush1.msra.mxu0 %v1749
      %2676 = vmatprep.subr.mxu0 %v1758
      %2677 = vmatpush1.msra.mxu0 %v1757
      %2678 = vmatprep.subr.mxu0 %v1766
      %2679 = vmatpush1.msra.mxu0 %v1765
      %2680 = vmatprep.subr.mxu0 %v1774
      %2681 = vmatpush1.msra.mxu0 %v1773
      %2682 = vmatprep.subr.mxu0 %v1782
      %2683 = vmatpush1.msra.mxu0 %v1781
      %2684 = vmatprep.subr.mxu0 %v1790
      %2685 = vmatpush1.msra.mxu0 %v1789
      %2686 = vmatprep.subr.mxu0 %v1798
      %2687 = vmatpush1.msra.mxu0 %v1797
      %2688 = vmatprep.mubr.f32.mxu0 %v776
      %2689 = vmatmul.mubr.f32.gmra.mrb[0].mxu0 %v775
      %v2690 = vpop.f32.mrb[0].mxu0
      %v2691 = vadd.f32 %v2620, %v2690
      %v2692 = vpop.f32.mrb[0].mxu0
      %v2693 = vadd.f32 %v2622, %v2692
      %2694 = vdwg.mxu0
      %2695 = vmatprep.subr.mxu0 %v784
      %2696 = vmatpush1.msra.mxu0 %v783
      %2697 = vmatprep.subr.mxu0 %v792
      %2698 = vmatpush1.msra.mxu0 %v791
      %2699 = vmatprep.subr.mxu0 %v800
      %2700 = vmatpush1.msra.mxu0 %v799
      %2701 = vmatprep.subr.mxu0 %v808
      %2702 = vmatpush1.msra.mxu0 %v807
      %2703 = vmatprep.subr.mxu0 %v816
      %2704 = vmatpush1.msra.mxu0 %v815
      %2705 = vmatprep.subr.mxu0 %v824
      %2706 = vmatpush1.msra.mxu0 %v823
      %2707 = vmatprep.subr.mxu0 %v832
      %2708 = vmatpush1.msra.mxu0 %v831
      %2709 = vmatprep.subr.mxu0 %v840
      %2710 = vmatpush1.msra.mxu0 %v839
      %2711 = vmatprep.subr.mxu0 %v848
      %2712 = vmatpush1.msra.mxu0 %v847
      %2713 = vmatprep.subr.mxu0 %v856
      %2714 = vmatpush1.msra.mxu0 %v855
      %2715 = vmatprep.subr.mxu0 %v864
      %2716 = vmatpush1.msra.mxu0 %v863
      %2717 = vmatprep.subr.mxu0 %v872
      %2718 = vmatpush1.msra.mxu0 %v871
      %2719 = vmatprep.subr.mxu0 %v880
      %2720 = vmatpush1.msra.mxu0 %v879
      %2721 = vmatprep.subr.mxu0 %v888
      %2722 = vmatpush1.msra.mxu0 %v887
      %2723 = vmatprep.subr.mxu0 %v896
      %2724 = vmatpush1.msra.mxu0 %v895
      %2725 = vmatprep.subr.mxu0 %v904
      %2726 = vmatpush1.msra.mxu0 %v903
      %2727 = vmatprep.subr.mxu0 %v912
      %2728 = vmatpush1.msra.mxu0 %v911
      %2729 = vmatprep.subr.mxu0 %v920
      %2730 = vmatpush1.msra.mxu0 %v919
      %2731 = vmatprep.subr.mxu0 %v928
      %2732 = vmatpush1.msra.mxu0 %v927
      %2733 = vmatprep.subr.mxu0 %v936
      %2734 = vmatpush1.msra.mxu0 %v935
      %2735 = vmatprep.subr.mxu0 %v944
      %2736 = vmatpush1.msra.mxu0 %v943
      %2737 = vmatprep.subr.mxu0 %v952
      %2738 = vmatpush1.msra.mxu0 %v951
      %2739 = vmatprep.subr.mxu0 %v960
      %2740 = vmatpush1.msra.mxu0 %v959
      %2741 = vmatprep.subr.mxu0 %v968
      %2742 = vmatpush1.msra.mxu0 %v967
      %2743 = vmatprep.subr.mxu0 %v976
      %2744 = vmatpush1.msra.mxu0 %v975
      %2745 = vmatprep.subr.mxu0 %v984
      %2746 = vmatpush1.msra.mxu0 %v983
      %2747 = vmatprep.subr.mxu0 %v992
      %2748 = vmatpush1.msra.mxu0 %v991
      %2749 = vmatprep.subr.mxu0 %v1000
      %2750 = vmatpush1.msra.mxu0 %v999
      %2751 = vmatprep.subr.mxu0 %v1008
      %2752 = vmatpush1.msra.mxu0 %v1007
      %2753 = vmatprep.subr.mxu0 %v1016
      %2754 = vmatpush1.msra.mxu0 %v1015
      %2755 = vmatprep.subr.mxu0 %v1024
      %2756 = vmatpush1.msra.mxu0 %v1023
      %2757 = vmatprep.subr.mxu0 %v1032
      %2758 = vmatpush1.msra.mxu0 %v1031
      %2759 = vmatprep.mubr.f32.mxu0 %v770
      %2760 = vmatmul.mubr.f32.gmra.mrb[0].mxu0 %v769
      %v2761 = vpop.f32.mrb[0].mxu0
      %v2762 = vadd.f32 %v1830, %v2761
      %v2763 = vpop.f32.mrb[0].mxu0
      %v2764 = vadd.f32 %v1834, %v2763
      %2765 = vdwg.mxu0
      %2766 = vmatprep.subr.mxu0 %v1040
      %2767 = vmatpush1.msra.mxu0 %v1039
      %2768 = vmatprep.subr.mxu0 %v1048
      %2769 = vmatpush1.msra.mxu0 %v1047
      %2770 = vmatprep.subr.mxu0 %v1056
      %2771 = vmatpush1.msra.mxu0 %v1055
      %2772 = vmatprep.subr.mxu0 %v1064
      %2773 = vmatpush1.msra.mxu0 %v1063
      %2774 = vmatprep.subr.mxu0 %v1072
      %2775 = vmatpush1.msra.mxu0 %v1071
      %2776 = vmatprep.subr.mxu0 %v1080
      %2777 = vmatpush1.msra.mxu0 %v1079
      %2778 = vmatprep.subr.mxu0 %v1088
      %2779 = vmatpush1.msra.mxu0 %v1087
      %2780 = vmatprep.subr.mxu0 %v1096
      %2781 = vmatpush1.msra.mxu0 %v1095
      %2782 = vmatprep.subr.mxu0 %v1104
      %2783 = vmatpush1.msra.mxu0 %v1103
      %2784 = vmatprep.subr.mxu0 %v1112
      %2785 = vmatpush1.msra.mxu0 %v1111
      %2786 = vmatprep.subr.mxu0 %v1120
      %2787 = vmatpush1.msra.mxu0 %v1119
      %2788 = vmatprep.subr.mxu0 %v1128
      %2789 = vmatpush1.msra.mxu0 %v1127
      %2790 = vmatprep.subr.mxu0 %v1136
      %2791 = vmatpush1.msra.mxu0 %v1135
      %2792 = vmatprep.subr.mxu0 %v1144
      %2793 = vmatpush1.msra.mxu0 %v1143
      %2794 = vmatprep.subr.mxu0 %v1152
      %2795 = vmatpush1.msra.mxu0 %v1151
      %2796 = vmatprep.subr.mxu0 %v1160
      %2797 = vmatpush1.msra.mxu0 %v1159
      %2798 = vmatprep.subr.mxu0 %v1168
      %2799 = vmatpush1.msra.mxu0 %v1167
      %2800 = vmatprep.subr.mxu0 %v1176
      %2801 = vmatpush1.msra.mxu0 %v1175
      %2802 = vmatprep.subr.mxu0 %v1184
      %2803 = vmatpush1.msra.mxu0 %v1183
      %2804 = vmatprep.subr.mxu0 %v1192
      %2805 = vmatpush1.msra.mxu0 %v1191
      %2806 = vmatprep.subr.mxu0 %v1200
      %2807 = vmatpush1.msra.mxu0 %v1199
      %2808 = vmatprep.subr.mxu0 %v1208
      %2809 = vmatpush1.msra.mxu0 %v1207
      %2810 = vmatprep.subr.mxu0 %v1216
      %2811 = vmatpush1.msra.mxu0 %v1215
      %2812 = vmatprep.subr.mxu0 %v1224
      %2813 = vmatpush1.msra.mxu0 %v1223
      %2814 = vmatprep.subr.mxu0 %v1232
      %2815 = vmatpush1.msra.mxu0 %v1231
      %2816 = vmatprep.subr.mxu0 %v1240
      %2817 = vmatpush1.msra.mxu0 %v1239
      %2818 = vmatprep.subr.mxu0 %v1248
      %2819 = vmatpush1.msra.mxu0 %v1247
      %2820 = vmatprep.subr.mxu0 %v1256
      %2821 = vmatpush1.msra.mxu0 %v1255
      %2822 = vmatprep.subr.mxu0 %v1264
      %2823 = vmatpush1.msra.mxu0 %v1263
      %2824 = vmatprep.subr.mxu0 %v1272
      %2825 = vmatpush1.msra.mxu0 %v1271
      %2826 = vmatprep.subr.mxu0 %v1280
      %2827 = vmatpush1.msra.mxu0 %v1279
      %2828 = vmatprep.subr.mxu0 %v1288
      %2829 = vmatpush1.msra.mxu0 %v1287
      %2830 = vmatprep.mubr.f32.mxu0 %v772
      %2831 = vmatmul.mubr.f32.gmra.mrb[0].mxu0 %v771
      %v2832 = vpop.f32.mrb[0].mxu0
      %v2833 = vadd.f32 %v2762, %v2832
      %v2834 = vpop.f32.mrb[0].mxu0
      %v2835 = vadd.f32 %v2764, %v2834
      %2836 = vdwg.mxu0
      %2837 = vmatprep.subr.mxu0 %v1296
      %2838 = vmatpush1.msra.mxu0 %v1295
      %2839 = vmatprep.subr.mxu0 %v1304
      %2840 = vmatpush1.msra.mxu0 %v1303
      %2841 = vmatprep.subr.mxu0 %v1312
      %2842 = vmatpush1.msra.mxu0 %v1311
      %2843 = vmatprep.subr.mxu0 %v1320
      %2844 = vmatpush1.msra.mxu0 %v1319
      %2845 = vmatprep.subr.mxu0 %v1328
      %2846 = vmatpush1.msra.mxu0 %v1327
      %2847 = vmatprep.subr.mxu0 %v1336
      %2848 = vmatpush1.msra.mxu0 %v1335
      %2849 = vmatprep.subr.mxu0 %v1344
      %2850 = vmatpush1.msra.mxu0 %v1343
      %2851 = vmatprep.subr.mxu0 %v1352
      %2852 = vmatpush1.msra.mxu0 %v1351
      %2853 = vmatprep.subr.mxu0 %v1360
      %2854 = vmatpush1.msra.mxu0 %v1359
      %2855 = vmatprep.subr.mxu0 %v1368
      %2856 = vmatpush1.msra.mxu0 %v1367
      %2857 = vmatprep.subr.mxu0 %v1376
      %2858 = vmatpush1.msra.mxu0 %v1375
      %2859 = vmatprep.subr.mxu0 %v1384
      %2860 = vmatpush1.msra.mxu0 %v1383
      %2861 = vmatprep.subr.mxu0 %v1392
      %2862 = vmatpush1.msra.mxu0 %v1391
      %2863 = vmatprep.subr.mxu0 %v1400
      %2864 = vmatpush1.msra.mxu0 %v1399
      %2865 = vmatprep.subr.mxu0 %v1408
      %2866 = vmatpush1.msra.mxu0 %v1407
      %2867 = vmatprep.subr.mxu0 %v1416
      %2868 = vmatpush1.msra.mxu0 %v1415
      %2869 = vmatprep.subr.mxu0 %v1424
      %2870 = vmatpush1.msra.mxu0 %v1423
      %2871 = vmatprep.subr.mxu0 %v1432
      %2872 = vmatpush1.msra.mxu0 %v1431
      %2873 = vmatprep.subr.mxu0 %v1440
      %2874 = vmatpush1.msra.mxu0 %v1439
      %2875 = vmatprep.subr.mxu0 %v1448
      %2876 = vmatpush1.msra.mxu0 %v1447
      %2877 = vmatprep.subr.mxu0 %v1456
      %2878 = vmatpush1.msra.mxu0 %v1455
      %2879 = vmatprep.subr.mxu0 %v1464
      %2880 = vmatpush1.msra.mxu0 %v1463
      %2881 = vmatprep.subr.mxu0 %v1472
      %2882 = vmatpush1.msra.mxu0 %v1471
      %2883 = vmatprep.subr.mxu0 %v1480
      %2884 = vmatpush1.msra.mxu0 %v1479
      %2885 = vmatprep.subr.mxu0 %v1488
      %2886 = vmatpush1.msra.mxu0 %v1487
      %2887 = vmatprep.subr.mxu0 %v1496
      %2888 = vmatpush1.msra.mxu0 %v1495
      %2889 = vmatprep.subr.mxu0 %v1504
      %2890 = vmatpush1.msra.mxu0 %v1503
      %2891 = vmatprep.subr.mxu0 %v1512
      %2892 = vmatpush1.msra.mxu0 %v1511
      %2893 = vmatprep.subr.mxu0 %v1520
      %2894 = vmatpush1.msra.mxu0 %v1519
      %2895 = vmatprep.subr.mxu0 %v1528
      %2896 = vmatpush1.msra.mxu0 %v1527
      %2897 = vmatprep.subr.mxu0 %v1536
      %2898 = vmatpush1.msra.mxu0 %v1535
      %2899 = vmatprep.subr.mxu0 %v1544
      %2900 = vmatpush1.msra.mxu0 %v1543
      %2901 = vmatprep.mubr.f32.mxu0 %v774
      %2902 = vmatmul.mubr.f32.gmra.mrb[0].mxu0 %v773
      %v2903 = vpop.f32.mrb[0].mxu0
      %v2904 = vadd.f32 %v2833, %v2903
      %v2905 = vpop.f32.mrb[0].mxu0
      %v2906 = vadd.f32 %v2835, %v2905
      %2907 = vdwg.mxu0
      %2908 = vmatprep.subr.mxu0 %v1552
      %2909 = vmatpush1.msra.mxu0 %v1551
      %2910 = vmatprep.subr.mxu0 %v1560
      %2911 = vmatpush1.msra.mxu0 %v1559
      %2912 = vmatprep.subr.mxu0 %v1568
      %2913 = vmatpush1.msra.mxu0 %v1567
      %2914 = vmatprep.subr.mxu0 %v1576
      %2915 = vmatpush1.msra.mxu0 %v1575
      %2916 = vmatprep.subr.mxu0 %v1584
      %2917 = vmatpush1.msra.mxu0 %v1583
      %2918 = vmatprep.subr.mxu0 %v1592
      %2919 = vmatpush1.msra.mxu0 %v1591
      %2920 = vmatprep.subr.mxu0 %v1600
      %2921 = vmatpush1.msra.mxu0 %v1599
      %2922 = vmatprep.subr.mxu0 %v1608
      %2923 = vmatpush1.msra.mxu0 %v1607
      %2924 = vmatprep.subr.mxu0 %v1616
      %2925 = vmatpush1.msra.mxu0 %v1615
      %2926 = vmatprep.subr.mxu0 %v1624
      %2927 = vmatpush1.msra.mxu0 %v1623
      %2928 = vmatprep.subr.mxu0 %v1632
      %2929 = vmatpush1.msra.mxu0 %v1631
      %2930 = vmatprep.subr.mxu0 %v1640
      %2931 = vmatpush1.msra.mxu0 %v1639
      %2932 = vmatprep.subr.mxu0 %v1648
      %2933 = vmatpush1.msra.mxu0 %v1647
      %2934 = vmatprep.subr.mxu0 %v1656
      %2935 = vmatpush1.msra.mxu0 %v1655
      %2936 = vmatprep.subr.mxu0 %v1664
      %2937 = vmatpush1.msra.mxu0 %v1663
      %2938 = vmatprep.subr.mxu0 %v1672
      %2939 = vmatpush1.msra.mxu0 %v1671
      %2940 = vmatprep.subr.mxu0 %v1680
      %2941 = vmatpush1.msra.mxu0 %v1679
      %2942 = vmatprep.subr.mxu0 %v1688
      %2943 = vmatpush1.msra.mxu0 %v1687
      %2944 = vmatprep.subr.mxu0 %v1696
      %2945 = vmatpush1.msra.mxu0 %v1695
      %2946 = vmatprep.subr.mxu0 %v1704
      %2947 = vmatpush1.msra.mxu0 %v1703
      %2948 = vmatprep.subr.mxu0 %v1712
      %2949 = vmatpush1.msra.mxu0 %v1711
      %2950 = vmatprep.subr.mxu0 %v1720
      %2951 = vmatpush1.msra.mxu0 %v1719
      %2952 = vmatprep.subr.mxu0 %v1728
      %2953 = vmatpush1.msra.mxu0 %v1727
      %2954 = vmatprep.subr.mxu0 %v1736
      %2955 = vmatpush1.msra.mxu0 %v1735
      %2956 = vmatprep.subr.mxu0 %v1744
      %2957 = vmatpush1.msra.mxu0 %v1743
      %2958 = vmatprep.subr.mxu0 %v1752
      %2959 = vmatpush1.msra.mxu0 %v1751
      %2960 = vmatprep.subr.mxu0 %v1760
      %2961 = vmatpush1.msra.mxu0 %v1759
      %2962 = vmatprep.subr.mxu0 %v1768
      %2963 = vmatpush1.msra.mxu0 %v1767
      %2964 = vmatprep.subr.mxu0 %v1776
      %2965 = vmatpush1.msra.mxu0 %v1775
      %2966 = vmatprep.subr.mxu0 %v1784
      %2967 = vmatpush1.msra.mxu0 %v1783
      %2968 = vmatprep.subr.mxu0 %v1792
      %2969 = vmatpush1.msra.mxu0 %v1791
      %2970 = vmatprep.subr.mxu0 %v1800
      %2971 = vmatpush1.msra.mxu0 %v1799
      %2972 = vmatprep.mubr.f32.mxu0 %v776
      %2973 = vmatmul.mubr.f32.gmra.mrb[0].mxu0 %v775
      %v2974 = vpop.f32.mrb[0].mxu0
      %v2975 = vadd.f32 %v2904, %v2974
      %v2976 = vpop.f32.mrb[0].mxu0
      %v2977 = vadd.f32 %v2906, %v2976
      %2978 = vdwg.mxu0
      %vm2979 = vcmp.gt.f32.partialorder %v2123, 0.0
      %vm2980 = vcmp.gt.f32.partialorder %v2125, 0.0
      %vm2981 = vcmp.gt.f32.partialorder %v2407, 0.0
      %vm2982 = vcmp.gt.f32.partialorder %v2409, 0.0
      %vm2983 = vcmp.gt.f32.partialorder %v2691, 0.0
      %vm2984 = vcmp.gt.f32.partialorder %v2693, 0.0
      %vm2985 = vcmp.gt.f32.partialorder %v2975, 0.0
      %vm2986 = vcmp.gt.f32.partialorder %v2977, 0.0
      %v2987 = vmul.f32 %v2123, 0.1
      %v2988 = vmul.f32 %v2125, 0.1
      %v2989 = vmul.f32 %v2407, 0.1
      %v2990 = vmul.f32 %v2409, 0.1
      %v2991 = vmul.f32 %v2691, 0.1
      %v2992 = vmul.f32 %v2693, 0.1
      %v2993 = vmul.f32 %v2975, 0.1
      %v2994 = vmul.f32 %v2977, 0.1
      %v2995 = vsel %vm2979, %v2123, %v2987
      %v2996 = vsel %vm2980, %v2125, %v2988
      %v2997 = vsel %vm2981, %v2407, %v2989
      %v2998 = vsel %vm2982, %v2409, %v2990
      %v2999 = vsel %vm2983, %v2691, %v2991
      %v3000 = vsel %vm2984, %v2693, %v2992
      %v3001 = vsel %vm2985, %v2975, %v2993
      %v3002 = vsel %vm2986, %v2977, %v2994
      %v3003 = vld [vmem:[#allocation12] sm:$0xff]
      %v3004 = vld [vmem:[#allocation12 + $0x8] sm:$0xff]
      %v3005 = vld [vmem:[#allocation12 + $0x10] sm:$0xff]
      %v3006 = vld [vmem:[#allocation12 + $0x18] sm:$0xff]
      %v3007 = vld [vmem:[#allocation12 + $0x20] sm:$0xff]
      %v3008 = vld [vmem:[#allocation12 + $0x28] sm:$0xff]
      %v3009 = vld [vmem:[#allocation12 + $0x30] sm:$0xff]
      %v3010 = vld [vmem:[#allocation12 + $0x38] sm:$0xff]
      %v3011 = vld [vmem:[#allocation12 + $0x40] sm:$0xff]
      %v3012 = vld [vmem:[#allocation12 + $0x48] sm:$0xff]
      %v3013 = vld [vmem:[#allocation12 + $0x50] sm:$0xff]
      %v3014 = vld [vmem:[#allocation12 + $0x58] sm:$0xff]
      %v3015 = vld [vmem:[#allocation12 + $0x60] sm:$0xff]
      %v3016 = vld [vmem:[#allocation12 + $0x68] sm:$0xff]
      %v3017 = vld [vmem:[#allocation12 + $0x70] sm:$0xff]
      %v3018 = vld [vmem:[#allocation12 + $0x78] sm:$0xff]
      %v3019 = vld [vmem:[#allocation12 + $0x80] sm:$0xff]
      %v3020 = vld [vmem:[#allocation12 + $0x88] sm:$0xff]
      %v3021 = vld [vmem:[#allocation12 + $0x90] sm:$0xff]
      %v3022 = vld [vmem:[#allocation12 + $0x98] sm:$0xff]
      %v3023 = vld [vmem:[#allocation12 + $0xa0] sm:$0xff]
      %v3024 = vld [vmem:[#allocation12 + $0xa8] sm:$0xff]
      %v3025 = vld [vmem:[#allocation12 + $0xb0] sm:$0xff]
      %v3026 = vld [vmem:[#allocation12 + $0xb8] sm:$0xff]
      %v3027 = vld [vmem:[#allocation12 + $0xc0] sm:$0xff]
      %v3028 = vld [vmem:[#allocation12 + $0xc8] sm:$0xff]
      %v3029 = vld [vmem:[#allocation12 + $0xd0] sm:$0xff]
      %v3030 = vld [vmem:[#allocation12 + $0xd8] sm:$0xff]
      %v3031 = vld [vmem:[#allocation12 + $0xe0] sm:$0xff]
      %v3032 = vld [vmem:[#allocation12 + $0xe8] sm:$0xff]
      %v3033 = vld [vmem:[#allocation12 + $0xf0] sm:$0xff]
      %v3034 = vld [vmem:[#allocation12 + $0xf8] sm:$0xff]
      %v3035 = vld [vmem:[#allocation12 + $0x100] sm:$0xff]
      %v3036 = vld [vmem:[#allocation12 + $0x108] sm:$0xff]
      %v3037 = vld [vmem:[#allocation12 + $0x110] sm:$0xff]
      %v3038 = vld [vmem:[#allocation12 + $0x118] sm:$0xff]
      %v3039 = vld [vmem:[#allocation12 + $0x120] sm:$0xff]
      %v3040 = vld [vmem:[#allocation12 + $0x128] sm:$0xff]
      %v3041 = vld [vmem:[#allocation12 + $0x130] sm:$0xff]
      %v3042 = vld [vmem:[#allocation12 + $0x138] sm:$0xff]
      %v3043 = vld [vmem:[#allocation12 + $0x140] sm:$0xff]
      %v3044 = vld [vmem:[#allocation12 + $0x148] sm:$0xff]
      %v3045 = vld [vmem:[#allocation12 + $0x150] sm:$0xff]
      %v3046 = vld [vmem:[#allocation12 + $0x158] sm:$0xff]
      %v3047 = vld [vmem:[#allocation12 + $0x160] sm:$0xff]
      %v3048 = vld [vmem:[#allocation12 + $0x168] sm:$0xff]
      %v3049 = vld [vmem:[#allocation12 + $0x170] sm:$0xff]
      %v3050 = vld [vmem:[#allocation12 + $0x178] sm:$0xff]
      %v3051 = vld [vmem:[#allocation12 + $0x180] sm:$0xff]
      %v3052 = vld [vmem:[#allocation12 + $0x188] sm:$0xff]
      %v3053 = vld [vmem:[#allocation12 + $0x190] sm:$0xff]
      %v3054 = vld [vmem:[#allocation12 + $0x198] sm:$0xff]
      %v3055 = vld [vmem:[#allocation12 + $0x1a0] sm:$0xff]
      %v3056 = vld [vmem:[#allocation12 + $0x1a8] sm:$0xff]
      %v3057 = vld [vmem:[#allocation12 + $0x1b0] sm:$0xff]
      %v3058 = vld [vmem:[#allocation12 + $0x1b8] sm:$0xff]
      %v3059 = vld [vmem:[#allocation12 + $0x1c0] sm:$0xff]
      %v3060 = vld [vmem:[#allocation12 + $0x1c8] sm:$0xff]
      %v3061 = vld [vmem:[#allocation12 + $0x1d0] sm:$0xff]
      %v3062 = vld [vmem:[#allocation12 + $0x1d8] sm:$0xff]
      %v3063 = vld [vmem:[#allocation12 + $0x1e0] sm:$0xff]
      %v3064 = vld [vmem:[#allocation12 + $0x1e8] sm:$0xff]
      %v3065 = vld [vmem:[#allocation12 + $0x1f0] sm:$0xff]
      %v3066 = vld [vmem:[#allocation12 + $0x1f8] sm:$0xff]
      %v3067 = vld [vmem:[#allocation12 + $0x200] sm:$0xff]
      %v3068 = vld [vmem:[#allocation12 + $0x208] sm:$0xff]
      %v3069 = vld [vmem:[#allocation12 + $0x210] sm:$0xff]
      %v3070 = vld [vmem:[#allocation12 + $0x218] sm:$0xff]
      %v3071 = vld [vmem:[#allocation12 + $0x220] sm:$0xff]
      %v3072 = vld [vmem:[#allocation12 + $0x228] sm:$0xff]
      %v3073 = vld [vmem:[#allocation12 + $0x230] sm:$0xff]
      %v3074 = vld [vmem:[#allocation12 + $0x238] sm:$0xff]
      %v3075 = vld [vmem:[#allocation12 + $0x240] sm:$0xff]
      %v3076 = vld [vmem:[#allocation12 + $0x248] sm:$0xff]
      %v3077 = vld [vmem:[#allocation12 + $0x250] sm:$0xff]
      %v3078 = vld [vmem:[#allocation12 + $0x258] sm:$0xff]
      %v3079 = vld [vmem:[#allocation12 + $0x260] sm:$0xff]
      %v3080 = vld [vmem:[#allocation12 + $0x268] sm:$0xff]
      %v3081 = vld [vmem:[#allocation12 + $0x270] sm:$0xff]
      %v3082 = vld [vmem:[#allocation12 + $0x278] sm:$0xff]
      %v3083 = vld [vmem:[#allocation12 + $0x280] sm:$0xff]
      %v3084 = vld [vmem:[#allocation12 + $0x288] sm:$0xff]
      %v3085 = vld [vmem:[#allocation12 + $0x290] sm:$0xff]
      %v3086 = vld [vmem:[#allocation12 + $0x298] sm:$0xff]
      %v3087 = vld [vmem:[#allocation12 + $0x2a0] sm:$0xff]
      %v3088 = vld [vmem:[#allocation12 + $0x2a8] sm:$0xff]
      %v3089 = vld [vmem:[#allocation12 + $0x2b0] sm:$0xff]
      %v3090 = vld [vmem:[#allocation12 + $0x2b8] sm:$0xff]
      %v3091 = vld [vmem:[#allocation12 + $0x2c0] sm:$0xff]
      %v3092 = vld [vmem:[#allocation12 + $0x2c8] sm:$0xff]
      %v3093 = vld [vmem:[#allocation12 + $0x2d0] sm:$0xff]
      %v3094 = vld [vmem:[#allocation12 + $0x2d8] sm:$0xff]
      %v3095 = vld [vmem:[#allocation12 + $0x2e0] sm:$0xff]
      %v3096 = vld [vmem:[#allocation12 + $0x2e8] sm:$0xff]
      %v3097 = vld [vmem:[#allocation12 + $0x2f0] sm:$0xff]
      %v3098 = vld [vmem:[#allocation12 + $0x2f8] sm:$0xff]
      %v3099 = vld [vmem:[#allocation12 + $0x300] sm:$0xff]
      %v3100 = vld [vmem:[#allocation12 + $0x308] sm:$0xff]
      %v3101 = vld [vmem:[#allocation12 + $0x310] sm:$0xff]
      %v3102 = vld [vmem:[#allocation12 + $0x318] sm:$0xff]
      %v3103 = vld [vmem:[#allocation12 + $0x320] sm:$0xff]
      %v3104 = vld [vmem:[#allocation12 + $0x328] sm:$0xff]
      %v3105 = vld [vmem:[#allocation12 + $0x330] sm:$0xff]
      %v3106 = vld [vmem:[#allocation12 + $0x338] sm:$0xff]
      %v3107 = vld [vmem:[#allocation12 + $0x340] sm:$0xff]
      %v3108 = vld [vmem:[#allocation12 + $0x348] sm:$0xff]
      %v3109 = vld [vmem:[#allocation12 + $0x350] sm:$0xff]
      %v3110 = vld [vmem:[#allocation12 + $0x358] sm:$0xff]
      %v3111 = vld [vmem:[#allocation12 + $0x360] sm:$0xff]
      %v3112 = vld [vmem:[#allocation12 + $0x368] sm:$0xff]
      %v3113 = vld [vmem:[#allocation12 + $0x370] sm:$0xff]
      %v3114 = vld [vmem:[#allocation12 + $0x378] sm:$0xff]
      %v3115 = vld [vmem:[#allocation12 + $0x380] sm:$0xff]
      %v3116 = vld [vmem:[#allocation12 + $0x388] sm:$0xff]
      %v3117 = vld [vmem:[#allocation12 + $0x390] sm:$0xff]
      %v3118 = vld [vmem:[#allocation12 + $0x398] sm:$0xff]
      %v3119 = vld [vmem:[#allocation12 + $0x3a0] sm:$0xff]
      %v3120 = vld [vmem:[#allocation12 + $0x3a8] sm:$0xff]
      %v3121 = vld [vmem:[#allocation12 + $0x3b0] sm:$0xff]
      %v3122 = vld [vmem:[#allocation12 + $0x3b8] sm:$0xff]
      %v3123 = vld [vmem:[#allocation12 + $0x3c0] sm:$0xff]
      %v3124 = vld [vmem:[#allocation12 + $0x3c8] sm:$0xff]
      %v3125 = vld [vmem:[#allocation12 + $0x3d0] sm:$0xff]
      %v3126 = vld [vmem:[#allocation12 + $0x3d8] sm:$0xff]
      %v3127 = vld [vmem:[#allocation12 + $0x3e0] sm:$0xff]
      %v3128 = vld [vmem:[#allocation12 + $0x3e8] sm:$0xff]
      %v3129 = vld [vmem:[#allocation12 + $0x3f0] sm:$0xff]
      %v3130 = vld [vmem:[#allocation12 + $0x3f8] sm:$0xff]
      %v3131 = vld [vmem:[#allocation14] sm:$0x1]
      %v3133 = vlaneseq
      %v3134 = vshrl.u32 %v3133, 7
      %v3135 = vsub.s32 0, %v3134
      %v3136 = vrot.slane %v3131, %v3135
      %3138 = vmatprep.subr.mxu0 0.0
      %3139 = vmatpush1.msra.mxu0 %v3003
      %3140 = vmatprep.subr.mxu0 0.0
      %3141 = vmatpush1.msra.mxu0 %v3004
      %3142 = vmatprep.subr.mxu0 0.0
      %3143 = vmatpush1.msra.mxu0 %v3005
      %3144 = vmatprep.subr.mxu0 0.0
      %3145 = vmatpush1.msra.mxu0 %v3006
      %3146 = vmatprep.subr.mxu0 0.0
      %3147 = vmatpush1.msra.mxu0 %v3007
      %3148 = vmatprep.subr.mxu0 0.0
      %3149 = vmatpush1.msra.mxu0 %v3008
      %3150 = vmatprep.subr.mxu0 0.0
      %3151 = vmatpush1.msra.mxu0 %v3009
      %3152 = vmatprep.subr.mxu0 0.0
      %3153 = vmatpush1.msra.mxu0 %v3010
      %3154 = vmatprep.subr.mxu0 0.0
      %3155 = vmatpush1.msra.mxu0 %v3011
      %3156 = vmatprep.subr.mxu0 0.0
      %3157 = vmatpush1.msra.mxu0 %v3012
      %3158 = vmatprep.subr.mxu0 0.0
      %3159 = vmatpush1.msra.mxu0 %v3013
      %3160 = vmatprep.subr.mxu0 0.0
      %3161 = vmatpush1.msra.mxu0 %v3014
      %3162 = vmatprep.subr.mxu0 0.0
      %3163 = vmatpush1.msra.mxu0 %v3015
      %3164 = vmatprep.subr.mxu0 0.0
      %3165 = vmatpush1.msra.mxu0 %v3016
      %3166 = vmatprep.subr.mxu0 0.0
      %3167 = vmatpush1.msra.mxu0 %v3017
      %3168 = vmatprep.subr.mxu0 0.0
      %3169 = vmatpush1.msra.mxu0 %v3018
      %3170 = vmatprep.subr.mxu0 0.0
      %3171 = vmatpush1.msra.mxu0 %v3019
      %3172 = vmatprep.subr.mxu0 0.0
      %3173 = vmatpush1.msra.mxu0 %v3020
      %3174 = vmatprep.subr.mxu0 0.0
      %3175 = vmatpush1.msra.mxu0 %v3021
      %3176 = vmatprep.subr.mxu0 0.0
      %3177 = vmatpush1.msra.mxu0 %v3022
      %3178 = vmatprep.subr.mxu0 0.0
      %3179 = vmatpush1.msra.mxu0 %v3023
      %3180 = vmatprep.subr.mxu0 0.0
      %3181 = vmatpush1.msra.mxu0 %v3024
      %3182 = vmatprep.subr.mxu0 0.0
      %3183 = vmatpush1.msra.mxu0 %v3025
      %3184 = vmatprep.subr.mxu0 0.0
      %3185 = vmatpush1.msra.mxu0 %v3026
      %3186 = vmatprep.subr.mxu0 0.0
      %3187 = vmatpush1.msra.mxu0 %v3027
      %3188 = vmatprep.subr.mxu0 0.0
      %3189 = vmatpush1.msra.mxu0 %v3028
      %3190 = vmatprep.subr.mxu0 0.0
      %3191 = vmatpush1.msra.mxu0 %v3029
      %3192 = vmatprep.subr.mxu0 0.0
      %3193 = vmatpush1.msra.mxu0 %v3030
      %3194 = vmatprep.subr.mxu0 0.0
      %3195 = vmatpush1.msra.mxu0 %v3031
      %3196 = vmatprep.subr.mxu0 0.0
      %3197 = vmatpush1.msra.mxu0 %v3032
      %3198 = vmatprep.subr.mxu0 0.0
      %3199 = vmatpush1.msra.mxu0 %v3033
      %3200 = vmatprep.subr.mxu0 0.0
      %3201 = vmatpush1.msra.mxu0 %v3034
      %3202 = vmatprep.mubr.f32.mxu0 %v2996
      %3203 = vmatmul.mubr.f32.gmra.mrb[0].mxu0 %v2995
      %v3204 = vpop.f32.mrb[0].mxu0
      %v3205 = vadd.f32 %v3136, %v3204
      %v3206 = vpop.f32.mrb[0].mxu0
      %3207 = vdwg.mxu0
      %3208 = vmatprep.subr.mxu0 0.0
      %3209 = vmatpush1.msra.mxu0 %v3035
      %3210 = vmatprep.subr.mxu0 0.0
      %3211 = vmatpush1.msra.mxu0 %v3036
      %3212 = vmatprep.subr.mxu0 0.0
      %3213 = vmatpush1.msra.mxu0 %v3037
      %3214 = vmatprep.subr.mxu0 0.0
      %3215 = vmatpush1.msra.mxu0 %v3038
      %3216 = vmatprep.subr.mxu0 0.0
      %3217 = vmatpush1.msra.mxu0 %v3039
      %3218 = vmatprep.subr.mxu0 0.0
      %3219 = vmatpush1.msra.mxu0 %v3040
      %3220 = vmatprep.subr.mxu0 0.0
      %3221 = vmatpush1.msra.mxu0 %v3041
      %3222 = vmatprep.subr.mxu0 0.0
      %3223 = vmatpush1.msra.mxu0 %v3042
      %3224 = vmatprep.subr.mxu0 0.0
      %3225 = vmatpush1.msra.mxu0 %v3043
      %3226 = vmatprep.subr.mxu0 0.0
      %3227 = vmatpush1.msra.mxu0 %v3044
      %3228 = vmatprep.subr.mxu0 0.0
      %3229 = vmatpush1.msra.mxu0 %v3045
      %3230 = vmatprep.subr.mxu0 0.0
      %3231 = vmatpush1.msra.mxu0 %v3046
      %3232 = vmatprep.subr.mxu0 0.0
      %3233 = vmatpush1.msra.mxu0 %v3047
      %3234 = vmatprep.subr.mxu0 0.0
      %3235 = vmatpush1.msra.mxu0 %v3048
      %3236 = vmatprep.subr.mxu0 0.0
      %3237 = vmatpush1.msra.mxu0 %v3049
      %3238 = vmatprep.subr.mxu0 0.0
      %3239 = vmatpush1.msra.mxu0 %v3050
      %3240 = vmatprep.subr.mxu0 0.0
      %3241 = vmatpush1.msra.mxu0 %v3051
      %3242 = vmatprep.subr.mxu0 0.0
      %3243 = vmatpush1.msra.mxu0 %v3052
      %3244 = vmatprep.subr.mxu0 0.0
      %3245 = vmatpush1.msra.mxu0 %v3053
      %3246 = vmatprep.subr.mxu0 0.0
      %3247 = vmatpush1.msra.mxu0 %v3054
      %3248 = vmatprep.subr.mxu0 0.0
      %3249 = vmatpush1.msra.mxu0 %v3055
      %3250 = vmatprep.subr.mxu0 0.0
      %3251 = vmatpush1.msra.mxu0 %v3056
      %3252 = vmatprep.subr.mxu0 0.0
      %3253 = vmatpush1.msra.mxu0 %v3057
      %3254 = vmatprep.subr.mxu0 0.0
      %3255 = vmatpush1.msra.mxu0 %v3058
      %3256 = vmatprep.subr.mxu0 0.0
      %3257 = vmatpush1.msra.mxu0 %v3059
      %3258 = vmatprep.subr.mxu0 0.0
      %3259 = vmatpush1.msra.mxu0 %v3060
      %3260 = vmatprep.subr.mxu0 0.0
      %3261 = vmatpush1.msra.mxu0 %v3061
      %3262 = vmatprep.subr.mxu0 0.0
      %3263 = vmatpush1.msra.mxu0 %v3062
      %3264 = vmatprep.subr.mxu0 0.0
      %3265 = vmatpush1.msra.mxu0 %v3063
      %3266 = vmatprep.subr.mxu0 0.0
      %3267 = vmatpush1.msra.mxu0 %v3064
      %3268 = vmatprep.subr.mxu0 0.0
      %3269 = vmatpush1.msra.mxu0 %v3065
      %3270 = vmatprep.subr.mxu0 0.0
      %3271 = vmatpush1.msra.mxu0 %v3066
      %3272 = vmatprep.mubr.f32.mxu0 %v2998
      %3273 = vmatmul.mubr.f32.gmra.mrb[0].mxu0 %v2997
      %v3274 = vpop.f32.mrb[0].mxu0
      %v3275 = vadd.f32 %v3205, %v3274
      %v3276 = vpop.f32.mrb[0].mxu0
      %3277 = vdwg.mxu0
      %3278 = vmatprep.subr.mxu0 0.0
      %3279 = vmatpush1.msra.mxu0 %v3067
      %3280 = vmatprep.subr.mxu0 0.0
      %3281 = vmatpush1.msra.mxu0 %v3068
      %3282 = vmatprep.subr.mxu0 0.0
      %3283 = vmatpush1.msra.mxu0 %v3069
      %3284 = vmatprep.subr.mxu0 0.0
      %3285 = vmatpush1.msra.mxu0 %v3070
      %3286 = vmatprep.subr.mxu0 0.0
      %3287 = vmatpush1.msra.mxu0 %v3071
      %3288 = vmatprep.subr.mxu0 0.0
      %3289 = vmatpush1.msra.mxu0 %v3072
      %3290 = vmatprep.subr.mxu0 0.0
      %3291 = vmatpush1.msra.mxu0 %v3073
      %3292 = vmatprep.subr.mxu0 0.0
      %3293 = vmatpush1.msra.mxu0 %v3074
      %3294 = vmatprep.subr.mxu0 0.0
      %3295 = vmatpush1.msra.mxu0 %v3075
      %3296 = vmatprep.subr.mxu0 0.0
      %3297 = vmatpush1.msra.mxu0 %v3076
      %3298 = vmatprep.subr.mxu0 0.0
      %3299 = vmatpush1.msra.mxu0 %v3077
      %3300 = vmatprep.subr.mxu0 0.0
      %3301 = vmatpush1.msra.mxu0 %v3078
      %3302 = vmatprep.subr.mxu0 0.0
      %3303 = vmatpush1.msra.mxu0 %v3079
      %3304 = vmatprep.subr.mxu0 0.0
      %3305 = vmatpush1.msra.mxu0 %v3080
      %3306 = vmatprep.subr.mxu0 0.0
      %3307 = vmatpush1.msra.mxu0 %v3081
      %3308 = vmatprep.subr.mxu0 0.0
      %3309 = vmatpush1.msra.mxu0 %v3082
      %3310 = vmatprep.subr.mxu0 0.0
      %3311 = vmatpush1.msra.mxu0 %v3083
      %3312 = vmatprep.subr.mxu0 0.0
      %3313 = vmatpush1.msra.mxu0 %v3084
      %3314 = vmatprep.subr.mxu0 0.0
      %3315 = vmatpush1.msra.mxu0 %v3085
      %3316 = vmatprep.subr.mxu0 0.0
      %3317 = vmatpush1.msra.mxu0 %v3086
      %3318 = vmatprep.subr.mxu0 0.0
      %3319 = vmatpush1.msra.mxu0 %v3087
      %3320 = vmatprep.subr.mxu0 0.0
      %3321 = vmatpush1.msra.mxu0 %v3088
      %3322 = vmatprep.subr.mxu0 0.0
      %3323 = vmatpush1.msra.mxu0 %v3089
      %3324 = vmatprep.subr.mxu0 0.0
      %3325 = vmatpush1.msra.mxu0 %v3090
      %3326 = vmatprep.subr.mxu0 0.0
      %3327 = vmatpush1.msra.mxu0 %v3091
      %3328 = vmatprep.subr.mxu0 0.0
      %3329 = vmatpush1.msra.mxu0 %v3092
      %3330 = vmatprep.subr.mxu0 0.0
      %3331 = vmatpush1.msra.mxu0 %v3093
      %3332 = vmatprep.subr.mxu0 0.0
      %3333 = vmatpush1.msra.mxu0 %v3094
      %3334 = vmatprep.subr.mxu0 0.0
      %3335 = vmatpush1.msra.mxu0 %v3095
      %3336 = vmatprep.subr.mxu0 0.0
      %3337 = vmatpush1.msra.mxu0 %v3096
      %3338 = vmatprep.subr.mxu0 0.0
      %3339 = vmatpush1.msra.mxu0 %v3097
      %3340 = vmatprep.subr.mxu0 0.0
      %3341 = vmatpush1.msra.mxu0 %v3098
      %3342 = vmatprep.mubr.f32.mxu0 %v3000
      %3343 = vmatmul.mubr.f32.gmra.mrb[0].mxu0 %v2999
      %v3344 = vpop.f32.mrb[0].mxu0
      %v3345 = vadd.f32 %v3275, %v3344
      %v3346 = vpop.f32.mrb[0].mxu0
      %3347 = vdwg.mxu0
      %3348 = vmatprep.subr.mxu0 0.0
      %3349 = vmatpush1.msra.mxu0 %v3099
      %3350 = vmatprep.subr.mxu0 0.0
      %3351 = vmatpush1.msra.mxu0 %v3100
      %3352 = vmatprep.subr.mxu0 0.0
      %3353 = vmatpush1.msra.mxu0 %v3101
      %3354 = vmatprep.subr.mxu0 0.0
      %3355 = vmatpush1.msra.mxu0 %v3102
      %3356 = vmatprep.subr.mxu0 0.0
      %3357 = vmatpush1.msra.mxu0 %v3103
      %3358 = vmatprep.subr.mxu0 0.0
      %3359 = vmatpush1.msra.mxu0 %v3104
      %3360 = vmatprep.subr.mxu0 0.0
      %3361 = vmatpush1.msra.mxu0 %v3105
      %3362 = vmatprep.subr.mxu0 0.0
      %3363 = vmatpush1.msra.mxu0 %v3106
      %3364 = vmatprep.subr.mxu0 0.0
      %3365 = vmatpush1.msra.mxu0 %v3107
      %3366 = vmatprep.subr.mxu0 0.0
      %3367 = vmatpush1.msra.mxu0 %v3108
      %3368 = vmatprep.subr.mxu0 0.0
      %3369 = vmatpush1.msra.mxu0 %v3109
      %3370 = vmatprep.subr.mxu0 0.0
      %3371 = vmatpush1.msra.mxu0 %v3110
      %3372 = vmatprep.subr.mxu0 0.0
      %3373 = vmatpush1.msra.mxu0 %v3111
      %3374 = vmatprep.subr.mxu0 0.0
      %3375 = vmatpush1.msra.mxu0 %v3112
      %3376 = vmatprep.subr.mxu0 0.0
      %3377 = vmatpush1.msra.mxu0 %v3113
      %3378 = vmatprep.subr.mxu0 0.0
      %3379 = vmatpush1.msra.mxu0 %v3114
      %3380 = vmatprep.subr.mxu0 0.0
      %3381 = vmatpush1.msra.mxu0 %v3115
      %3382 = vmatprep.subr.mxu0 0.0
      %3383 = vmatpush1.msra.mxu0 %v3116
      %3384 = vmatprep.subr.mxu0 0.0
      %3385 = vmatpush1.msra.mxu0 %v3117
      %3386 = vmatprep.subr.mxu0 0.0
      %3387 = vmatpush1.msra.mxu0 %v3118
      %3388 = vmatprep.subr.mxu0 0.0
      %3389 = vmatpush1.msra.mxu0 %v3119
      %3390 = vmatprep.subr.mxu0 0.0
      %3391 = vmatpush1.msra.mxu0 %v3120
      %3392 = vmatprep.subr.mxu0 0.0
      %3393 = vmatpush1.msra.mxu0 %v3121
      %3394 = vmatprep.subr.mxu0 0.0
      %3395 = vmatpush1.msra.mxu0 %v3122
      %3396 = vmatprep.subr.mxu0 0.0
      %3397 = vmatpush1.msra.mxu0 %v3123
      %3398 = vmatprep.subr.mxu0 0.0
      %3399 = vmatpush1.msra.mxu0 %v3124
      %3400 = vmatprep.subr.mxu0 0.0
      %3401 = vmatpush1.msra.mxu0 %v3125
      %3402 = vmatprep.subr.mxu0 0.0
      %3403 = vmatpush1.msra.mxu0 %v3126
      %3404 = vmatprep.subr.mxu0 0.0
      %3405 = vmatpush1.msra.mxu0 %v3127
      %3406 = vmatprep.subr.mxu0 0.0
      %3407 = vmatpush1.msra.mxu0 %v3128
      %3408 = vmatprep.subr.mxu0 0.0
      %3409 = vmatpush1.msra.mxu0 %v3129
      %3410 = vmatprep.subr.mxu0 0.0
      %3411 = vmatpush1.msra.mxu0 %v3130
      %3412 = vmatprep.mubr.f32.mxu0 %v3002
      %3413 = vmatmul.mubr.f32.gmra.mrb[0].mxu0 %v3001
      %v3414 = vpop.f32.mrb[0].mxu0
      %v3415 = vadd.f32 %v3345, %v3414
      %v3416 = vpop.f32.mrb[0].mxu0
      %3417 = vdwg.mxu0
      %v3418 = vlaneseq
      %v3419 = vand.u32 %v3418, 127
      %vm3420 = vcmp.ge.s32.totalorder %v3419, 1
      %vm3421 = vcmp.lt.s32.totalorder %v3419, 6
      %vm3422 = vmand %vm3420, %vm3421
      %v3423 = vsel %vm3422, %v3415, -inf
      %3424 = vmax.xlane.f32.xlu0 %v3423
      %v3425 = vpop.xlane.xlu0 %3424
      %v3426 = vsub.f32 %v3415, %v3425
      %v3427 = vsel %vm3422, %v3426, -inf
      %v3428 = vmul.f32 %v3427, 1.442695
      %v3429 = vpow.pop %v3428
      %3430 = vadd.xlane.f32.xlu0 %v3429
      %v3431 = vpop.xlane.xlu0 %3430
      %v3432 = vrcp.pop %v3431
      %v3433 = vmul.f32 %v3429, %v3432
      %v3434 = vxor.u32 %v3415, 2147483648
      %v3435 = vmul.f32 %v3434, 1.442695
      %v3436 = vpow.pop %v3435
      %v3437 = vadd.f32 %v3436, 1.0
      %v3438 = vrcp.pop %v3437
      %v3439 = vmul.f32 1.0, %v3438
      %vm3440 = vcmp.eq.s32.totalorder %v3419, 0
      %v3441 = vsel %vm3440, %v3439, %v3433
      %3442 = vst [vmem:[#allocation15] sm:$0xff] %v3441
    $region65: #{tpu_custom_call.1} parent=1 // pred_fallthru
      _
    // Predicated region
    $region66: #{tpu_custom_call.1} parent=1 // pred_check
      _
    $region67: #{tpu_custom_call.1} parent=1 // pred_check_branch
      %3444 = sbr.rel (0) target = $region69
    $region68: #{tpu_custom_call.1} parent=1 // pred_region
      %s3446 = ssub.s32 128, 128
      %3447 = vsyncadd [#allocation5], %s3446
      %s3449 = sshll.u32 [#allocation15], 4
      %s3450 = int_to_ptr.vmem [resolvable:$true] %s3449
      %3452 = dma.vmem_to_hbm [thread:$0]  %s3450, 128, %s7, [#allocation5]
    $region69: #{tpu_custom_call.1} parent=1 // pred_fallthru
      _
    // Predicated region
    $region70: #{tpu_custom_call.1} parent=1 // pred_check
      _
    $region71: #{tpu_custom_call.1} parent=1 // pred_check_branch
      %3454 = sbr.rel (0) target = $region73
    $region72: #{tpu_custom_call.1} parent=1 // pred_region
      %3455 = dma.done [#allocation5], 128
    $region73: #{tpu_custom_call.1} parent=1 // pred_fallthru
      _
    %3456 = vsyncpa [#allocation4], 1
    %3457 = vsyncpa [#allocation7], 1
    %3458 = vsyncpa [#allocation10], 1
    %3459 = vsyncpa [#allocation13], 1
    %3460 = vsyncpa [#allocation5], 1

</llo_original>
